<compile_context>
chip_gen: v7x
topology: tpu7x:2x2x1
jax: 0.10.0
libtpu: 0.0.40
codegen_flags: <defaults>
</compile_context>

<pallas_src>
import functools
import math

import jax
import jax.numpy as jnp
from jax.experimental import pallas as pl
from jax.experimental.pallas import tpu as pltpu


# ----------------------------- fused kernel ---------------------------------

def _boundary_head_kernel(x_ref, masks_ref,
                          w1_ref, s1_ref, w2_ref, s2_ref,
                          w3_ref, s3_ref, w4_ref, s4_ref,
                          wh_ref, bh_ref, o_ref, *, W, L):
    """b_tile images of the whole boundary head (batch folded onto lanes).

    x_ref:     (1, Cin_pad, L) f32   L = b_tile * H * W, images side by side
    masks_ref: (8, L) f32            border masks for the 8 non-center taps
    wK_ref:    (9, Cout, Cin) bf16   BN-scale-folded conv weights, tap-major
    sK_ref:    (Cout, 1) f32         folded BN shift (scale*(bias-mean)+beta)
    wh_ref:    (out_c, 1), bh_ref: (1, 1)   1x1 head weight / bias (f32)
    o_ref:     (1, 1, L)             boundary prediction
    """

    def conv3x3_bn_relu(act, w_ref, s_ref):
        # act: (Cin, L) f32.  Per-tap accumulation: roll -> mask -> bf16 -> MXU,
        # consuming each slab immediately (no 9-slab im2col concatenate, no
        # (9*Cin, L) scratch, minimal live vreg set).
        y = None
        mask_idx = 0
        for tap in range(9):
            ky, kx = tap // 3, tap % 3
            d = (ky - 1) * W + (kx - 1)
            s = act if d == 0 else pltpu.roll(act, shift=(-d) % L, axis=1)
            if (ky, kx) != (1, 1):
                # zero taps that fall outside their own image (also kills any
                # cross-image leakage from the full-lane-axis roll)
                s = s * masks_ref[pl.ds(mask_idx, 1), :]
                mask_idx += 1
            t = jnp.dot(w_ref[tap], s.astype(jnp.bfloat16),
                        preferred_element_type=jnp.float32)
            y = t if y is None else y + t
        y = y + s_ref[...]                                 # (Cout, 1) broadcast
        return jnp.maximum(y, 0.0)                         # ReLU

    act = x_ref[0].astype(jnp.float32)                     # (Cin_pad, L)
    act = conv3x3_bn_relu(act, w1_ref, s1_ref)
    act = conv3x3_bn_relu(act, w2_ref, s2_ref)
    act = conv3x3_bn_relu(act, w3_ref, s3_ref)
    act = conv3x3_bn_relu(act, w4_ref, s4_ref)             # (out_c, L)

    # Fused 1x1 head: per-channel fma reduction + bias (lane-dense output).
    bd = jnp.sum(act * wh_ref[...], axis=0, keepdims=True) + bh_ref[...]
    o_ref[...] = bd.reshape(1, 1, L).astype(o_ref.dtype)


# ----------------------------- host-side prep --------------------------------

def _fold_conv(w, scale, cin_pad=0):
    """(3,3,Cin,Cout) * BN scale -> (9, Cout, Cin+pad) bf16, tap-major."""
    wf = w * scale[None, None, None, :]
    if cin_pad:
        wf = jnp.pad(wf, ((0, 0), (0, 0), (0, cin_pad), (0, 0)))
    cin_p, cout = wf.shape[2], wf.shape[3]
    # (ky, kx, ci, co) -> (tap=ky*3+kx, co, ci)
    return jnp.transpose(wf, (0, 1, 3, 2)).reshape(9, cout, cin_p).astype(jnp.bfloat16)


def _border_masks(H, W, b_tile):
    """(8, b_tile*H*W) f32 masks for the 8 non-center 3x3 taps (per-image)."""
    HW = H * W
    lane = jnp.arange(b_tile * HW, dtype=jnp.int32)
    pix = lane % HW                      # per-image pixel index
    row, col = pix // W, pix % W
    masks = []
    for ky in range(3):
        for kx in range(3):
            if (ky, kx) == (1, 1):
                continue
            m = jnp.ones(lane.shape, jnp.bool_)
            if ky == 0:
                m = m & (row > 0)
            if ky == 2:
                m = m & (row < H - 1)
            if kx == 0:
                m = m & (col > 0)
            if kx == 2:
                m = m & (col < W - 1)
            masks.append(m)
    return jnp.stack(masks, axis=0).astype(jnp.float32)


# ----------------------------- wrapper ----------------------------------------

@jax.jit
def boundary_head_forward(x_nchw, conv_params, head_params):
    """Matches boundaryHead.forward: (N, Cin, H, W) -> (N, 1, H, W)."""
    N, Cin, H, W = x_nchw.shape
    HW = H * W
    cin_pad = (-Cin) % 8
    cin_p = Cin + cin_pad

    # Batch-on-lanes: b_tile images per grid step (amortizes per-step overhead,
    # fattens matmul N).  Keep >= 2 grid steps when N > 1 so both v7x
    # TensorCores get work; cap b_tile so the f32 working set stays tiny.
    b_tile = min(max(1, N // 2), 4)
    n_pad = (-N) % b_tile
    n_p = N + n_pad
    grid_n = n_p // b_tile
    L = b_tile * HW

    x = x_nchw.reshape(N, Cin, HW).astype(jnp.float32)
    x = jnp.pad(x, ((0, n_pad), (0, cin_pad), (0, 0)))       # tiny one-time pad
    # (grid_n, b_tile, Cin_p, HW) -> (grid_n, Cin_p, b_tile*HW): images side by
    # side on the lane axis (small one-time host transpose).
    x = (x.reshape(grid_n, b_tile, cin_p, HW)
          .transpose(0, 2, 1, 3)
          .reshape(grid_n, cin_p, L))

    masks = _border_masks(H, W, b_tile)                       # (8, L) f32

    flat_ws, shifts = [], []
    for i, (w, scale, shift) in enumerate(conv_params):
        flat_ws.append(_fold_conv(w, scale, cin_pad if i == 0 else 0))
        shifts.append(shift.reshape(-1, 1).astype(jnp.float32))
    wh, bh = head_params
    wh = wh.astype(jnp.float32)
    bh = bh.astype(jnp.float32)

    def const_spec(shape):
        return pl.BlockSpec(shape, lambda n, _s=len(shape): (0,) * _s)

    in_specs = [pl.BlockSpec((1, cin_p, L), lambda n: (n, 0, 0)),
                const_spec(masks.shape)]
    operands = [x, masks]
    for wf, sh in zip(flat_ws, shifts):
        in_specs += [const_spec(wf.shape), const_spec(sh.shape)]
        operands += [wf, sh]
    in_specs += [const_spec(wh.shape), const_spec(bh.shape)]
    operands += [wh, bh]

    kern = functools.partial(_boundary_head_kernel, W=W, L=L)
    out = pl.pallas_call(
        kern,
        out_shape=jax.ShapeDtypeStruct((grid_n, 1, L), jnp.float32),
        grid_spec=pltpu.PrefetchScalarGridSpec(
            num_scalar_prefetch=0,
            grid=(grid_n,),
            in_specs=in_specs,
            out_specs=pl.BlockSpec((1, 1, L), lambda n: (n, 0, 0)),
        ),
        compiler_params=pltpu.CompilerParams(
            dimension_semantics=("parallel",)),
    )(*operands)

    # Rows hold b_tile images side by side -> free reshape back to (N,1,H,W).
    out = out.reshape(n_p, HW)[:N].reshape(N, 1, H, W)
    return out.astype(x_nchw.dtype)


# ----------------------------- params ----------------------------------------

def init_params(key, in_c, out_c, dim):
    """Deterministic synthetic weights matching boundaryHead(in_c, out_c, dim, *).

    BatchNorm2d is applied in eval mode (running stats) and folded into a
    per-channel (scale, shift) pair together with the conv bias.
    NOTE: real PyTorch checkpoints store conv weights as (Cout, Cin, KH, KW);
    transpose to (KH, KW, Cin, Cout) when loading them here.
    """
    eps = 1e-5
    channels = [in_c, dim, dim, dim, out_c]
    conv_params = []
    for i in range(4):
        ci, co = channels[i], channels[i + 1]
        key, kw, kb, kg, kbe, km, kv = jax.random.split(key, 7)
        bound = 1.0 / math.sqrt(ci * 9)
        w = jax.random.uniform(kw, (3, 3, ci, co), jnp.float32, -bound, bound)
        b = jax.random.uniform(kb, (co,), jnp.float32, -bound, bound)
        gamma = jax.random.uniform(kg, (co,), jnp.float32, 0.8, 1.2)
        beta = jax.random.uniform(kbe, (co,), jnp.float32, -0.1, 0.1)
        r_mean = jax.random.uniform(km, (co,), jnp.float32, -0.1, 0.1)
        r_var = jax.random.uniform(kv, (co,), jnp.float32, 0.5, 1.5)
        scale = gamma / jnp.sqrt(r_var + eps)
        shift = scale * (b - r_mean) + beta
        conv_params.append((w, scale, shift))

    key, kw, kb = jax.random.split(key, 3)
    bound = 1.0 / math.sqrt(out_c)
    w1 = jax.random.uniform(kw, (out_c, 1), jnp.float32, -bound, bound)
    b1 = jax.random.uniform(kb, (1, 1), jnp.float32, -bound, bound)
    return conv_params, (w1, b1)


# ----------------------------- reference (pure JAX) ---------------------------

def boundary_head_reference(x_nchw, conv_params, head_params):
    x = x_nchw
    for (w, scale, shift) in conv_params:
        y = jax.lax.conv_general_dilated(
            x, w, window_strides=(1, 1), padding="SAME",
            dimension_numbers=("NCHW", "HWIO", "NCHW"),
            precision=jax.lax.Precision.HIGHEST)
        y = y * scale[None, :, None, None] + shift[None, :, None, None]
        x = jnp.maximum(y, 0.0)
    w1, b1 = head_params
    bd = jnp.einsum("nchw,co->nohw", x, w1,
                    precision=jax.lax.Precision.HIGHEST) + b1[0, 0]
    return bd


# ----------------------------- main -------------------------------------------

if __name__ == "__main__":
    # Module config: boundaryHead(in_c=4, out_c=8, dim=32, down_ratio=4)
    in_c, out_c, dim = 4, 8, 32
    N, H, W = 2, 16, 16

    key = jax.random.PRNGKey(0)
    key, kx = jax.random.split(key)
    x = jax.random.normal(kx, (N, in_c, H, W), jnp.float32)   # NCHW like PyTorch

    conv_params, head_params = init_params(key, in_c, out_c, dim)

    out = boundary_head_forward(x, conv_params, head_params)
    out = jax.block_until_ready(out)
    assert out.shape == (N, 1, H, W), out.shape

    ref = boundary_head_reference(x, conv_params, head_params)
    rel_err = float(jnp.max(jnp.abs(out - ref)) / (jnp.max(jnp.abs(ref)) + 1e-6))
    # Deliberate bf16-MXU-input design (f32 accumulate): max-normalized error
    # vs the all-f32 HIGHEST reference is ~1e-3..1e-2; 2e-2 bounds it with margin.
    assert rel_err < 2e-2, rel_err

    print("KERNEL_OK")
</pallas_src>

<mosaic_0001>
module attributes {stable_mosaic.version = 11 : i64} {
  func.func @_boundary_head_kernel(%arg0: i32, %arg1: memref<1x8x256xf32, #tpu.memory_space<vmem>>, %arg2: memref<8x256xf32, #tpu.memory_space<vmem>>, %arg3: memref<9x32x8xbf16, #tpu.memory_space<vmem>>, %arg4: memref<32x1xf32, #tpu.memory_space<vmem>>, %arg5: memref<9x32x32xbf16, #tpu.memory_space<vmem>>, %arg6: memref<32x1xf32, #tpu.memory_space<vmem>>, %arg7: memref<9x32x32xbf16, #tpu.memory_space<vmem>>, %arg8: memref<32x1xf32, #tpu.memory_space<vmem>>, %arg9: memref<9x8x32xbf16, #tpu.memory_space<vmem>>, %arg10: memref<8x1xf32, #tpu.memory_space<vmem>>, %arg11: memref<8x1xf32, #tpu.memory_space<vmem>>, %arg12: memref<1x1xf32, #tpu.memory_space<vmem>>, %arg13: memref<1x1x256xf32, #tpu.memory_space<vmem>>) attributes {dimension_semantics = [#tpu.dimension_semantics<parallel>], iteration_bounds = array<i64: 2>, scalar_prefetch = 0 : i64, scratch_operands = 0 : i64, tpu.core_type = #tpu.core_type<tc>, window_params = [{transform_indices = @transform_0, window_bounds = array<i64: 1, 8, 256>}, {pipeline_mode = #tpu.pipeline_mode<synchronous>, transform_indices = @transform_1, window_bounds = array<i64: 8, 256>}, {pipeline_mode = #tpu.pipeline_mode<synchronous>, transform_indices = @transform_2, window_bounds = array<i64: 9, 32, 8>}, {pipeline_mode = #tpu.pipeline_mode<synchronous>, transform_indices = @transform_3, window_bounds = array<i64: 32, 1>}, {pipeline_mode = #tpu.pipeline_mode<synchronous>, transform_indices = @transform_4, window_bounds = array<i64: 9, 32, 32>}, {pipeline_mode = #tpu.pipeline_mode<synchronous>, transform_indices = @transform_5, window_bounds = array<i64: 32, 1>}, {pipeline_mode = #tpu.pipeline_mode<synchronous>, transform_indices = @transform_6, window_bounds = array<i64: 9, 32, 32>}, {pipeline_mode = #tpu.pipeline_mode<synchronous>, transform_indices = @transform_7, window_bounds = array<i64: 32, 1>}, {pipeline_mode = #tpu.pipeline_mode<synchronous>, transform_indices = @transform_8, window_bounds = array<i64: 9, 8, 32>}, {pipeline_mode = #tpu.pipeline_mode<synchronous>, transform_indices = @transform_9, window_bounds = array<i64: 8, 1>}, {pipeline_mode = #tpu.pipeline_mode<synchronous>, transform_indices = @transform_10, window_bounds = array<i64: 8, 1>}, {pipeline_mode = #tpu.pipeline_mode<synchronous>, transform_indices = @transform_11, window_bounds = array<i64: 1, 1>}, {transform_indices = @transform_12, window_bounds = array<i64: 1, 1, 256>}]} {
    %c0 = arith.constant 0 : index
    %c0_0 = arith.constant 0 : index
    %c0_1 = arith.constant 0 : index
    %0 = vector.load %arg1[%c0, %c0_0, %c0_1] : memref<1x8x256xf32, #tpu.memory_space<vmem>>, vector<1x8x256xf32>
    %1 = vector.shape_cast %0 : vector<1x8x256xf32> to vector<8x256xf32>
    %c17_i32 = arith.constant 17 : i32
    %2 = tpu.dynamic_rotate %1 by %c17_i32 dim 1 : vector<8x256xf32>, i32 -> vector<8x256xf32>
    %c0_2 = arith.constant 0 : index
    %c0_3 = arith.constant 0 : index
    %3 = vector.load %arg2[%c0_2, %c0_3] : memref<8x256xf32, #tpu.memory_space<vmem>>, vector<1x256xf32>
    %4 = vector.broadcast %3 : vector<1x256xf32> to vector<8x256xf32>
    %5 = arith.mulf %2, %4 : vector<8x256xf32>
    %c0_4 = arith.constant 0 : index
    %c0_5 = arith.constant 0 : index
    %c0_6 = arith.constant 0 : index
    %6 = vector.load %arg3[%c0_4, %c0_5, %c0_6] : memref<9x32x8xbf16, #tpu.memory_space<vmem>>, vector<1x32x8xbf16>
    %7 = vector.shape_cast %6 : vector<1x32x8xbf16> to vector<32x8xbf16>
    %8 = arith.truncf %5 : vector<8x256xf32> to vector<8x256xbf16>
    %cst = arith.constant dense<0.000000e+00> : vector<32x256xf32>
    %9 = tpu.matmul %7, %8, %cst {dimension_numbers = #tpu.dot_dimension_numbers<[1], [0], [0], [1], [0, 0, 1, 1], [], []>} : vector<32x8xbf16>, vector<8x256xbf16>, vector<32x256xf32> -> vector<32x256xf32>
    %c16_i32 = arith.constant 16 : i32
    %10 = tpu.dynamic_rotate %1 by %c16_i32 dim 1 : vector<8x256xf32>, i32 -> vector<8x256xf32>
    %c1 = arith.constant 1 : index
    %c0_7 = arith.constant 0 : index
    %11 = vector.load %arg2[%c1, %c0_7] : memref<8x256xf32, #tpu.memory_space<vmem>>, vector<1x256xf32>
    %12 = vector.broadcast %11 : vector<1x256xf32> to vector<8x256xf32>
    %13 = arith.mulf %10, %12 : vector<8x256xf32>
    %c1_8 = arith.constant 1 : index
    %c0_9 = arith.constant 0 : index
    %c0_10 = arith.constant 0 : index
    %14 = vector.load %arg3[%c1_8, %c0_9, %c0_10] : memref<9x32x8xbf16, #tpu.memory_space<vmem>>, vector<1x32x8xbf16>
    %15 = vector.shape_cast %14 : vector<1x32x8xbf16> to vector<32x8xbf16>
    %16 = arith.truncf %13 : vector<8x256xf32> to vector<8x256xbf16>
    %cst_11 = arith.constant dense<0.000000e+00> : vector<32x256xf32>
    %17 = tpu.matmul %15, %16, %cst_11 {dimension_numbers = #tpu.dot_dimension_numbers<[1], [0], [0], [1], [0, 0, 1, 1], [], []>} : vector<32x8xbf16>, vector<8x256xbf16>, vector<32x256xf32> -> vector<32x256xf32>
    %18 = arith.addf %9, %17 : vector<32x256xf32>
    %c15_i32 = arith.constant 15 : i32
    %19 = tpu.dynamic_rotate %1 by %c15_i32 dim 1 : vector<8x256xf32>, i32 -> vector<8x256xf32>
    %c2 = arith.constant 2 : index
    %c0_12 = arith.constant 0 : index
    %20 = vector.load %arg2[%c2, %c0_12] : memref<8x256xf32, #tpu.memory_space<vmem>>, vector<1x256xf32>
    %21 = vector.broadcast %20 : vector<1x256xf32> to vector<8x256xf32>
    %22 = arith.mulf %19, %21 : vector<8x256xf32>
    %c2_13 = arith.constant 2 : index
    %c0_14 = arith.constant 0 : index
    %c0_15 = arith.constant 0 : index
    %23 = vector.load %arg3[%c2_13, %c0_14, %c0_15] : memref<9x32x8xbf16, #tpu.memory_space<vmem>>, vector<1x32x8xbf16>
    %24 = vector.shape_cast %23 : vector<1x32x8xbf16> to vector<32x8xbf16>
    %25 = arith.truncf %22 : vector<8x256xf32> to vector<8x256xbf16>
    %cst_16 = arith.constant dense<0.000000e+00> : vector<32x256xf32>
    %26 = tpu.matmul %24, %25, %cst_16 {dimension_numbers = #tpu.dot_dimension_numbers<[1], [0], [0], [1], [0, 0, 1, 1], [], []>} : vector<32x8xbf16>, vector<8x256xbf16>, vector<32x256xf32> -> vector<32x256xf32>
    %27 = arith.addf %18, %26 : vector<32x256xf32>
    %c1_i32 = arith.constant 1 : i32
    %28 = tpu.dynamic_rotate %1 by %c1_i32 dim 1 : vector<8x256xf32>, i32 -> vector<8x256xf32>
    %c3 = arith.constant 3 : index
    %c0_17 = arith.constant 0 : index
    %29 = vector.load %arg2[%c3, %c0_17] : memref<8x256xf32, #tpu.memory_space<vmem>>, vector<1x256xf32>
    %30 = vector.broadcast %29 : vector<1x256xf32> to vector<8x256xf32>
    %31 = arith.mulf %28, %30 : vector<8x256xf32>
    %c3_18 = arith.constant 3 : index
    %c0_19 = arith.constant 0 : index
    %c0_20 = arith.constant 0 : index
    %32 = vector.load %arg3[%c3_18, %c0_19, %c0_20] : memref<9x32x8xbf16, #tpu.memory_space<vmem>>, vector<1x32x8xbf16>
    %33 = vector.shape_cast %32 : vector<1x32x8xbf16> to vector<32x8xbf16>
    %34 = arith.truncf %31 : vector<8x256xf32> to vector<8x256xbf16>
    %cst_21 = arith.constant dense<0.000000e+00> : vector<32x256xf32>
    %35 = tpu.matmul %33, %34, %cst_21 {dimension_numbers = #tpu.dot_dimension_numbers<[1], [0], [0], [1], [0, 0, 1, 1], [], []>} : vector<32x8xbf16>, vector<8x256xbf16>, vector<32x256xf32> -> vector<32x256xf32>
    %36 = arith.addf %27, %35 : vector<32x256xf32>
    %c4 = arith.constant 4 : index
    %c0_22 = arith.constant 0 : index
    %c0_23 = arith.constant 0 : index
    %37 = vector.load %arg3[%c4, %c0_22, %c0_23] : memref<9x32x8xbf16, #tpu.memory_space<vmem>>, vector<1x32x8xbf16>
    %38 = vector.shape_cast %37 : vector<1x32x8xbf16> to vector<32x8xbf16>
    %39 = arith.truncf %1 : vector<8x256xf32> to vector<8x256xbf16>
    %cst_24 = arith.constant dense<0.000000e+00> : vector<32x256xf32>
    %40 = tpu.matmul %38, %39, %cst_24 {dimension_numbers = #tpu.dot_dimension_numbers<[1], [0], [0], [1], [0, 0, 1, 1], [], []>} : vector<32x8xbf16>, vector<8x256xbf16>, vector<32x256xf32> -> vector<32x256xf32>
    %41 = arith.addf %36, %40 : vector<32x256xf32>
    %c255_i32 = arith.constant 255 : i32
    %42 = tpu.dynamic_rotate %1 by %c255_i32 dim 1 : vector<8x256xf32>, i32 -> vector<8x256xf32>
    %c4_25 = arith.constant 4 : index
    %c0_26 = arith.constant 0 : index
    %43 = vector.load %arg2[%c4_25, %c0_26] : memref<8x256xf32, #tpu.memory_space<vmem>>, vector<1x256xf32>
    %44 = vector.broadcast %43 : vector<1x256xf32> to vector<8x256xf32>
    %45 = arith.mulf %42, %44 : vector<8x256xf32>
    %c5 = arith.constant 5 : index
    %c0_27 = arith.constant 0 : index
    %c0_28 = arith.constant 0 : index
    %46 = vector.load %arg3[%c5, %c0_27, %c0_28] : memref<9x32x8xbf16, #tpu.memory_space<vmem>>, vector<1x32x8xbf16>
    %47 = vector.shape_cast %46 : vector<1x32x8xbf16> to vector<32x8xbf16>
    %48 = arith.truncf %45 : vector<8x256xf32> to vector<8x256xbf16>
    %cst_29 = arith.constant dense<0.000000e+00> : vector<32x256xf32>
    %49 = tpu.matmul %47, %48, %cst_29 {dimension_numbers = #tpu.dot_dimension_numbers<[1], [0], [0], [1], [0, 0, 1, 1], [], []>} : vector<32x8xbf16>, vector<8x256xbf16>, vector<32x256xf32> -> vector<32x256xf32>
    %50 = arith.addf %41, %49 : vector<32x256xf32>
    %c241_i32 = arith.constant 241 : i32
    %51 = tpu.dynamic_rotate %1 by %c241_i32 dim 1 : vector<8x256xf32>, i32 -> vector<8x256xf32>
    %c5_30 = arith.constant 5 : index
    %c0_31 = arith.constant 0 : index
    %52 = vector.load %arg2[%c5_30, %c0_31] : memref<8x256xf32, #tpu.memory_space<vmem>>, vector<1x256xf32>
    %53 = vector.broadcast %52 : vector<1x256xf32> to vector<8x256xf32>
    %54 = arith.mulf %51, %53 : vector<8x256xf32>
    %c6 = arith.constant 6 : index
    %c0_32 = arith.constant 0 : index
    %c0_33 = arith.constant 0 : index
    %55 = vector.load %arg3[%c6, %c0_32, %c0_33] : memref<9x32x8xbf16, #tpu.memory_space<vmem>>, vector<1x32x8xbf16>
    %56 = vector.shape_cast %55 : vector<1x32x8xbf16> to vector<32x8xbf16>
    %57 = arith.truncf %54 : vector<8x256xf32> to vector<8x256xbf16>
    %cst_34 = arith.constant dense<0.000000e+00> : vector<32x256xf32>
    %58 = tpu.matmul %56, %57, %cst_34 {dimension_numbers = #tpu.dot_dimension_numbers<[1], [0], [0], [1], [0, 0, 1, 1], [], []>} : vector<32x8xbf16>, vector<8x256xbf16>, vector<32x256xf32> -> vector<32x256xf32>
    %59 = arith.addf %50, %58 : vector<32x256xf32>
    %c240_i32 = arith.constant 240 : i32
    %60 = tpu.dynamic_rotate %1 by %c240_i32 dim 1 : vector<8x256xf32>, i32 -> vector<8x256xf32>
    %c6_35 = arith.constant 6 : index
    %c0_36 = arith.constant 0 : index
    %61 = vector.load %arg2[%c6_35, %c0_36] : memref<8x256xf32, #tpu.memory_space<vmem>>, vector<1x256xf32>
    %62 = vector.broadcast %61 : vector<1x256xf32> to vector<8x256xf32>
    %63 = arith.mulf %60, %62 : vector<8x256xf32>
    %c7 = arith.constant 7 : index
    %c0_37 = arith.constant 0 : index
    %c0_38 = arith.constant 0 : index
    %64 = vector.load %arg3[%c7, %c0_37, %c0_38] : memref<9x32x8xbf16, #tpu.memory_space<vmem>>, vector<1x32x8xbf16>
    %65 = vector.shape_cast %64 : vector<1x32x8xbf16> to vector<32x8xbf16>
    %66 = arith.truncf %63 : vector<8x256xf32> to vector<8x256xbf16>
    %cst_39 = arith.constant dense<0.000000e+00> : vector<32x256xf32>
    %67 = tpu.matmul %65, %66, %cst_39 {dimension_numbers = #tpu.dot_dimension_numbers<[1], [0], [0], [1], [0, 0, 1, 1], [], []>} : vector<32x8xbf16>, vector<8x256xbf16>, vector<32x256xf32> -> vector<32x256xf32>
    %68 = arith.addf %59, %67 : vector<32x256xf32>
    %c239_i32 = arith.constant 239 : i32
    %69 = tpu.dynamic_rotate %1 by %c239_i32 dim 1 : vector<8x256xf32>, i32 -> vector<8x256xf32>
    %c7_40 = arith.constant 7 : index
    %c0_41 = arith.constant 0 : index
    %70 = vector.load %arg2[%c7_40, %c0_41] : memref<8x256xf32, #tpu.memory_space<vmem>>, vector<1x256xf32>
    %71 = vector.broadcast %70 : vector<1x256xf32> to vector<8x256xf32>
    %72 = arith.mulf %69, %71 : vector<8x256xf32>
    %c8 = arith.constant 8 : index
    %c0_42 = arith.constant 0 : index
    %c0_43 = arith.constant 0 : index
    %73 = vector.load %arg3[%c8, %c0_42, %c0_43] : memref<9x32x8xbf16, #tpu.memory_space<vmem>>, vector<1x32x8xbf16>
    %74 = vector.shape_cast %73 : vector<1x32x8xbf16> to vector<32x8xbf16>
    %75 = arith.truncf %72 : vector<8x256xf32> to vector<8x256xbf16>
    %cst_44 = arith.constant dense<0.000000e+00> : vector<32x256xf32>
    %76 = tpu.matmul %74, %75, %cst_44 {dimension_numbers = #tpu.dot_dimension_numbers<[1], [0], [0], [1], [0, 0, 1, 1], [], []>} : vector<32x8xbf16>, vector<8x256xbf16>, vector<32x256xf32> -> vector<32x256xf32>
    %77 = arith.addf %68, %76 : vector<32x256xf32>
    %c0_45 = arith.constant 0 : index
    %c0_46 = arith.constant 0 : index
    %78 = vector.load %arg4[%c0_45, %c0_46] : memref<32x1xf32, #tpu.memory_space<vmem>>, vector<32x1xf32>
    %79 = vector.broadcast %78 : vector<32x1xf32> to vector<32x256xf32>
    %80 = arith.addf %77, %79 : vector<32x256xf32>
    %cst_47 = arith.constant 0.000000e+00 : f32
    %81 = vector.broadcast %cst_47 : f32 to vector<32x256xf32>
    %82 = arith.maximumf %80, %81 : vector<32x256xf32>
    %c17_i32_48 = arith.constant 17 : i32
    %83 = tpu.dynamic_rotate %82 by %c17_i32_48 dim 1 : vector<32x256xf32>, i32 -> vector<32x256xf32>
    %c0_49 = arith.constant 0 : index
    %c0_50 = arith.constant 0 : index
    %84 = vector.load %arg2[%c0_49, %c0_50] : memref<8x256xf32, #tpu.memory_space<vmem>>, vector<1x256xf32>
    %85 = vector.broadcast %84 : vector<1x256xf32> to vector<32x256xf32>
    %86 = arith.mulf %83, %85 : vector<32x256xf32>
    %c0_51 = arith.constant 0 : index
    %c0_52 = arith.constant 0 : index
    %c0_53 = arith.constant 0 : index
    %87 = vector.load %arg5[%c0_51, %c0_52, %c0_53] : memref<9x32x32xbf16, #tpu.memory_space<vmem>>, vector<1x32x32xbf16>
    %88 = vector.shape_cast %87 : vector<1x32x32xbf16> to vector<32x32xbf16>
    %89 = arith.truncf %86 : vector<32x256xf32> to vector<32x256xbf16>
    %cst_54 = arith.constant dense<0.000000e+00> : vector<32x256xf32>
    %90 = tpu.matmul %88, %89, %cst_54 {dimension_numbers = #tpu.dot_dimension_numbers<[1], [0], [0], [1], [0, 0, 1, 1], [], []>} : vector<32x32xbf16>, vector<32x256xbf16>, vector<32x256xf32> -> vector<32x256xf32>
    %c16_i32_55 = arith.constant 16 : i32
    %91 = tpu.dynamic_rotate %82 by %c16_i32_55 dim 1 : vector<32x256xf32>, i32 -> vector<32x256xf32>
    %c1_56 = arith.constant 1 : index
    %c0_57 = arith.constant 0 : index
    %92 = vector.load %arg2[%c1_56, %c0_57] : memref<8x256xf32, #tpu.memory_space<vmem>>, vector<1x256xf32>
    %93 = vector.broadcast %92 : vector<1x256xf32> to vector<32x256xf32>
    %94 = arith.mulf %91, %93 : vector<32x256xf32>
    %c1_58 = arith.constant 1 : index
    %c0_59 = arith.constant 0 : index
    %c0_60 = arith.constant 0 : index
    %95 = vector.load %arg5[%c1_58, %c0_59, %c0_60] : memref<9x32x32xbf16, #tpu.memory_space<vmem>>, vector<1x32x32xbf16>
    %96 = vector.shape_cast %95 : vector<1x32x32xbf16> to vector<32x32xbf16>
    %97 = arith.truncf %94 : vector<32x256xf32> to vector<32x256xbf16>
    %cst_61 = arith.constant dense<0.000000e+00> : vector<32x256xf32>
    %98 = tpu.matmul %96, %97, %cst_61 {dimension_numbers = #tpu.dot_dimension_numbers<[1], [0], [0], [1], [0, 0, 1, 1], [], []>} : vector<32x32xbf16>, vector<32x256xbf16>, vector<32x256xf32> -> vector<32x256xf32>
    %99 = arith.addf %90, %98 : vector<32x256xf32>
    %c15_i32_62 = arith.constant 15 : i32
    %100 = tpu.dynamic_rotate %82 by %c15_i32_62 dim 1 : vector<32x256xf32>, i32 -> vector<32x256xf32>
    %c2_63 = arith.constant 2 : index
    %c0_64 = arith.constant 0 : index
    %101 = vector.load %arg2[%c2_63, %c0_64] : memref<8x256xf32, #tpu.memory_space<vmem>>, vector<1x256xf32>
    %102 = vector.broadcast %101 : vector<1x256xf32> to vector<32x256xf32>
    %103 = arith.mulf %100, %102 : vector<32x256xf32>
    %c2_65 = arith.constant 2 : index
    %c0_66 = arith.constant 0 : index
    %c0_67 = arith.constant 0 : index
    %104 = vector.load %arg5[%c2_65, %c0_66, %c0_67] : memref<9x32x32xbf16, #tpu.memory_space<vmem>>, vector<1x32x32xbf16>
    %105 = vector.shape_cast %104 : vector<1x32x32xbf16> to vector<32x32xbf16>
    %106 = arith.truncf %103 : vector<32x256xf32> to vector<32x256xbf16>
    %cst_68 = arith.constant dense<0.000000e+00> : vector<32x256xf32>
    %107 = tpu.matmul %105, %106, %cst_68 {dimension_numbers = #tpu.dot_dimension_numbers<[1], [0], [0], [1], [0, 0, 1, 1], [], []>} : vector<32x32xbf16>, vector<32x256xbf16>, vector<32x256xf32> -> vector<32x256xf32>
    %108 = arith.addf %99, %107 : vector<32x256xf32>
    %c1_i32_69 = arith.constant 1 : i32
    %109 = tpu.dynamic_rotate %82 by %c1_i32_69 dim 1 : vector<32x256xf32>, i32 -> vector<32x256xf32>
    %c3_70 = arith.constant 3 : index
    %c0_71 = arith.constant 0 : index
    %110 = vector.load %arg2[%c3_70, %c0_71] : memref<8x256xf32, #tpu.memory_space<vmem>>, vector<1x256xf32>
    %111 = vector.broadcast %110 : vector<1x256xf32> to vector<32x256xf32>
    %112 = arith.mulf %109, %111 : vector<32x256xf32>
    %c3_72 = arith.constant 3 : index
    %c0_73 = arith.constant 0 : index
    %c0_74 = arith.constant 0 : index
    %113 = vector.load %arg5[%c3_72, %c0_73, %c0_74] : memref<9x32x32xbf16, #tpu.memory_space<vmem>>, vector<1x32x32xbf16>
    %114 = vector.shape_cast %113 : vector<1x32x32xbf16> to vector<32x32xbf16>
    %115 = arith.truncf %112 : vector<32x256xf32> to vector<32x256xbf16>
    %cst_75 = arith.constant dense<0.000000e+00> : vector<32x256xf32>
    %116 = tpu.matmul %114, %115, %cst_75 {dimension_numbers = #tpu.dot_dimension_numbers<[1], [0], [0], [1], [0, 0, 1, 1], [], []>} : vector<32x32xbf16>, vector<32x256xbf16>, vector<32x256xf32> -> vector<32x256xf32>
    %117 = arith.addf %108, %116 : vector<32x256xf32>
    %c4_76 = arith.constant 4 : index
    %c0_77 = arith.constant 0 : index
    %c0_78 = arith.constant 0 : index
    %118 = vector.load %arg5[%c4_76, %c0_77, %c0_78] : memref<9x32x32xbf16, #tpu.memory_space<vmem>>, vector<1x32x32xbf16>
    %119 = vector.shape_cast %118 : vector<1x32x32xbf16> to vector<32x32xbf16>
    %120 = arith.truncf %82 : vector<32x256xf32> to vector<32x256xbf16>
    %cst_79 = arith.constant dense<0.000000e+00> : vector<32x256xf32>
    %121 = tpu.matmul %119, %120, %cst_79 {dimension_numbers = #tpu.dot_dimension_numbers<[1], [0], [0], [1], [0, 0, 1, 1], [], []>} : vector<32x32xbf16>, vector<32x256xbf16>, vector<32x256xf32> -> vector<32x256xf32>
    %122 = arith.addf %117, %121 : vector<32x256xf32>
    %c255_i32_80 = arith.constant 255 : i32
    %123 = tpu.dynamic_rotate %82 by %c255_i32_80 dim 1 : vector<32x256xf32>, i32 -> vector<32x256xf32>
    %c4_81 = arith.constant 4 : index
    %c0_82 = arith.constant 0 : index
    %124 = vector.load %arg2[%c4_81, %c0_82] : memref<8x256xf32, #tpu.memory_space<vmem>>, vector<1x256xf32>
    %125 = vector.broadcast %124 : vector<1x256xf32> to vector<32x256xf32>
    %126 = arith.mulf %123, %125 : vector<32x256xf32>
    %c5_83 = arith.constant 5 : index
    %c0_84 = arith.constant 0 : index
    %c0_85 = arith.constant 0 : index
    %127 = vector.load %arg5[%c5_83, %c0_84, %c0_85] : memref<9x32x32xbf16, #tpu.memory_space<vmem>>, vector<1x32x32xbf16>
    %128 = vector.shape_cast %127 : vector<1x32x32xbf16> to vector<32x32xbf16>
    %129 = arith.truncf %126 : vector<32x256xf32> to vector<32x256xbf16>
    %cst_86 = arith.constant dense<0.000000e+00> : vector<32x256xf32>
    %130 = tpu.matmul %128, %129, %cst_86 {dimension_numbers = #tpu.dot_dimension_numbers<[1], [0], [0], [1], [0, 0, 1, 1], [], []>} : vector<32x32xbf16>, vector<32x256xbf16>, vector<32x256xf32> -> vector<32x256xf32>
    %131 = arith.addf %122, %130 : vector<32x256xf32>
    %c241_i32_87 = arith.constant 241 : i32
    %132 = tpu.dynamic_rotate %82 by %c241_i32_87 dim 1 : vector<32x256xf32>, i32 -> vector<32x256xf32>
    %c5_88 = arith.constant 5 : index
    %c0_89 = arith.constant 0 : index
    %133 = vector.load %arg2[%c5_88, %c0_89] : memref<8x256xf32, #tpu.memory_space<vmem>>, vector<1x256xf32>
    %134 = vector.broadcast %133 : vector<1x256xf32> to vector<32x256xf32>
    %135 = arith.mulf %132, %134 : vector<32x256xf32>
    %c6_90 = arith.constant 6 : index
    %c0_91 = arith.constant 0 : index
    %c0_92 = arith.constant 0 : index
    %136 = vector.load %arg5[%c6_90, %c0_91, %c0_92] : memref<9x32x32xbf16, #tpu.memory_space<vmem>>, vector<1x32x32xbf16>
    %137 = vector.shape_cast %136 : vector<1x32x32xbf16> to vector<32x32xbf16>
    %138 = arith.truncf %135 : vector<32x256xf32> to vector<32x256xbf16>
    %cst_93 = arith.constant dense<0.000000e+00> : vector<32x256xf32>
    %139 = tpu.matmul %137, %138, %cst_93 {dimension_numbers = #tpu.dot_dimension_numbers<[1], [0], [0], [1], [0, 0, 1, 1], [], []>} : vector<32x32xbf16>, vector<32x256xbf16>, vector<32x256xf32> -> vector<32x256xf32>
    %140 = arith.addf %131, %139 : vector<32x256xf32>
    %c240_i32_94 = arith.constant 240 : i32
    %141 = tpu.dynamic_rotate %82 by %c240_i32_94 dim 1 : vector<32x256xf32>, i32 -> vector<32x256xf32>
    %c6_95 = arith.constant 6 : index
    %c0_96 = arith.constant 0 : index
    %142 = vector.load %arg2[%c6_95, %c0_96] : memref<8x256xf32, #tpu.memory_space<vmem>>, vector<1x256xf32>
    %143 = vector.broadcast %142 : vector<1x256xf32> to vector<32x256xf32>
    %144 = arith.mulf %141, %143 : vector<32x256xf32>
    %c7_97 = arith.constant 7 : index
    %c0_98 = arith.constant 0 : index
    %c0_99 = arith.constant 0 : index
    %145 = vector.load %arg5[%c7_97, %c0_98, %c0_99] : memref<9x32x32xbf16, #tpu.memory_space<vmem>>, vector<1x32x32xbf16>
    %146 = vector.shape_cast %145 : vector<1x32x32xbf16> to vector<32x32xbf16>
    %147 = arith.truncf %144 : vector<32x256xf32> to vector<32x256xbf16>
    %cst_100 = arith.constant dense<0.000000e+00> : vector<32x256xf32>
    %148 = tpu.matmul %146, %147, %cst_100 {dimension_numbers = #tpu.dot_dimension_numbers<[1], [0], [0], [1], [0, 0, 1, 1], [], []>} : vector<32x32xbf16>, vector<32x256xbf16>, vector<32x256xf32> -> vector<32x256xf32>
    %149 = arith.addf %140, %148 : vector<32x256xf32>
    %c239_i32_101 = arith.constant 239 : i32
    %150 = tpu.dynamic_rotate %82 by %c239_i32_101 dim 1 : vector<32x256xf32>, i32 -> vector<32x256xf32>
    %c7_102 = arith.constant 7 : index
    %c0_103 = arith.constant 0 : index
    %151 = vector.load %arg2[%c7_102, %c0_103] : memref<8x256xf32, #tpu.memory_space<vmem>>, vector<1x256xf32>
    %152 = vector.broadcast %151 : vector<1x256xf32> to vector<32x256xf32>
    %153 = arith.mulf %150, %152 : vector<32x256xf32>
    %c8_104 = arith.constant 8 : index
    %c0_105 = arith.constant 0 : index
    %c0_106 = arith.constant 0 : index
    %154 = vector.load %arg5[%c8_104, %c0_105, %c0_106] : memref<9x32x32xbf16, #tpu.memory_space<vmem>>, vector<1x32x32xbf16>
    %155 = vector.shape_cast %154 : vector<1x32x32xbf16> to vector<32x32xbf16>
    %156 = arith.truncf %153 : vector<32x256xf32> to vector<32x256xbf16>
    %cst_107 = arith.constant dense<0.000000e+00> : vector<32x256xf32>
    %157 = tpu.matmul %155, %156, %cst_107 {dimension_numbers = #tpu.dot_dimension_numbers<[1], [0], [0], [1], [0, 0, 1, 1], [], []>} : vector<32x32xbf16>, vector<32x256xbf16>, vector<32x256xf32> -> vector<32x256xf32>
    %158 = arith.addf %149, %157 : vector<32x256xf32>
    %c0_108 = arith.constant 0 : index
    %c0_109 = arith.constant 0 : index
    %159 = vector.load %arg6[%c0_108, %c0_109] : memref<32x1xf32, #tpu.memory_space<vmem>>, vector<32x1xf32>
    %160 = vector.broadcast %159 : vector<32x1xf32> to vector<32x256xf32>
    %161 = arith.addf %158, %160 : vector<32x256xf32>
    %cst_110 = arith.constant 0.000000e+00 : f32
    %162 = vector.broadcast %cst_110 : f32 to vector<32x256xf32>
    %163 = arith.maximumf %161, %162 : vector<32x256xf32>
    %c17_i32_111 = arith.constant 17 : i32
    %164 = tpu.dynamic_rotate %163 by %c17_i32_111 dim 1 : vector<32x256xf32>, i32 -> vector<32x256xf32>
    %c0_112 = arith.constant 0 : index
    %c0_113 = arith.constant 0 : index
    %165 = vector.load %arg2[%c0_112, %c0_113] : memref<8x256xf32, #tpu.memory_space<vmem>>, vector<1x256xf32>
    %166 = vector.broadcast %165 : vector<1x256xf32> to vector<32x256xf32>
    %167 = arith.mulf %164, %166 : vector<32x256xf32>
    %c0_114 = arith.constant 0 : index
    %c0_115 = arith.constant 0 : index
    %c0_116 = arith.constant 0 : index
    %168 = vector.load %arg7[%c0_114, %c0_115, %c0_116] : memref<9x32x32xbf16, #tpu.memory_space<vmem>>, vector<1x32x32xbf16>
    %169 = vector.shape_cast %168 : vector<1x32x32xbf16> to vector<32x32xbf16>
    %170 = arith.truncf %167 : vector<32x256xf32> to vector<32x256xbf16>
    %cst_117 = arith.constant dense<0.000000e+00> : vector<32x256xf32>
    %171 = tpu.matmul %169, %170, %cst_117 {dimension_numbers = #tpu.dot_dimension_numbers<[1], [0], [0], [1], [0, 0, 1, 1], [], []>} : vector<32x32xbf16>, vector<32x256xbf16>, vector<32x256xf32> -> vector<32x256xf32>
    %c16_i32_118 = arith.constant 16 : i32
    %172 = tpu.dynamic_rotate %163 by %c16_i32_118 dim 1 : vector<32x256xf32>, i32 -> vector<32x256xf32>
    %c1_119 = arith.constant 1 : index
    %c0_120 = arith.constant 0 : index
    %173 = vector.load %arg2[%c1_119, %c0_120] : memref<8x256xf32, #tpu.memory_space<vmem>>, vector<1x256xf32>
    %174 = vector.broadcast %173 : vector<1x256xf32> to vector<32x256xf32>
    %175 = arith.mulf %172, %174 : vector<32x256xf32>
    %c1_121 = arith.constant 1 : index
    %c0_122 = arith.constant 0 : index
    %c0_123 = arith.constant 0 : index
    %176 = vector.load %arg7[%c1_121, %c0_122, %c0_123] : memref<9x32x32xbf16, #tpu.memory_space<vmem>>, vector<1x32x32xbf16>
    %177 = vector.shape_cast %176 : vector<1x32x32xbf16> to vector<32x32xbf16>
    %178 = arith.truncf %175 : vector<32x256xf32> to vector<32x256xbf16>
    %cst_124 = arith.constant dense<0.000000e+00> : vector<32x256xf32>
    %179 = tpu.matmul %177, %178, %cst_124 {dimension_numbers = #tpu.dot_dimension_numbers<[1], [0], [0], [1], [0, 0, 1, 1], [], []>} : vector<32x32xbf16>, vector<32x256xbf16>, vector<32x256xf32> -> vector<32x256xf32>
    %180 = arith.addf %171, %179 : vector<32x256xf32>
    %c15_i32_125 = arith.constant 15 : i32
    %181 = tpu.dynamic_rotate %163 by %c15_i32_125 dim 1 : vector<32x256xf32>, i32 -> vector<32x256xf32>
    %c2_126 = arith.constant 2 : index
    %c0_127 = arith.constant 0 : index
    %182 = vector.load %arg2[%c2_126, %c0_127] : memref<8x256xf32, #tpu.memory_space<vmem>>, vector<1x256xf32>
    %183 = vector.broadcast %182 : vector<1x256xf32> to vector<32x256xf32>
    %184 = arith.mulf %181, %183 : vector<32x256xf32>
    %c2_128 = arith.constant 2 : index
    %c0_129 = arith.constant 0 : index
    %c0_130 = arith.constant 0 : index
    %185 = vector.load %arg7[%c2_128, %c0_129, %c0_130] : memref<9x32x32xbf16, #tpu.memory_space<vmem>>, vector<1x32x32xbf16>
    %186 = vector.shape_cast %185 : vector<1x32x32xbf16> to vector<32x32xbf16>
    %187 = arith.truncf %184 : vector<32x256xf32> to vector<32x256xbf16>
    %cst_131 = arith.constant dense<0.000000e+00> : vector<32x256xf32>
    %188 = tpu.matmul %186, %187, %cst_131 {dimension_numbers = #tpu.dot_dimension_numbers<[1], [0], [0], [1], [0, 0, 1, 1], [], []>} : vector<32x32xbf16>, vector<32x256xbf16>, vector<32x256xf32> -> vector<32x256xf32>
    %189 = arith.addf %180, %188 : vector<32x256xf32>
    %c1_i32_132 = arith.constant 1 : i32
    %190 = tpu.dynamic_rotate %163 by %c1_i32_132 dim 1 : vector<32x256xf32>, i32 -> vector<32x256xf32>
    %c3_133 = arith.constant 3 : index
    %c0_134 = arith.constant 0 : index
    %191 = vector.load %arg2[%c3_133, %c0_134] : memref<8x256xf32, #tpu.memory_space<vmem>>, vector<1x256xf32>
    %192 = vector.broadcast %191 : vector<1x256xf32> to vector<32x256xf32>
    %193 = arith.mulf %190, %192 : vector<32x256xf32>
    %c3_135 = arith.constant 3 : index
    %c0_136 = arith.constant 0 : index
    %c0_137 = arith.constant 0 : index
    %194 = vector.load %arg7[%c3_135, %c0_136, %c0_137] : memref<9x32x32xbf16, #tpu.memory_space<vmem>>, vector<1x32x32xbf16>
    %195 = vector.shape_cast %194 : vector<1x32x32xbf16> to vector<32x32xbf16>
    %196 = arith.truncf %193 : vector<32x256xf32> to vector<32x256xbf16>
    %cst_138 = arith.constant dense<0.000000e+00> : vector<32x256xf32>
    %197 = tpu.matmul %195, %196, %cst_138 {dimension_numbers = #tpu.dot_dimension_numbers<[1], [0], [0], [1], [0, 0, 1, 1], [], []>} : vector<32x32xbf16>, vector<32x256xbf16>, vector<32x256xf32> -> vector<32x256xf32>
    %198 = arith.addf %189, %197 : vector<32x256xf32>
    %c4_139 = arith.constant 4 : index
    %c0_140 = arith.constant 0 : index
    %c0_141 = arith.constant 0 : index
    %199 = vector.load %arg7[%c4_139, %c0_140, %c0_141] : memref<9x32x32xbf16, #tpu.memory_space<vmem>>, vector<1x32x32xbf16>
    %200 = vector.shape_cast %199 : vector<1x32x32xbf16> to vector<32x32xbf16>
    %201 = arith.truncf %163 : vector<32x256xf32> to vector<32x256xbf16>
    %cst_142 = arith.constant dense<0.000000e+00> : vector<32x256xf32>
    %202 = tpu.matmul %200, %201, %cst_142 {dimension_numbers = #tpu.dot_dimension_numbers<[1], [0], [0], [1], [0, 0, 1, 1], [], []>} : vector<32x32xbf16>, vector<32x256xbf16>, vector<32x256xf32> -> vector<32x256xf32>
    %203 = arith.addf %198, %202 : vector<32x256xf32>
    %c255_i32_143 = arith.constant 255 : i32
    %204 = tpu.dynamic_rotate %163 by %c255_i32_143 dim 1 : vector<32x256xf32>, i32 -> vector<32x256xf32>
    %c4_144 = arith.constant 4 : index
    %c0_145 = arith.constant 0 : index
    %205 = vector.load %arg2[%c4_144, %c0_145] : memref<8x256xf32, #tpu.memory_space<vmem>>, vector<1x256xf32>
    %206 = vector.broadcast %205 : vector<1x256xf32> to vector<32x256xf32>
    %207 = arith.mulf %204, %206 : vector<32x256xf32>
    %c5_146 = arith.constant 5 : index
    %c0_147 = arith.constant 0 : index
    %c0_148 = arith.constant 0 : index
    %208 = vector.load %arg7[%c5_146, %c0_147, %c0_148] : memref<9x32x32xbf16, #tpu.memory_space<vmem>>, vector<1x32x32xbf16>
    %209 = vector.shape_cast %208 : vector<1x32x32xbf16> to vector<32x32xbf16>
    %210 = arith.truncf %207 : vector<32x256xf32> to vector<32x256xbf16>
    %cst_149 = arith.constant dense<0.000000e+00> : vector<32x256xf32>
    %211 = tpu.matmul %209, %210, %cst_149 {dimension_numbers = #tpu.dot_dimension_numbers<[1], [0], [0], [1], [0, 0, 1, 1], [], []>} : vector<32x32xbf16>, vector<32x256xbf16>, vector<32x256xf32> -> vector<32x256xf32>
    %212 = arith.addf %203, %211 : vector<32x256xf32>
    %c241_i32_150 = arith.constant 241 : i32
    %213 = tpu.dynamic_rotate %163 by %c241_i32_150 dim 1 : vector<32x256xf32>, i32 -> vector<32x256xf32>
    %c5_151 = arith.constant 5 : index
    %c0_152 = arith.constant 0 : index
    %214 = vector.load %arg2[%c5_151, %c0_152] : memref<8x256xf32, #tpu.memory_space<vmem>>, vector<1x256xf32>
    %215 = vector.broadcast %214 : vector<1x256xf32> to vector<32x256xf32>
    %216 = arith.mulf %213, %215 : vector<32x256xf32>
    %c6_153 = arith.constant 6 : index
    %c0_154 = arith.constant 0 : index
    %c0_155 = arith.constant 0 : index
    %217 = vector.load %arg7[%c6_153, %c0_154, %c0_155] : memref<9x32x32xbf16, #tpu.memory_space<vmem>>, vector<1x32x32xbf16>
    %218 = vector.shape_cast %217 : vector<1x32x32xbf16> to vector<32x32xbf16>
    %219 = arith.truncf %216 : vector<32x256xf32> to vector<32x256xbf16>
    %cst_156 = arith.constant dense<0.000000e+00> : vector<32x256xf32>
    %220 = tpu.matmul %218, %219, %cst_156 {dimension_numbers = #tpu.dot_dimension_numbers<[1], [0], [0], [1], [0, 0, 1, 1], [], []>} : vector<32x32xbf16>, vector<32x256xbf16>, vector<32x256xf32> -> vector<32x256xf32>
    %221 = arith.addf %212, %220 : vector<32x256xf32>
    %c240_i32_157 = arith.constant 240 : i32
    %222 = tpu.dynamic_rotate %163 by %c240_i32_157 dim 1 : vector<32x256xf32>, i32 -> vector<32x256xf32>
    %c6_158 = arith.constant 6 : index
    %c0_159 = arith.constant 0 : index
    %223 = vector.load %arg2[%c6_158, %c0_159] : memref<8x256xf32, #tpu.memory_space<vmem>>, vector<1x256xf32>
    %224 = vector.broadcast %223 : vector<1x256xf32> to vector<32x256xf32>
    %225 = arith.mulf %222, %224 : vector<32x256xf32>
    %c7_160 = arith.constant 7 : index
    %c0_161 = arith.constant 0 : index
    %c0_162 = arith.constant 0 : index
    %226 = vector.load %arg7[%c7_160, %c0_161, %c0_162] : memref<9x32x32xbf16, #tpu.memory_space<vmem>>, vector<1x32x32xbf16>
    %227 = vector.shape_cast %226 : vector<1x32x32xbf16> to vector<32x32xbf16>
    %228 = arith.truncf %225 : vector<32x256xf32> to vector<32x256xbf16>
    %cst_163 = arith.constant dense<0.000000e+00> : vector<32x256xf32>
    %229 = tpu.matmul %227, %228, %cst_163 {dimension_numbers = #tpu.dot_dimension_numbers<[1], [0], [0], [1], [0, 0, 1, 1], [], []>} : vector<32x32xbf16>, vector<32x256xbf16>, vector<32x256xf32> -> vector<32x256xf32>
    %230 = arith.addf %221, %229 : vector<32x256xf32>
    %c239_i32_164 = arith.constant 239 : i32
    %231 = tpu.dynamic_rotate %163 by %c239_i32_164 dim 1 : vector<32x256xf32>, i32 -> vector<32x256xf32>
    %c7_165 = arith.constant 7 : index
    %c0_166 = arith.constant 0 : index
    %232 = vector.load %arg2[%c7_165, %c0_166] : memref<8x256xf32, #tpu.memory_space<vmem>>, vector<1x256xf32>
    %233 = vector.broadcast %232 : vector<1x256xf32> to vector<32x256xf32>
    %234 = arith.mulf %231, %233 : vector<32x256xf32>
    %c8_167 = arith.constant 8 : index
    %c0_168 = arith.constant 0 : index
    %c0_169 = arith.constant 0 : index
    %235 = vector.load %arg7[%c8_167, %c0_168, %c0_169] : memref<9x32x32xbf16, #tpu.memory_space<vmem>>, vector<1x32x32xbf16>
    %236 = vector.shape_cast %235 : vector<1x32x32xbf16> to vector<32x32xbf16>
    %237 = arith.truncf %234 : vector<32x256xf32> to vector<32x256xbf16>
    %cst_170 = arith.constant dense<0.000000e+00> : vector<32x256xf32>
    %238 = tpu.matmul %236, %237, %cst_170 {dimension_numbers = #tpu.dot_dimension_numbers<[1], [0], [0], [1], [0, 0, 1, 1], [], []>} : vector<32x32xbf16>, vector<32x256xbf16>, vector<32x256xf32> -> vector<32x256xf32>
    %239 = arith.addf %230, %238 : vector<32x256xf32>
    %c0_171 = arith.constant 0 : index
    %c0_172 = arith.constant 0 : index
    %240 = vector.load %arg8[%c0_171, %c0_172] : memref<32x1xf32, #tpu.memory_space<vmem>>, vector<32x1xf32>
    %241 = vector.broadcast %240 : vector<32x1xf32> to vector<32x256xf32>
    %242 = arith.addf %239, %241 : vector<32x256xf32>
    %cst_173 = arith.constant 0.000000e+00 : f32
    %243 = vector.broadcast %cst_173 : f32 to vector<32x256xf32>
    %244 = arith.maximumf %242, %243 : vector<32x256xf32>
    %c17_i32_174 = arith.constant 17 : i32
    %245 = tpu.dynamic_rotate %244 by %c17_i32_174 dim 1 : vector<32x256xf32>, i32 -> vector<32x256xf32>
    %c0_175 = arith.constant 0 : index
    %c0_176 = arith.constant 0 : index
    %246 = vector.load %arg2[%c0_175, %c0_176] : memref<8x256xf32, #tpu.memory_space<vmem>>, vector<1x256xf32>
    %247 = vector.broadcast %246 : vector<1x256xf32> to vector<32x256xf32>
    %248 = arith.mulf %245, %247 : vector<32x256xf32>
    %c0_177 = arith.constant 0 : index
    %c0_178 = arith.constant 0 : index
    %c0_179 = arith.constant 0 : index
    %249 = vector.load %arg9[%c0_177, %c0_178, %c0_179] : memref<9x8x32xbf16, #tpu.memory_space<vmem>>, vector<1x8x32xbf16>
    %250 = vector.shape_cast %249 : vector<1x8x32xbf16> to vector<8x32xbf16>
    %251 = arith.truncf %248 : vector<32x256xf32> to vector<32x256xbf16>
    %cst_180 = arith.constant dense<0.000000e+00> : vector<8x256xf32>
    %252 = tpu.matmul %250, %251, %cst_180 {dimension_numbers = #tpu.dot_dimension_numbers<[1], [0], [0], [1], [0, 0, 1, 1], [], []>} : vector<8x32xbf16>, vector<32x256xbf16>, vector<8x256xf32> -> vector<8x256xf32>
    %c16_i32_181 = arith.constant 16 : i32
    %253 = tpu.dynamic_rotate %244 by %c16_i32_181 dim 1 : vector<32x256xf32>, i32 -> vector<32x256xf32>
    %c1_182 = arith.constant 1 : index
    %c0_183 = arith.constant 0 : index
    %254 = vector.load %arg2[%c1_182, %c0_183] : memref<8x256xf32, #tpu.memory_space<vmem>>, vector<1x256xf32>
    %255 = vector.broadcast %254 : vector<1x256xf32> to vector<32x256xf32>
    %256 = arith.mulf %253, %255 : vector<32x256xf32>
    %c1_184 = arith.constant 1 : index
    %c0_185 = arith.constant 0 : index
    %c0_186 = arith.constant 0 : index
    %257 = vector.load %arg9[%c1_184, %c0_185, %c0_186] : memref<9x8x32xbf16, #tpu.memory_space<vmem>>, vector<1x8x32xbf16>
    %258 = vector.shape_cast %257 : vector<1x8x32xbf16> to vector<8x32xbf16>
    %259 = arith.truncf %256 : vector<32x256xf32> to vector<32x256xbf16>
    %cst_187 = arith.constant dense<0.000000e+00> : vector<8x256xf32>
    %260 = tpu.matmul %258, %259, %cst_187 {dimension_numbers = #tpu.dot_dimension_numbers<[1], [0], [0], [1], [0, 0, 1, 1], [], []>} : vector<8x32xbf16>, vector<32x256xbf16>, vector<8x256xf32> -> vector<8x256xf32>
    %261 = arith.addf %252, %260 : vector<8x256xf32>
    %c15_i32_188 = arith.constant 15 : i32
    %262 = tpu.dynamic_rotate %244 by %c15_i32_188 dim 1 : vector<32x256xf32>, i32 -> vector<32x256xf32>
    %c2_189 = arith.constant 2 : index
    %c0_190 = arith.constant 0 : index
    %263 = vector.load %arg2[%c2_189, %c0_190] : memref<8x256xf32, #tpu.memory_space<vmem>>, vector<1x256xf32>
    %264 = vector.broadcast %263 : vector<1x256xf32> to vector<32x256xf32>
    %265 = arith.mulf %262, %264 : vector<32x256xf32>
    %c2_191 = arith.constant 2 : index
    %c0_192 = arith.constant 0 : index
    %c0_193 = arith.constant 0 : index
    %266 = vector.load %arg9[%c2_191, %c0_192, %c0_193] : memref<9x8x32xbf16, #tpu.memory_space<vmem>>, vector<1x8x32xbf16>
    %267 = vector.shape_cast %266 : vector<1x8x32xbf16> to vector<8x32xbf16>
    %268 = arith.truncf %265 : vector<32x256xf32> to vector<32x256xbf16>
    %cst_194 = arith.constant dense<0.000000e+00> : vector<8x256xf32>
    %269 = tpu.matmul %267, %268, %cst_194 {dimension_numbers = #tpu.dot_dimension_numbers<[1], [0], [0], [1], [0, 0, 1, 1], [], []>} : vector<8x32xbf16>, vector<32x256xbf16>, vector<8x256xf32> -> vector<8x256xf32>
    %270 = arith.addf %261, %269 : vector<8x256xf32>
    %c1_i32_195 = arith.constant 1 : i32
    %271 = tpu.dynamic_rotate %244 by %c1_i32_195 dim 1 : vector<32x256xf32>, i32 -> vector<32x256xf32>
    %c3_196 = arith.constant 3 : index
    %c0_197 = arith.constant 0 : index
    %272 = vector.load %arg2[%c3_196, %c0_197] : memref<8x256xf32, #tpu.memory_space<vmem>>, vector<1x256xf32>
    %273 = vector.broadcast %272 : vector<1x256xf32> to vector<32x256xf32>
    %274 = arith.mulf %271, %273 : vector<32x256xf32>
    %c3_198 = arith.constant 3 : index
    %c0_199 = arith.constant 0 : index
    %c0_200 = arith.constant 0 : index
    %275 = vector.load %arg9[%c3_198, %c0_199, %c0_200] : memref<9x8x32xbf16, #tpu.memory_space<vmem>>, vector<1x8x32xbf16>
    %276 = vector.shape_cast %275 : vector<1x8x32xbf16> to vector<8x32xbf16>
    %277 = arith.truncf %274 : vector<32x256xf32> to vector<32x256xbf16>
    %cst_201 = arith.constant dense<0.000000e+00> : vector<8x256xf32>
    %278 = tpu.matmul %276, %277, %cst_201 {dimension_numbers = #tpu.dot_dimension_numbers<[1], [0], [0], [1], [0, 0, 1, 1], [], []>} : vector<8x32xbf16>, vector<32x256xbf16>, vector<8x256xf32> -> vector<8x256xf32>
    %279 = arith.addf %270, %278 : vector<8x256xf32>
    %c4_202 = arith.constant 4 : index
    %c0_203 = arith.constant 0 : index
    %c0_204 = arith.constant 0 : index
    %280 = vector.load %arg9[%c4_202, %c0_203, %c0_204] : memref<9x8x32xbf16, #tpu.memory_space<vmem>>, vector<1x8x32xbf16>
    %281 = vector.shape_cast %280 : vector<1x8x32xbf16> to vector<8x32xbf16>
    %282 = arith.truncf %244 : vector<32x256xf32> to vector<32x256xbf16>
    %cst_205 = arith.constant dense<0.000000e+00> : vector<8x256xf32>
    %283 = tpu.matmul %281, %282, %cst_205 {dimension_numbers = #tpu.dot_dimension_numbers<[1], [0], [0], [1], [0, 0, 1, 1], [], []>} : vector<8x32xbf16>, vector<32x256xbf16>, vector<8x256xf32> -> vector<8x256xf32>
    %284 = arith.addf %279, %283 : vector<8x256xf32>
    %c255_i32_206 = arith.constant 255 : i32
    %285 = tpu.dynamic_rotate %244 by %c255_i32_206 dim 1 : vector<32x256xf32>, i32 -> vector<32x256xf32>
    %c4_207 = arith.constant 4 : index
    %c0_208 = arith.constant 0 : index
    %286 = vector.load %arg2[%c4_207, %c0_208] : memref<8x256xf32, #tpu.memory_space<vmem>>, vector<1x256xf32>
    %287 = vector.broadcast %286 : vector<1x256xf32> to vector<32x256xf32>
    %288 = arith.mulf %285, %287 : vector<32x256xf32>
    %c5_209 = arith.constant 5 : index
    %c0_210 = arith.constant 0 : index
    %c0_211 = arith.constant 0 : index
    %289 = vector.load %arg9[%c5_209, %c0_210, %c0_211] : memref<9x8x32xbf16, #tpu.memory_space<vmem>>, vector<1x8x32xbf16>
    %290 = vector.shape_cast %289 : vector<1x8x32xbf16> to vector<8x32xbf16>
    %291 = arith.truncf %288 : vector<32x256xf32> to vector<32x256xbf16>
    %cst_212 = arith.constant dense<0.000000e+00> : vector<8x256xf32>
    %292 = tpu.matmul %290, %291, %cst_212 {dimension_numbers = #tpu.dot_dimension_numbers<[1], [0], [0], [1], [0, 0, 1, 1], [], []>} : vector<8x32xbf16>, vector<32x256xbf16>, vector<8x256xf32> -> vector<8x256xf32>
    %293 = arith.addf %284, %292 : vector<8x256xf32>
    %c241_i32_213 = arith.constant 241 : i32
    %294 = tpu.dynamic_rotate %244 by %c241_i32_213 dim 1 : vector<32x256xf32>, i32 -> vector<32x256xf32>
    %c5_214 = arith.constant 5 : index
    %c0_215 = arith.constant 0 : index
    %295 = vector.load %arg2[%c5_214, %c0_215] : memref<8x256xf32, #tpu.memory_space<vmem>>, vector<1x256xf32>
    %296 = vector.broadcast %295 : vector<1x256xf32> to vector<32x256xf32>
    %297 = arith.mulf %294, %296 : vector<32x256xf32>
    %c6_216 = arith.constant 6 : index
    %c0_217 = arith.constant 0 : index
    %c0_218 = arith.constant 0 : index
    %298 = vector.load %arg9[%c6_216, %c0_217, %c0_218] : memref<9x8x32xbf16, #tpu.memory_space<vmem>>, vector<1x8x32xbf16>
    %299 = vector.shape_cast %298 : vector<1x8x32xbf16> to vector<8x32xbf16>
    %300 = arith.truncf %297 : vector<32x256xf32> to vector<32x256xbf16>
    %cst_219 = arith.constant dense<0.000000e+00> : vector<8x256xf32>
    %301 = tpu.matmul %299, %300, %cst_219 {dimension_numbers = #tpu.dot_dimension_numbers<[1], [0], [0], [1], [0, 0, 1, 1], [], []>} : vector<8x32xbf16>, vector<32x256xbf16>, vector<8x256xf32> -> vector<8x256xf32>
    %302 = arith.addf %293, %301 : vector<8x256xf32>
    %c240_i32_220 = arith.constant 240 : i32
    %303 = tpu.dynamic_rotate %244 by %c240_i32_220 dim 1 : vector<32x256xf32>, i32 -> vector<32x256xf32>
    %c6_221 = arith.constant 6 : index
    %c0_222 = arith.constant 0 : index
    %304 = vector.load %arg2[%c6_221, %c0_222] : memref<8x256xf32, #tpu.memory_space<vmem>>, vector<1x256xf32>
    %305 = vector.broadcast %304 : vector<1x256xf32> to vector<32x256xf32>
    %306 = arith.mulf %303, %305 : vector<32x256xf32>
    %c7_223 = arith.constant 7 : index
    %c0_224 = arith.constant 0 : index
    %c0_225 = arith.constant 0 : index
    %307 = vector.load %arg9[%c7_223, %c0_224, %c0_225] : memref<9x8x32xbf16, #tpu.memory_space<vmem>>, vector<1x8x32xbf16>
    %308 = vector.shape_cast %307 : vector<1x8x32xbf16> to vector<8x32xbf16>
    %309 = arith.truncf %306 : vector<32x256xf32> to vector<32x256xbf16>
    %cst_226 = arith.constant dense<0.000000e+00> : vector<8x256xf32>
    %310 = tpu.matmul %308, %309, %cst_226 {dimension_numbers = #tpu.dot_dimension_numbers<[1], [0], [0], [1], [0, 0, 1, 1], [], []>} : vector<8x32xbf16>, vector<32x256xbf16>, vector<8x256xf32> -> vector<8x256xf32>
    %311 = arith.addf %302, %310 : vector<8x256xf32>
    %c239_i32_227 = arith.constant 239 : i32
    %312 = tpu.dynamic_rotate %244 by %c239_i32_227 dim 1 : vector<32x256xf32>, i32 -> vector<32x256xf32>
    %c7_228 = arith.constant 7 : index
    %c0_229 = arith.constant 0 : index
    %313 = vector.load %arg2[%c7_228, %c0_229] : memref<8x256xf32, #tpu.memory_space<vmem>>, vector<1x256xf32>
    %314 = vector.broadcast %313 : vector<1x256xf32> to vector<32x256xf32>
    %315 = arith.mulf %312, %314 : vector<32x256xf32>
    %c8_230 = arith.constant 8 : index
    %c0_231 = arith.constant 0 : index
    %c0_232 = arith.constant 0 : index
    %316 = vector.load %arg9[%c8_230, %c0_231, %c0_232] : memref<9x8x32xbf16, #tpu.memory_space<vmem>>, vector<1x8x32xbf16>
    %317 = vector.shape_cast %316 : vector<1x8x32xbf16> to vector<8x32xbf16>
    %318 = arith.truncf %315 : vector<32x256xf32> to vector<32x256xbf16>
    %cst_233 = arith.constant dense<0.000000e+00> : vector<8x256xf32>
    %319 = tpu.matmul %317, %318, %cst_233 {dimension_numbers = #tpu.dot_dimension_numbers<[1], [0], [0], [1], [0, 0, 1, 1], [], []>} : vector<8x32xbf16>, vector<32x256xbf16>, vector<8x256xf32> -> vector<8x256xf32>
    %320 = arith.addf %311, %319 : vector<8x256xf32>
    %c0_234 = arith.constant 0 : index
    %c0_235 = arith.constant 0 : index
    %321 = vector.load %arg10[%c0_234, %c0_235] : memref<8x1xf32, #tpu.memory_space<vmem>>, vector<8x1xf32>
    %322 = vector.broadcast %321 : vector<8x1xf32> to vector<8x256xf32>
    %323 = arith.addf %320, %322 : vector<8x256xf32>
    %cst_236 = arith.constant 0.000000e+00 : f32
    %324 = vector.broadcast %cst_236 : f32 to vector<8x256xf32>
    %325 = arith.maximumf %323, %324 : vector<8x256xf32>
    %c0_237 = arith.constant 0 : index
    %c0_238 = arith.constant 0 : index
    %326 = vector.load %arg11[%c0_237, %c0_238] : memref<8x1xf32, #tpu.memory_space<vmem>>, vector<8x1xf32>
    %327 = vector.broadcast %326 : vector<8x1xf32> to vector<8x256xf32>
    %328 = arith.mulf %325, %327 : vector<8x256xf32>
    %cst_239 = arith.constant dense<0.000000e+00> : vector<256xf32>
    %329 = vector.multi_reduction <add>, %328, %cst_239 [0] : vector<8x256xf32> to vector<256xf32>
    %330 = vector.shape_cast %329 : vector<256xf32> to vector<1x256xf32>
    %c0_240 = arith.constant 0 : index
    %c0_241 = arith.constant 0 : index
    %331 = vector.load %arg12[%c0_240, %c0_241] : memref<1x1xf32, #tpu.memory_space<vmem>>, vector<1x1xf32>
    %332 = vector.broadcast %331 : vector<1x1xf32> to vector<1x256xf32>
    %333 = arith.addf %330, %332 : vector<1x256xf32>
    %334 = vector.shape_cast %333 : vector<1x256xf32> to vector<1x1x256xf32>
    %c0_242 = arith.constant 0 : index
    %c0_243 = arith.constant 0 : index
    %c0_244 = arith.constant 0 : index
    %335 = vector.load %arg13[%c0_242, %c0_243, %c0_244] : memref<1x1x256xf32, #tpu.memory_space<vmem>>, vector<1x1x256xf32>
    tpu.vector_store %arg13[%c0_242, %c0_243, %c0_244], %334 {strides = array<i32>} : memref<1x1x256xf32, #tpu.memory_space<vmem>>, vector<1x1x256xf32>,
    return
  }
  func.func @transform_0(%arg0: i32) -> (i32, i32, i32) {
    %c0_i32 = arith.constant 0 : i32
    %c0_i32_0 = arith.constant 0 : i32
    %c0_i32_1 = arith.constant 0 : i32
    return %arg0, %c0_i32, %c0_i32_0 : i32, i32, i32
  }
  func.func @transform_1(%arg0: i32) -> (i32, i32) {
    %c0_i32 = arith.constant 0 : i32
    %c0_i32_0 = arith.constant 0 : i32
    %c0_i32_1 = arith.constant 0 : i32
    return %c0_i32, %c0_i32_0 : i32, i32
  }
  func.func @transform_2(%arg0: i32) -> (i32, i32, i32) {
    %c0_i32 = arith.constant 0 : i32
    %c0_i32_0 = arith.constant 0 : i32
    %c0_i32_1 = arith.constant 0 : i32
    %c0_i32_2 = arith.constant 0 : i32
    return %c0_i32, %c0_i32_0, %c0_i32_1 : i32, i32, i32
  }
  func.func @transform_3(%arg0: i32) -> (i32, i32) {
    %c0_i32 = arith.constant 0 : i32
    %c0_i32_0 = arith.constant 0 : i32
    %c0_i32_1 = arith.constant 0 : i32
    return %c0_i32, %c0_i32_0 : i32, i32
  }
  func.func @transform_4(%arg0: i32) -> (i32, i32, i32) {
    %c0_i32 = arith.constant 0 : i32
    %c0_i32_0 = arith.constant 0 : i32
    %c0_i32_1 = arith.constant 0 : i32
    %c0_i32_2 = arith.constant 0 : i32
    return %c0_i32, %c0_i32_0, %c0_i32_1 : i32, i32, i32
  }
  func.func @transform_5(%arg0: i32) -> (i32, i32) {
    %c0_i32 = arith.constant 0 : i32
    %c0_i32_0 = arith.constant 0 : i32
    %c0_i32_1 = arith.constant 0 : i32
    return %c0_i32, %c0_i32_0 : i32, i32
  }
  func.func @transform_6(%arg0: i32) -> (i32, i32, i32) {
    %c0_i32 = arith.constant 0 : i32
    %c0_i32_0 = arith.constant 0 : i32
    %c0_i32_1 = arith.constant 0 : i32
    %c0_i32_2 = arith.constant 0 : i32
    return %c0_i32, %c0_i32_0, %c0_i32_1 : i32, i32, i32
  }
  func.func @transform_7(%arg0: i32) -> (i32, i32) {
    %c0_i32 = arith.constant 0 : i32
    %c0_i32_0 = arith.constant 0 : i32
    %c0_i32_1 = arith.constant 0 : i32
    return %c0_i32, %c0_i32_0 : i32, i32
  }
  func.func @transform_8(%arg0: i32) -> (i32, i32, i32) {
    %c0_i32 = arith.constant 0 : i32
    %c0_i32_0 = arith.constant 0 : i32
    %c0_i32_1 = arith.constant 0 : i32
    %c0_i32_2 = arith.constant 0 : i32
    return %c0_i32, %c0_i32_0, %c0_i32_1 : i32, i32, i32
  }
  func.func @transform_9(%arg0: i32) -> (i32, i32) {
    %c0_i32 = arith.constant 0 : i32
    %c0_i32_0 = arith.constant 0 : i32
    %c0_i32_1 = arith.constant 0 : i32
    return %c0_i32, %c0_i32_0 : i32, i32
  }
  func.func @transform_10(%arg0: i32) -> (i32, i32) {
    %c0_i32 = arith.constant 0 : i32
    %c0_i32_0 = arith.constant 0 : i32
    %c0_i32_1 = arith.constant 0 : i32
    return %c0_i32, %c0_i32_0 : i32, i32
  }
  func.func @transform_11(%arg0: i32) -> (i32, i32) {
    %c0_i32 = arith.constant 0 : i32
    %c0_i32_0 = arith.constant 0 : i32
    %c0_i32_1 = arith.constant 0 : i32
    return %c0_i32, %c0_i32_0 : i32, i32
  }
  func.func @transform_12(%arg0: i32) -> (i32, i32, i32) {
    %c0_i32 = arith.constant 0 : i32
    %c0_i32_0 = arith.constant 0 : i32
    %c0_i32_1 = arith.constant 0 : i32
    return %arg0, %c0_i32, %c0_i32_0 : i32, i32, i32
  }
}

</mosaic_0001>

<llo_original>
// kernel: boundary_head_forward.1
$region0: #{boundary_head_forward.1}
  #allocation0 [shape = 'u32[]', space=smem, size = 0x4, offset = 0x4, fixed_abs, tag = 'smem constant byte address 0x4 - core index']
  #allocation1 [shape = 'u32[144,128]{1,0:T(1,128)}', space=vmem, size = 0x12000, scoped, tag = 'internal scratch']
  #allocation2 [shape = 'f32[1,1]{1,0:T(1,128)S(1)}', space=vmem, size = 0x200, scoped, tag = 'scoped memory for boundary_head_forward.1']
  %s0 = inlined_call_operand.vmem [shape: f32[2,8,256], index: 0, kind: input, shape index: {}]
  %s1 = inlined_call_operand.vmem [shape: f32[8,256], index: 1, kind: input, shape index: {}]
  %s2 = inlined_call_operand.vmem [shape: bf16[9,32,8], index: 2, kind: input, shape index: {}]
  %s3 = inlined_call_operand.vmem [shape: f32[32,1], index: 3, kind: input, shape index: {}]
  %s4 = inlined_call_operand.vmem [shape: bf16[9,32,32], index: 4, kind: input, shape index: {}]
  %s5 = inlined_call_operand.vmem [shape: f32[32,1], index: 5, kind: input, shape index: {}]
  %s6 = inlined_call_operand.vmem [shape: bf16[9,32,32], index: 6, kind: input, shape index: {}]
  %s7 = inlined_call_operand.vmem [shape: f32[32,1], index: 7, kind: input, shape index: {}]
  %s8 = inlined_call_operand.vmem [shape: bf16[9,8,32], index: 8, kind: input, shape index: {}]
  %s9 = inlined_call_operand.vmem [shape: f32[8,1], index: 9, kind: input, shape index: {}]
  %s10 = inlined_call_operand.vmem [shape: f32[8,1], index: 10, kind: input, shape index: {}]
  %s11 = inlined_call_operand.<no memory space> [shape: f32[1,1], index: 11, kind: input, shape index: {}]
  %s12 = inlined_call_operand.vmem [shape: f32[2,1,256], index: 12, kind: output, shape index: {}]
  %s13 = sld [smem:[#allocation0]]
  $region81: #{boundary_head_forward.1} parent=0
    _
  %s15 = ssub.s32 1, %s13
  %s16 = scalar_select 0, %s15, %s13
  %v17 = vstv %s11
  %18 = vst [vmem:[#allocation2] sm:$0x1] %v17
  loop: start=0, step=1, limit=4
  $region2: #{boundary_head_forward.1} parent=0 // loop_pre_header
    _
  $region3: #{boundary_head_forward.1} parent=0 // loop_header
    %s20 = sphi 0, %s24
    %p21 = scmp.ge.s32.totalorder %s20, 4
    %s30 = sphi 0, %s32
    %s33 = sphi 0, %s30
    %s34 = sphi 0, %s33
    %s50 = sphi 0, %s34
    %s54 = sphi 0, %s54
    %s56 = sphi 0, %s54
    %s57 = sphi 0, %s56
    %s71 = sphi 0, %s57
    %s75 = sphi 0, %s75
    %s77 = sphi 0, %s75
    %s78 = sphi 0, %s77
    %s92 = sphi 0, %s78
    %s96 = sphi 0, %s96
    %s98 = sphi 0, %s96
    %s99 = sphi 0, %s98
    %s113 = sphi 0, %s99
    %s117 = sphi 0, %s117
    %s119 = sphi 0, %s117
    %s120 = sphi 0, %s119
    %s134 = sphi 0, %s120
    %s138 = sphi 0, %s138
    %s140 = sphi 0, %s138
    %s141 = sphi 0, %s140
    %s155 = sphi 0, %s141
    %s159 = sphi 0, %s159
    %s161 = sphi 0, %s159
    %s162 = sphi 0, %s161
    %s176 = sphi 0, %s162
    %s180 = sphi 0, %s180
    %s182 = sphi 0, %s180
    %s183 = sphi 0, %s182
    %s197 = sphi 0, %s183
    %s201 = sphi 0, %s201
    %s203 = sphi 0, %s201
    %s204 = sphi 0, %s203
    %s218 = sphi 0, %s204
    %s222 = sphi 0, %s222
    %s224 = sphi 0, %s222
    %s225 = sphi 0, %s224
    %s239 = sphi 0, %s225
    %s243 = sphi 0, %s243
    %s245 = sphi 0, %s243
    %s246 = sphi 0, %s245
    %s260 = sphi 0, %s246
    %s264 = sphi 0, %s264
    %s266 = sphi 0, %s264
    %s267 = sphi 0, %s266
    %s281 = sphi 0, %s267
    %s287 = sphi 0, %s289
    %s290 = sphi 0, %s287
    %s291 = sphi 0, %s290
    %s307 = sphi 0, %s291
  $region4: #{boundary_head_forward.1} parent=0 // loop_header_branch
    %23 = sbr.rel (%p21) target = $region8
  $region5: #{boundary_head_forward.1} parent=0 // loop_body
    %s25 = ssub.s32 %s20, 1
    %s26 = ssub.s32 %s20, 2
    %s27 = sadd.s32 %s20, 1
    %s28 = ssub.s32 %s20, %s27
    %p29 = scmp.eq.s32.totalorder %s28, 0
    %s31 = sadd.s32 %s30, 1
    %s32 = scalar_select %p29, %s30, %s31
    %p35 = pneg %p29
    %p36 = scmp.eq.s32.totalorder %s20, 1
    %p37 = por %p35, %p36
    %p38 = scmp.ne.s32.totalorder %s30, %s33
    %p39 = scmp.eq.s32.totalorder %s20, 0
    %p40 = por %p38, %p39
    %p41 = scmp.ne.s32.totalorder %s30, %s33
    %p42 = scmp.eq.s32.totalorder %s25, 1
    %p43 = por %p41, %p42
    %p44 = scmp.ne.s32.totalorder %s33, %s34
    %p45 = scmp.eq.s32.totalorder %s25, 0
    %p46 = por %p44, %p45
    %p47 = scmp.ne.s32.totalorder %s33, %s34
    %p48 = scmp.eq.s32.totalorder %s26, 1
    %p49 = por %p47, %p48
    %p51 = scmp.ne.s32.totalorder %s34, %s50
    %p52 = scmp.eq.s32.totalorder %s26, 0
    %p53 = por %p51, %p52
    %s55 = sadd.s32 %s54, 1
    %p58 = scmp.eq.s32.totalorder %s20, 1
    %p59 = scmp.ne.s32.totalorder %s54, %s56
    %p60 = scmp.eq.s32.totalorder %s20, 0
    %p61 = por %p59, %p60
    %p62 = scmp.ne.s32.totalorder %s54, %s56
    %p63 = scmp.eq.s32.totalorder %s25, 1
    %p64 = por %p62, %p63
    %p65 = scmp.ne.s32.totalorder %s56, %s57
    %p66 = scmp.eq.s32.totalorder %s25, 0
    %p67 = por %p65, %p66
    %p68 = scmp.ne.s32.totalorder %s56, %s57
    %p69 = scmp.eq.s32.totalorder %s26, 1
    %p70 = por %p68, %p69
    %p72 = scmp.ne.s32.totalorder %s57, %s71
    %p73 = scmp.eq.s32.totalorder %s26, 0
    %p74 = por %p72, %p73
    %s76 = sadd.s32 %s75, 1
    %p79 = scmp.eq.s32.totalorder %s20, 1
    %p80 = scmp.ne.s32.totalorder %s75, %s77
    %p81 = scmp.eq.s32.totalorder %s20, 0
    %p82 = por %p80, %p81
    %p83 = scmp.ne.s32.totalorder %s75, %s77
    %p84 = scmp.eq.s32.totalorder %s25, 1
    %p85 = por %p83, %p84
    %p86 = scmp.ne.s32.totalorder %s77, %s78
    %p87 = scmp.eq.s32.totalorder %s25, 0
    %p88 = por %p86, %p87
    %p89 = scmp.ne.s32.totalorder %s77, %s78
    %p90 = scmp.eq.s32.totalorder %s26, 1
    %p91 = por %p89, %p90
    %p93 = scmp.ne.s32.totalorder %s78, %s92
    %p94 = scmp.eq.s32.totalorder %s26, 0
    %p95 = por %p93, %p94
    %s97 = sadd.s32 %s96, 1
    %p100 = scmp.eq.s32.totalorder %s20, 1
    %p101 = scmp.ne.s32.totalorder %s96, %s98
    %p102 = scmp.eq.s32.totalorder %s20, 0
    %p103 = por %p101, %p102
    %p104 = scmp.ne.s32.totalorder %s96, %s98
    %p105 = scmp.eq.s32.totalorder %s25, 1
    %p106 = por %p104, %p105
    %p107 = scmp.ne.s32.totalorder %s98, %s99
    %p108 = scmp.eq.s32.totalorder %s25, 0
    %p109 = por %p107, %p108
    %p110 = scmp.ne.s32.totalorder %s98, %s99
    %p111 = scmp.eq.s32.totalorder %s26, 1
    %p112 = por %p110, %p111
    %p114 = scmp.ne.s32.totalorder %s99, %s113
    %p115 = scmp.eq.s32.totalorder %s26, 0
    %p116 = por %p114, %p115
    %s118 = sadd.s32 %s117, 1
    %p121 = scmp.eq.s32.totalorder %s20, 1
    %p122 = scmp.ne.s32.totalorder %s117, %s119
    %p123 = scmp.eq.s32.totalorder %s20, 0
    %p124 = por %p122, %p123
    %p125 = scmp.ne.s32.totalorder %s117, %s119
    %p126 = scmp.eq.s32.totalorder %s25, 1
    %p127 = por %p125, %p126
    %p128 = scmp.ne.s32.totalorder %s119, %s120
    %p129 = scmp.eq.s32.totalorder %s25, 0
    %p130 = por %p128, %p129
    %p131 = scmp.ne.s32.totalorder %s119, %s120
    %p132 = scmp.eq.s32.totalorder %s26, 1
    %p133 = por %p131, %p132
    %p135 = scmp.ne.s32.totalorder %s120, %s134
    %p136 = scmp.eq.s32.totalorder %s26, 0
    %p137 = por %p135, %p136
    %s139 = sadd.s32 %s138, 1
    %p142 = scmp.eq.s32.totalorder %s20, 1
    %p143 = scmp.ne.s32.totalorder %s138, %s140
    %p144 = scmp.eq.s32.totalorder %s20, 0
    %p145 = por %p143, %p144
    %p146 = scmp.ne.s32.totalorder %s138, %s140
    %p147 = scmp.eq.s32.totalorder %s25, 1
    %p148 = por %p146, %p147
    %p149 = scmp.ne.s32.totalorder %s140, %s141
    %p150 = scmp.eq.s32.totalorder %s25, 0
    %p151 = por %p149, %p150
    %p152 = scmp.ne.s32.totalorder %s140, %s141
    %p153 = scmp.eq.s32.totalorder %s26, 1
    %p154 = por %p152, %p153
    %p156 = scmp.ne.s32.totalorder %s141, %s155
    %p157 = scmp.eq.s32.totalorder %s26, 0
    %p158 = por %p156, %p157
    %s160 = sadd.s32 %s159, 1
    %p163 = scmp.eq.s32.totalorder %s20, 1
    %p164 = scmp.ne.s32.totalorder %s159, %s161
    %p165 = scmp.eq.s32.totalorder %s20, 0
    %p166 = por %p164, %p165
    %p167 = scmp.ne.s32.totalorder %s159, %s161
    %p168 = scmp.eq.s32.totalorder %s25, 1
    %p169 = por %p167, %p168
    %p170 = scmp.ne.s32.totalorder %s161, %s162
    %p171 = scmp.eq.s32.totalorder %s25, 0
    %p172 = por %p170, %p171
    %p173 = scmp.ne.s32.totalorder %s161, %s162
    %p174 = scmp.eq.s32.totalorder %s26, 1
    %p175 = por %p173, %p174
    %p177 = scmp.ne.s32.totalorder %s162, %s176
    %p178 = scmp.eq.s32.totalorder %s26, 0
    %p179 = por %p177, %p178
    %s181 = sadd.s32 %s180, 1
    %p184 = scmp.eq.s32.totalorder %s20, 1
    %p185 = scmp.ne.s32.totalorder %s180, %s182
    %p186 = scmp.eq.s32.totalorder %s20, 0
    %p187 = por %p185, %p186
    %p188 = scmp.ne.s32.totalorder %s180, %s182
    %p189 = scmp.eq.s32.totalorder %s25, 1
    %p190 = por %p188, %p189
    %p191 = scmp.ne.s32.totalorder %s182, %s183
    %p192 = scmp.eq.s32.totalorder %s25, 0
    %p193 = por %p191, %p192
    %p194 = scmp.ne.s32.totalorder %s182, %s183
    %p195 = scmp.eq.s32.totalorder %s26, 1
    %p196 = por %p194, %p195
    %p198 = scmp.ne.s32.totalorder %s183, %s197
    %p199 = scmp.eq.s32.totalorder %s26, 0
    %p200 = por %p198, %p199
    %s202 = sadd.s32 %s201, 1
    %p205 = scmp.eq.s32.totalorder %s20, 1
    %p206 = scmp.ne.s32.totalorder %s201, %s203
    %p207 = scmp.eq.s32.totalorder %s20, 0
    %p208 = por %p206, %p207
    %p209 = scmp.ne.s32.totalorder %s201, %s203
    %p210 = scmp.eq.s32.totalorder %s25, 1
    %p211 = por %p209, %p210
    %p212 = scmp.ne.s32.totalorder %s203, %s204
    %p213 = scmp.eq.s32.totalorder %s25, 0
    %p214 = por %p212, %p213
    %p215 = scmp.ne.s32.totalorder %s203, %s204
    %p216 = scmp.eq.s32.totalorder %s26, 1
    %p217 = por %p215, %p216
    %p219 = scmp.ne.s32.totalorder %s204, %s218
    %p220 = scmp.eq.s32.totalorder %s26, 0
    %p221 = por %p219, %p220
    %s223 = sadd.s32 %s222, 1
    %p226 = scmp.eq.s32.totalorder %s20, 1
    %p227 = scmp.ne.s32.totalorder %s222, %s224
    %p228 = scmp.eq.s32.totalorder %s20, 0
    %p229 = por %p227, %p228
    %p230 = scmp.ne.s32.totalorder %s222, %s224
    %p231 = scmp.eq.s32.totalorder %s25, 1
    %p232 = por %p230, %p231
    %p233 = scmp.ne.s32.totalorder %s224, %s225
    %p234 = scmp.eq.s32.totalorder %s25, 0
    %p235 = por %p233, %p234
    %p236 = scmp.ne.s32.totalorder %s224, %s225
    %p237 = scmp.eq.s32.totalorder %s26, 1
    %p238 = por %p236, %p237
    %p240 = scmp.ne.s32.totalorder %s225, %s239
    %p241 = scmp.eq.s32.totalorder %s26, 0
    %p242 = por %p240, %p241
    %s244 = sadd.s32 %s243, 1
    %p247 = scmp.eq.s32.totalorder %s20, 1
    %p248 = scmp.ne.s32.totalorder %s243, %s245
    %p249 = scmp.eq.s32.totalorder %s20, 0
    %p250 = por %p248, %p249
    %p251 = scmp.ne.s32.totalorder %s243, %s245
    %p252 = scmp.eq.s32.totalorder %s25, 1
    %p253 = por %p251, %p252
    %p254 = scmp.ne.s32.totalorder %s245, %s246
    %p255 = scmp.eq.s32.totalorder %s25, 0
    %p256 = por %p254, %p255
    %p257 = scmp.ne.s32.totalorder %s245, %s246
    %p258 = scmp.eq.s32.totalorder %s26, 1
    %p259 = por %p257, %p258
    %p261 = scmp.ne.s32.totalorder %s246, %s260
    %p262 = scmp.eq.s32.totalorder %s26, 0
    %p263 = por %p261, %p262
    %s265 = sadd.s32 %s264, 1
    %p268 = scmp.eq.s32.totalorder %s20, 1
    %p269 = scmp.ne.s32.totalorder %s264, %s266
    %p270 = scmp.eq.s32.totalorder %s20, 0
    %p271 = por %p269, %p270
    %p272 = scmp.ne.s32.totalorder %s264, %s266
    %p273 = scmp.eq.s32.totalorder %s25, 1
    %p274 = por %p272, %p273
    %p275 = scmp.ne.s32.totalorder %s266, %s267
    %p276 = scmp.eq.s32.totalorder %s25, 0
    %p277 = por %p275, %p276
    %p278 = scmp.ne.s32.totalorder %s266, %s267
    %p279 = scmp.eq.s32.totalorder %s26, 1
    %p280 = por %p278, %p279
    %p282 = scmp.ne.s32.totalorder %s267, %s281
    %p283 = scmp.eq.s32.totalorder %s26, 0
    %p284 = por %p282, %p283
    %s285 = ssub.s32 %s20, %s27
    %p286 = scmp.eq.s32.totalorder %s285, 0
    %s288 = sadd.s32 %s287, 1
    %s289 = scalar_select %p286, %s287, %s288
    %p292 = pneg %p286
    %p293 = scmp.eq.s32.totalorder %s20, 1
    %p294 = por %p292, %p293
    %p295 = scmp.ne.s32.totalorder %s287, %s290
    %p296 = scmp.eq.s32.totalorder %s20, 0
    %p297 = por %p295, %p296
    %p298 = scmp.ne.s32.totalorder %s287, %s290
    %p299 = scmp.eq.s32.totalorder %s25, 1
    %p300 = por %p298, %p299
    %p301 = scmp.ne.s32.totalorder %s290, %s291
    %p302 = scmp.eq.s32.totalorder %s25, 0
    %p303 = por %p301, %p302
    %p304 = scmp.ne.s32.totalorder %s290, %s291
    %p305 = scmp.eq.s32.totalorder %s26, 1
    %p306 = por %p304, %p305
    %p308 = scmp.ne.s32.totalorder %s291, %s307
    %p309 = scmp.eq.s32.totalorder %s26, 0
    %p310 = por %p308, %p309
    %p311 = scmp.le.s32.totalorder 1, %s20
    %p312 = scmp.lt.s32.totalorder %s20, 3
    %p313 = pnand %p311, %p312
    %p314 = pneg %p313
    // Predicated region
    $region9: #{boundary_head_forward.1} parent=5 // pred_check
      _
    $region10: #{boundary_head_forward.1} parent=5 // pred_check_branch
      %316 = sbr.rel (%p313) target = $region12
    $region11: #{boundary_head_forward.1} parent=5 // pred_region
      %s317 = ssub.s32 %s20, 1
      // Predicated region
      $region13: #{boundary_head_forward.1} parent=11 // pred_check
        %p318 = pneg %p67
      $region14: #{boundary_head_forward.1} parent=11 // pred_check_branch
        %320 = sbr.rel (%p318) target = $region16
      $region15: #{boundary_head_forward.1} parent=11 // pred_region
        _
      $region16: #{boundary_head_forward.1} parent=11 // pred_fallthru
        _
      // Predicated region
      $region17: #{boundary_head_forward.1} parent=11 // pred_check
        %p321 = pneg %p88
      $region18: #{boundary_head_forward.1} parent=11 // pred_check_branch
        %323 = sbr.rel (%p321) target = $region20
      $region19: #{boundary_head_forward.1} parent=11 // pred_region
        _
      $region20: #{boundary_head_forward.1} parent=11 // pred_fallthru
        _
      // Predicated region
      $region21: #{boundary_head_forward.1} parent=11 // pred_check
        %p324 = pneg %p109
      $region22: #{boundary_head_forward.1} parent=11 // pred_check_branch
        %326 = sbr.rel (%p324) target = $region24
      $region23: #{boundary_head_forward.1} parent=11 // pred_region
        _
      $region24: #{boundary_head_forward.1} parent=11 // pred_fallthru
        _
      // Predicated region
      $region25: #{boundary_head_forward.1} parent=11 // pred_check
        %p327 = pneg %p130
      $region26: #{boundary_head_forward.1} parent=11 // pred_check_branch
        %329 = sbr.rel (%p327) target = $region28
      $region27: #{boundary_head_forward.1} parent=11 // pred_region
        _
      $region28: #{boundary_head_forward.1} parent=11 // pred_fallthru
        _
      // Predicated region
      $region29: #{boundary_head_forward.1} parent=11 // pred_check
        %p330 = pneg %p151
      $region30: #{boundary_head_forward.1} parent=11 // pred_check_branch
        %332 = sbr.rel (%p330) target = $region32
      $region31: #{boundary_head_forward.1} parent=11 // pred_region
        _
      $region32: #{boundary_head_forward.1} parent=11 // pred_fallthru
        _
      // Predicated region
      $region33: #{boundary_head_forward.1} parent=11 // pred_check
        %p333 = pneg %p172
      $region34: #{boundary_head_forward.1} parent=11 // pred_check_branch
        %335 = sbr.rel (%p333) target = $region36
      $region35: #{boundary_head_forward.1} parent=11 // pred_region
        _
      $region36: #{boundary_head_forward.1} parent=11 // pred_fallthru
        _
      // Predicated region
      $region37: #{boundary_head_forward.1} parent=11 // pred_check
        %p336 = pneg %p193
      $region38: #{boundary_head_forward.1} parent=11 // pred_check_branch
        %338 = sbr.rel (%p336) target = $region40
      $region39: #{boundary_head_forward.1} parent=11 // pred_region
        _
      $region40: #{boundary_head_forward.1} parent=11 // pred_fallthru
        _
      // Predicated region
      $region41: #{boundary_head_forward.1} parent=11 // pred_check
        %p339 = pneg %p214
      $region42: #{boundary_head_forward.1} parent=11 // pred_check_branch
        %341 = sbr.rel (%p339) target = $region44
      $region43: #{boundary_head_forward.1} parent=11 // pred_region
        _
      $region44: #{boundary_head_forward.1} parent=11 // pred_fallthru
        _
      // Predicated region
      $region45: #{boundary_head_forward.1} parent=11 // pred_check
        %p342 = pneg %p235
      $region46: #{boundary_head_forward.1} parent=11 // pred_check_branch
        %344 = sbr.rel (%p342) target = $region48
      $region47: #{boundary_head_forward.1} parent=11 // pred_region
        _
      $region48: #{boundary_head_forward.1} parent=11 // pred_fallthru
        _
      // Predicated region
      $region49: #{boundary_head_forward.1} parent=11 // pred_check
        %p345 = pneg %p256
      $region50: #{boundary_head_forward.1} parent=11 // pred_check_branch
        %347 = sbr.rel (%p345) target = $region52
      $region51: #{boundary_head_forward.1} parent=11 // pred_region
        _
      $region52: #{boundary_head_forward.1} parent=11 // pred_fallthru
        _
      // Predicated region
      $region53: #{boundary_head_forward.1} parent=11 // pred_check
        %p348 = pneg %p277
      $region54: #{boundary_head_forward.1} parent=11 // pred_check_branch
        %350 = sbr.rel (%p348) target = $region56
      $region55: #{boundary_head_forward.1} parent=11 // pred_region
        _
      $region56: #{boundary_head_forward.1} parent=11 // pred_fallthru
        _
    $region12: #{boundary_head_forward.1} parent=5 // pred_fallthru
      _
    %p351 = scmp.lt.s32.totalorder %s20, 2
    // Predicated region
    $region57: #{boundary_head_forward.1} parent=5 // pred_check
      %p352 = pneg %p351
    $region58: #{boundary_head_forward.1} parent=5 // pred_check_branch
      %354 = sbr.rel (%p352) target = $region60
    $region59: #{boundary_head_forward.1} parent=5 // pred_region
      // Predicated region
      $region61: #{boundary_head_forward.1} parent=59 // pred_check
        %p355 = pneg %p40
      $region62: #{boundary_head_forward.1} parent=59 // pred_check_branch
        %357 = sbr.rel (%p355) target = $region64
      $region63: #{boundary_head_forward.1} parent=59 // pred_region
        %p358 = scmp.lt.s32.totalorder %s20, 1
        %s359 = scalar_select %p358, %s20, 1
        %s360 = smul.addr %s359, 2
        %s361 = smul.addr %s360, 8
        %s362 = scalar_lea.vmem %s0, %s361
      $region64: #{boundary_head_forward.1} parent=59 // pred_fallthru
        _
    $region60: #{boundary_head_forward.1} parent=5 // pred_fallthru
      _
    %p363 = scmp.le.s32.totalorder 1, %s20
    %p364 = scmp.lt.s32.totalorder %s20, 3
    %p365 = pnand %p363, %p364
    %p366 = pneg %p365
    // Predicated region
    $region65: #{boundary_head_forward.1} parent=5 // pred_check
      _
    $region66: #{boundary_head_forward.1} parent=5 // pred_check_branch
      %368 = sbr.rel (%p365) target = $region68
    $region67: #{boundary_head_forward.1} parent=5 // pred_region
      %s369 = ssub.s32 %s20, 1
      %p370 = scmp.lt.s32.totalorder %s25, 1
      %s371 = scalar_select %p370, %s25, 1
      %s372 = smul.addr %s371, 2
      %s373 = smul.addr %s372, 8
      %s374 = scalar_lea.vmem %s0, %s373
      %p375 = pneg %p46
      %p376 = pneg %p43
      %p377 = pneg %p67
      %p378 = pneg %p64
      %p379 = pneg %p88
      %p380 = pneg %p85
      %p381 = pneg %p109
      %p382 = pneg %p106
      %p383 = pneg %p130
      %p384 = pneg %p127
      %p385 = pneg %p151
      %p386 = pneg %p148
      %p387 = pneg %p172
      %p388 = pneg %p169
      %p389 = pneg %p193
      %p390 = pneg %p190
      %p391 = pneg %p214
      %p392 = pneg %p211
      %p393 = pneg %p235
      %p394 = pneg %p232
      %p395 = pneg %p256
      %p396 = pneg %p253
      %p397 = pneg %p277
      %p398 = pneg %p274
      %p399 = pneg %p303
      %p400 = pneg %p300
      %p401 = scmp.lt.s32.totalorder %s25, 1
      %s402 = scalar_select %p401, %s25, 1
      %s403 = smul.addr %s402, 2
      %s404 = scalar_lea.vmem %s12, %s403
      %p405 = scmp.lt.s32.totalorder %s25, 1
      %s406 = scalar_select %p405, %s25, 1
      %s407 = smul.addr %s406, 2
      %s408 = smul.addr %s407, 8
      %s409 = scalar_lea.vmem %s0, %s408
      %p410 = scmp.lt.s32.totalorder %s25, 1
      %s411 = scalar_select %p410, %s25, 1
      %s412 = smul.addr %s411, 2
      %s413 = scalar_lea.vmem %s12, %s412
      %v415 = vld [vmem:[%s409] sm:$0xff]
      %v416 = vld [vmem:[%s409 + $0x8] sm:$0xff]
      %417 = vrot.lane.b32.xlu0 %v415, 17
      %v418 = vpop.permute.xlu0 %417
      %419 = vrot.lane.b32.xlu0 %v416, 17
      %v420 = vpop.permute.xlu0 %419
      %v421 = vlaneseq
      %v422 = vand.u32 %v421, 127
      %vm423 = vcmp.lt.s32.totalorder %v422, 17
      %v424 = vsel %vm423, %v418, %v420
      %v425 = vsel %vm423, %v420, %v418
      %v426 = vld [vmem:[%s1] ss:$8 sm:$0x3]
      %v428 = vlaneseq
      %v429 = vshrl.u32 %v428, 7
      %v430 = vsub.s32 0, %v429
      %v431 = vrot.slane %v426, %v430
      %v432 = vlaneseq
      %v433 = vshrl.u32 %v432, 7
      %v434 = vsub.s32 1, %v433
      %v435 = vrot.slane %v426, %v434
      %v438 = vmul.f32 %v425, %v431
      %v439 = vmul.f32 %v424, %v435
      %v440 = vld [vmem:[%s2] sm:$0xf]
      %v441 = vld [vmem:[%s2 + $0x4] sm:$0xf]
      %v442 = vld [vmem:[%s2 + $0x8] sm:$0xf]
      %v443 = vld [vmem:[%s2 + $0xc] sm:$0xf]
      %v444 = vpack.c.bf16 %v438, %v438
      %v445 = vpack.c.bf16 %v439, %v439
      %446 = vrot.lane.b32.xlu0 %v415, 16
      %v447 = vpop.permute.xlu0 %446
      %448 = vrot.lane.b32.xlu0 %v416, 16
      %v449 = vpop.permute.xlu0 %448
      %vm450 = vcmp.lt.s32.totalorder %v422, 16
      %v451 = vsel %vm450, %v447, %v449
      %v452 = vsel %vm450, %v449, %v447
      %s453 = scalar_lea.vmem %s1, 1
      %v454 = vld [vmem:[%s453] ss:$8 sm:$0x3]
      %v456 = vlaneseq
      %v457 = vshrl.u32 %v456, 7
      %v458 = vsub.s32 0, %v457
      %v459 = vrot.slane %v454, %v458
      %v460 = vlaneseq
      %v461 = vshrl.u32 %v460, 7
      %v462 = vsub.s32 1, %v461
      %v463 = vrot.slane %v454, %v462
      %v466 = vmul.f32 %v452, %v459
      %v467 = vmul.f32 %v451, %v463
      %s468 = scalar_lea.vmem %s2, 16
      %v469 = vld [vmem:[%s468] sm:$0xf]
      %v470 = vld [vmem:[%s468 + $0x4] sm:$0xf]
      %v471 = vld [vmem:[%s468 + $0x8] sm:$0xf]
      %v472 = vld [vmem:[%s468 + $0xc] sm:$0xf]
      %v473 = vpack.c.bf16 %v466, %v466
      %v474 = vpack.c.bf16 %v467, %v467
      %v479 = vunpack.c.l.b16 %v469
      %v480 = vunpack.c.l.b16 %v470
      %v481 = vunpack.c.l.b16 %v471
      %v482 = vunpack.c.l.b16 %v472
      %v483 = vpack.c.b16 %v480, %v479
      %v484 = vpack.c.b16 %v482, %v481
      %vm485 = vcmask 64512
      %v487 = vsel %vm485, %v483, 0
      %v490 = vsel %vm485, %v484, 0
      %vm492 = vcmask 1043456
      %v494 = vsel %vm492, %v473, 0
      %v497 = vsel %vm492, %v474, 0
      %499 = vmatprep.subr.bf16.mxu0 %v497
      %500 = vmatpush1.bf16.msra.mxu0 %v494
      %501 = vmatprep.subr.bf16.mxu0 0
      %502 = vmatpush1.bf16.msra.mxu0 0
      %503 = vmatprep.subr.bf16.mxu0 0
      %504 = vmatpush1.bf16.msra.mxu0 0
      %505 = vmatprep.subr.bf16.mxu0 0
      %506 = vmatpush1.bf16.msra.mxu0 0
      %507 = vmatprep.subr.bf16.mxu0 0
      %508 = vmatpush1.bf16.msra.mxu0 0
      %509 = vmatprep.subr.bf16.mxu0 0
      %510 = vmatpush1.bf16.msra.mxu0 0
      %511 = vmatprep.subr.bf16.mxu0 0
      %512 = vmatpush1.bf16.msra.mxu0 0
      %513 = vmatprep.subr.bf16.mxu0 0
      %514 = vmatpush1.bf16.msra.mxu0 0
      %515 = vmatprep.subr.bf16.mxu0 0
      %516 = vmatpush1.bf16.msra.mxu0 0
      %517 = vmatprep.subr.bf16.mxu0 0
      %518 = vmatpush1.bf16.msra.mxu0 0
      %519 = vmatprep.subr.bf16.mxu0 0
      %520 = vmatpush1.bf16.msra.mxu0 0
      %521 = vmatprep.subr.bf16.mxu0 0
      %522 = vmatpush1.bf16.msra.mxu0 0
      %523 = vmatprep.subr.bf16.mxu0 0
      %524 = vmatpush1.bf16.msra.mxu0 0
      %525 = vmatprep.subr.bf16.mxu0 0
      %526 = vmatpush1.bf16.msra.mxu0 0
      %527 = vmatprep.subr.bf16.mxu0 0
      %528 = vmatpush1.bf16.msra.mxu0 0
      %529 = vmatprep.subr.bf16.mxu0 0
      %530 = vmatpush1.bf16.msra.mxu0 0
      %531 = vmatprep.mubr.bf16.mxu0 0
      %532 = vmatmul.mubr.bf16.gmra.mrb[0].mxu0 %v487
      %v533 = vpop.f32.mrb[0].mxu0
      %v534 = vadd.f32 0.0, %v533
      %v535 = vpop.f32.mrb[0].mxu0
      %v536 = vadd.f32 0.0, %v535
      %v537 = vpop.f32.mrb[0].mxu0
      %v538 = vadd.f32 0.0, %v537
      %v539 = vpop.f32.mrb[0].mxu0
      %v540 = vadd.f32 0.0, %v539
      %541 = vmatprep.mubr.bf16.mxu0 0
      %542 = vmatmul.mubr.bf16.gmra.mrb[0].mxu0 %v490
      %v543 = vpop.f32.mrb[0].mxu0
      %v544 = vadd.f32 0.0, %v543
      %v545 = vpop.f32.mrb[0].mxu0
      %v546 = vadd.f32 0.0, %v545
      %v547 = vpop.f32.mrb[0].mxu0
      %v548 = vadd.f32 0.0, %v547
      %v549 = vpop.f32.mrb[0].mxu0
      %v550 = vadd.f32 0.0, %v549
      %551 = vdwg.mxu0
      %v556 = vunpack.c.l.b16 %v440
      %v557 = vunpack.c.l.b16 %v441
      %v558 = vunpack.c.l.b16 %v442
      %v559 = vunpack.c.l.b16 %v443
      %v560 = vpack.c.b16 %v557, %v556
      %v561 = vpack.c.b16 %v559, %v558
      %v563 = vsel %vm485, %v560, 0
      %v566 = vsel %vm485, %v561, 0
      %v569 = vsel %vm492, %v444, 0
      %v572 = vsel %vm492, %v445, 0
      %574 = vmatprep.subr.bf16.mxu0 %v572
      %575 = vmatpush1.bf16.msra.mxu0 %v569
      %576 = vmatprep.subr.bf16.mxu0 0
      %577 = vmatpush1.bf16.msra.mxu0 0
      %578 = vmatprep.subr.bf16.mxu0 0
      %579 = vmatpush1.bf16.msra.mxu0 0
      %580 = vmatprep.subr.bf16.mxu0 0
      %581 = vmatpush1.bf16.msra.mxu0 0
      %582 = vmatprep.subr.bf16.mxu0 0
      %583 = vmatpush1.bf16.msra.mxu0 0
      %584 = vmatprep.subr.bf16.mxu0 0
      %585 = vmatpush1.bf16.msra.mxu0 0
      %586 = vmatprep.subr.bf16.mxu0 0
      %587 = vmatpush1.bf16.msra.mxu0 0
      %588 = vmatprep.subr.bf16.mxu0 0
      %589 = vmatpush1.bf16.msra.mxu0 0
      %590 = vmatprep.subr.bf16.mxu0 0
      %591 = vmatpush1.bf16.msra.mxu0 0
      %592 = vmatprep.subr.bf16.mxu0 0
      %593 = vmatpush1.bf16.msra.mxu0 0
      %594 = vmatprep.subr.bf16.mxu0 0
      %595 = vmatpush1.bf16.msra.mxu0 0
      %596 = vmatprep.subr.bf16.mxu0 0
      %597 = vmatpush1.bf16.msra.mxu0 0
      %598 = vmatprep.subr.bf16.mxu0 0
      %599 = vmatpush1.bf16.msra.mxu0 0
      %600 = vmatprep.subr.bf16.mxu0 0
      %601 = vmatpush1.bf16.msra.mxu0 0
      %602 = vmatprep.subr.bf16.mxu0 0
      %603 = vmatpush1.bf16.msra.mxu0 0
      %604 = vmatprep.subr.bf16.mxu0 0
      %605 = vmatpush1.bf16.msra.mxu0 0
      %606 = vmatprep.mubr.bf16.mxu0 0
      %607 = vmatmul.mubr.bf16.gmra.mrb[0].mxu0 %v563
      %v608 = vpop.f32.mrb[0].mxu0
      %v609 = vadd.f32 %v534, %v608
      %v610 = vpop.f32.mrb[0].mxu0
      %v611 = vadd.f32 %v536, %v610
      %v612 = vpop.f32.mrb[0].mxu0
      %v613 = vadd.f32 %v538, %v612
      %v614 = vpop.f32.mrb[0].mxu0
      %v615 = vadd.f32 %v540, %v614
      %616 = vmatprep.mubr.bf16.mxu0 0
      %617 = vmatmul.mubr.bf16.gmra.mrb[0].mxu0 %v566
      %v618 = vpop.f32.mrb[0].mxu0
      %v619 = vadd.f32 %v544, %v618
      %v620 = vpop.f32.mrb[0].mxu0
      %v621 = vadd.f32 %v546, %v620
      %v622 = vpop.f32.mrb[0].mxu0
      %v623 = vadd.f32 %v548, %v622
      %v624 = vpop.f32.mrb[0].mxu0
      %v625 = vadd.f32 %v550, %v624
      %626 = vdwg.mxu0
      %627 = vrot.lane.b32.xlu0 %v415, 15
      %v628 = vpop.permute.xlu0 %627
      %629 = vrot.lane.b32.xlu0 %v416, 15
      %v630 = vpop.permute.xlu0 %629
      %vm631 = vcmp.lt.s32.totalorder %v422, 15
      %v632 = vsel %vm631, %v628, %v630
      %v633 = vsel %vm631, %v630, %v628
      %s634 = scalar_lea.vmem %s1, 2
      %v635 = vld [vmem:[%s634] ss:$8 sm:$0x3]
      %v637 = vlaneseq
      %v638 = vshrl.u32 %v637, 7
      %v639 = vsub.s32 0, %v638
      %v640 = vrot.slane %v635, %v639
      %v641 = vlaneseq
      %v642 = vshrl.u32 %v641, 7
      %v643 = vsub.s32 1, %v642
      %v644 = vrot.slane %v635, %v643
      %v647 = vmul.f32 %v633, %v640
      %v648 = vmul.f32 %v632, %v644
      %s649 = scalar_lea.vmem %s2, 32
      %v650 = vld [vmem:[%s649] sm:$0xf]
      %v651 = vld [vmem:[%s649 + $0x4] sm:$0xf]
      %v652 = vld [vmem:[%s649 + $0x8] sm:$0xf]
      %v653 = vld [vmem:[%s649 + $0xc] sm:$0xf]
      %v654 = vpack.c.bf16 %v647, %v647
      %v655 = vpack.c.bf16 %v648, %v648
      %v660 = vunpack.c.l.b16 %v650
      %v661 = vunpack.c.l.b16 %v651
      %v662 = vunpack.c.l.b16 %v652
      %v663 = vunpack.c.l.b16 %v653
      %v664 = vpack.c.b16 %v661, %v660
      %v665 = vpack.c.b16 %v663, %v662
      %v667 = vsel %vm485, %v664, 0
      %v670 = vsel %vm485, %v665, 0
      %v673 = vsel %vm492, %v654, 0
      %v676 = vsel %vm492, %v655, 0
      %678 = vmatprep.subr.bf16.mxu0 %v676
      %679 = vmatpush1.bf16.msra.mxu0 %v673
      %680 = vmatprep.subr.bf16.mxu0 0
      %681 = vmatpush1.bf16.msra.mxu0 0
      %682 = vmatprep.subr.bf16.mxu0 0
      %683 = vmatpush1.bf16.msra.mxu0 0
      %684 = vmatprep.subr.bf16.mxu0 0
      %685 = vmatpush1.bf16.msra.mxu0 0
      %686 = vmatprep.subr.bf16.mxu0 0
      %687 = vmatpush1.bf16.msra.mxu0 0
      %688 = vmatprep.subr.bf16.mxu0 0
      %689 = vmatpush1.bf16.msra.mxu0 0
      %690 = vmatprep.subr.bf16.mxu0 0
      %691 = vmatpush1.bf16.msra.mxu0 0
      %692 = vmatprep.subr.bf16.mxu0 0
      %693 = vmatpush1.bf16.msra.mxu0 0
      %694 = vmatprep.subr.bf16.mxu0 0
      %695 = vmatpush1.bf16.msra.mxu0 0
      %696 = vmatprep.subr.bf16.mxu0 0
      %697 = vmatpush1.bf16.msra.mxu0 0
      %698 = vmatprep.subr.bf16.mxu0 0
      %699 = vmatpush1.bf16.msra.mxu0 0
      %700 = vmatprep.subr.bf16.mxu0 0
      %701 = vmatpush1.bf16.msra.mxu0 0
      %702 = vmatprep.subr.bf16.mxu0 0
      %703 = vmatpush1.bf16.msra.mxu0 0
      %704 = vmatprep.subr.bf16.mxu0 0
      %705 = vmatpush1.bf16.msra.mxu0 0
      %706 = vmatprep.subr.bf16.mxu0 0
      %707 = vmatpush1.bf16.msra.mxu0 0
      %708 = vmatprep.subr.bf16.mxu0 0
      %709 = vmatpush1.bf16.msra.mxu0 0
      %710 = vmatprep.mubr.bf16.mxu0 0
      %711 = vmatmul.mubr.bf16.gmra.mrb[0].mxu0 %v667
      %v712 = vpop.f32.mrb[0].mxu0
      %v713 = vadd.f32 0.0, %v712
      %v714 = vpop.f32.mrb[0].mxu0
      %v715 = vadd.f32 0.0, %v714
      %v716 = vpop.f32.mrb[0].mxu0
      %v717 = vadd.f32 0.0, %v716
      %v718 = vpop.f32.mrb[0].mxu0
      %v719 = vadd.f32 0.0, %v718
      %720 = vmatprep.mubr.bf16.mxu0 0
      %721 = vmatmul.mubr.bf16.gmra.mrb[0].mxu0 %v670
      %v722 = vpop.f32.mrb[0].mxu0
      %v723 = vadd.f32 0.0, %v722
      %v724 = vpop.f32.mrb[0].mxu0
      %v725 = vadd.f32 0.0, %v724
      %v726 = vpop.f32.mrb[0].mxu0
      %v727 = vadd.f32 0.0, %v726
      %v728 = vpop.f32.mrb[0].mxu0
      %v729 = vadd.f32 0.0, %v728
      %730 = vdwg.mxu0
      %v731 = vadd.f32 %v609, %v713
      %v732 = vadd.f32 %v611, %v715
      %v733 = vadd.f32 %v613, %v717
      %v734 = vadd.f32 %v615, %v719
      %v735 = vadd.f32 %v619, %v723
      %v736 = vadd.f32 %v621, %v725
      %v737 = vadd.f32 %v623, %v727
      %v738 = vadd.f32 %v625, %v729
      %739 = vrot.lane.b32.xlu0 %v415, 1
      %v740 = vpop.permute.xlu0 %739
      %741 = vrot.lane.b32.xlu0 %v416, 1
      %v742 = vpop.permute.xlu0 %741
      %vm743 = vcmp.lt.s32.totalorder %v422, 1
      %v744 = vsel %vm743, %v740, %v742
      %v745 = vsel %vm743, %v742, %v740
      %s746 = scalar_lea.vmem %s1, 3
      %v747 = vld [vmem:[%s746] ss:$8 sm:$0x3]
      %v749 = vlaneseq
      %v750 = vshrl.u32 %v749, 7
      %v751 = vsub.s32 0, %v750
      %v752 = vrot.slane %v747, %v751
      %v753 = vlaneseq
      %v754 = vshrl.u32 %v753, 7
      %v755 = vsub.s32 1, %v754
      %v756 = vrot.slane %v747, %v755
      %v759 = vmul.f32 %v745, %v752
      %v760 = vmul.f32 %v744, %v756
      %s761 = scalar_lea.vmem %s2, 48
      %v762 = vld [vmem:[%s761] sm:$0xf]
      %v763 = vld [vmem:[%s761 + $0x4] sm:$0xf]
      %v764 = vld [vmem:[%s761 + $0x8] sm:$0xf]
      %v765 = vld [vmem:[%s761 + $0xc] sm:$0xf]
      %v766 = vpack.c.bf16 %v759, %v759
      %v767 = vpack.c.bf16 %v760, %v760
      %v772 = vunpack.c.l.b16 %v762
      %v773 = vunpack.c.l.b16 %v763
      %v774 = vunpack.c.l.b16 %v764
      %v775 = vunpack.c.l.b16 %v765
      %v776 = vpack.c.b16 %v773, %v772
      %v777 = vpack.c.b16 %v775, %v774
      %v779 = vsel %vm485, %v776, 0
      %v782 = vsel %vm485, %v777, 0
      %v785 = vsel %vm492, %v766, 0
      %v788 = vsel %vm492, %v767, 0
      %790 = vmatprep.subr.bf16.mxu0 %v788
      %791 = vmatpush1.bf16.msra.mxu0 %v785
      %792 = vmatprep.subr.bf16.mxu0 0
      %793 = vmatpush1.bf16.msra.mxu0 0
      %794 = vmatprep.subr.bf16.mxu0 0
      %795 = vmatpush1.bf16.msra.mxu0 0
      %796 = vmatprep.subr.bf16.mxu0 0
      %797 = vmatpush1.bf16.msra.mxu0 0
      %798 = vmatprep.subr.bf16.mxu0 0
      %799 = vmatpush1.bf16.msra.mxu0 0
      %800 = vmatprep.subr.bf16.mxu0 0
      %801 = vmatpush1.bf16.msra.mxu0 0
      %802 = vmatprep.subr.bf16.mxu0 0
      %803 = vmatpush1.bf16.msra.mxu0 0
      %804 = vmatprep.subr.bf16.mxu0 0
      %805 = vmatpush1.bf16.msra.mxu0 0
      %806 = vmatprep.subr.bf16.mxu0 0
      %807 = vmatpush1.bf16.msra.mxu0 0
      %808 = vmatprep.subr.bf16.mxu0 0
      %809 = vmatpush1.bf16.msra.mxu0 0
      %810 = vmatprep.subr.bf16.mxu0 0
      %811 = vmatpush1.bf16.msra.mxu0 0
      %812 = vmatprep.subr.bf16.mxu0 0
      %813 = vmatpush1.bf16.msra.mxu0 0
      %814 = vmatprep.subr.bf16.mxu0 0
      %815 = vmatpush1.bf16.msra.mxu0 0
      %816 = vmatprep.subr.bf16.mxu0 0
      %817 = vmatpush1.bf16.msra.mxu0 0
      %818 = vmatprep.subr.bf16.mxu0 0
      %819 = vmatpush1.bf16.msra.mxu0 0
      %820 = vmatprep.subr.bf16.mxu0 0
      %821 = vmatpush1.bf16.msra.mxu0 0
      %822 = vmatprep.mubr.bf16.mxu0 0
      %823 = vmatmul.mubr.bf16.gmra.mrb[0].mxu0 %v779
      %v824 = vpop.f32.mrb[0].mxu0
      %v825 = vadd.f32 0.0, %v824
      %v826 = vpop.f32.mrb[0].mxu0
      %v827 = vadd.f32 0.0, %v826
      %v828 = vpop.f32.mrb[0].mxu0
      %v829 = vadd.f32 0.0, %v828
      %v830 = vpop.f32.mrb[0].mxu0
      %v831 = vadd.f32 0.0, %v830
      %832 = vmatprep.mubr.bf16.mxu0 0
      %833 = vmatmul.mubr.bf16.gmra.mrb[0].mxu0 %v782
      %v834 = vpop.f32.mrb[0].mxu0
      %v835 = vadd.f32 0.0, %v834
      %v836 = vpop.f32.mrb[0].mxu0
      %v837 = vadd.f32 0.0, %v836
      %v838 = vpop.f32.mrb[0].mxu0
      %v839 = vadd.f32 0.0, %v838
      %v840 = vpop.f32.mrb[0].mxu0
      %v841 = vadd.f32 0.0, %v840
      %842 = vdwg.mxu0
      %v843 = vadd.f32 %v731, %v825
      %v844 = vadd.f32 %v732, %v827
      %v845 = vadd.f32 %v733, %v829
      %v846 = vadd.f32 %v734, %v831
      %v847 = vadd.f32 %v735, %v835
      %v848 = vadd.f32 %v736, %v837
      %v849 = vadd.f32 %v737, %v839
      %v850 = vadd.f32 %v738, %v841
      %s851 = scalar_lea.vmem %s2, 64
      %v852 = vld [vmem:[%s851] sm:$0xf]
      %v853 = vld [vmem:[%s851 + $0x4] sm:$0xf]
      %v854 = vld [vmem:[%s851 + $0x8] sm:$0xf]
      %v855 = vld [vmem:[%s851 + $0xc] sm:$0xf]
      %v856 = vpack.c.bf16 %v415, %v415
      %v857 = vpack.c.bf16 %v416, %v416
      %v862 = vunpack.c.l.b16 %v852
      %v863 = vunpack.c.l.b16 %v853
      %v864 = vunpack.c.l.b16 %v854
      %v865 = vunpack.c.l.b16 %v855
      %v866 = vpack.c.b16 %v863, %v862
      %v867 = vpack.c.b16 %v865, %v864
      %v869 = vsel %vm485, %v866, 0
      %v872 = vsel %vm485, %v867, 0
      %v875 = vsel %vm492, %v856, 0
      %v878 = vsel %vm492, %v857, 0
      %880 = vmatprep.subr.bf16.mxu0 %v878
      %881 = vmatpush1.bf16.msra.mxu0 %v875
      %882 = vmatprep.subr.bf16.mxu0 0
      %883 = vmatpush1.bf16.msra.mxu0 0
      %884 = vmatprep.subr.bf16.mxu0 0
      %885 = vmatpush1.bf16.msra.mxu0 0
      %886 = vmatprep.subr.bf16.mxu0 0
      %887 = vmatpush1.bf16.msra.mxu0 0
      %888 = vmatprep.subr.bf16.mxu0 0
      %889 = vmatpush1.bf16.msra.mxu0 0
      %890 = vmatprep.subr.bf16.mxu0 0
      %891 = vmatpush1.bf16.msra.mxu0 0
      %892 = vmatprep.subr.bf16.mxu0 0
      %893 = vmatpush1.bf16.msra.mxu0 0
      %894 = vmatprep.subr.bf16.mxu0 0
      %895 = vmatpush1.bf16.msra.mxu0 0
      %896 = vmatprep.subr.bf16.mxu0 0
      %897 = vmatpush1.bf16.msra.mxu0 0
      %898 = vmatprep.subr.bf16.mxu0 0
      %899 = vmatpush1.bf16.msra.mxu0 0
      %900 = vmatprep.subr.bf16.mxu0 0
      %901 = vmatpush1.bf16.msra.mxu0 0
      %902 = vmatprep.subr.bf16.mxu0 0
      %903 = vmatpush1.bf16.msra.mxu0 0
      %904 = vmatprep.subr.bf16.mxu0 0
      %905 = vmatpush1.bf16.msra.mxu0 0
      %906 = vmatprep.subr.bf16.mxu0 0
      %907 = vmatpush1.bf16.msra.mxu0 0
      %908 = vmatprep.subr.bf16.mxu0 0
      %909 = vmatpush1.bf16.msra.mxu0 0
      %910 = vmatprep.subr.bf16.mxu0 0
      %911 = vmatpush1.bf16.msra.mxu0 0
      %912 = vmatprep.mubr.bf16.mxu0 0
      %913 = vmatmul.mubr.bf16.gmra.mrb[0].mxu0 %v869
      %v914 = vpop.f32.mrb[0].mxu0
      %v915 = vadd.f32 0.0, %v914
      %v916 = vpop.f32.mrb[0].mxu0
      %v917 = vadd.f32 0.0, %v916
      %v918 = vpop.f32.mrb[0].mxu0
      %v919 = vadd.f32 0.0, %v918
      %v920 = vpop.f32.mrb[0].mxu0
      %v921 = vadd.f32 0.0, %v920
      %922 = vmatprep.mubr.bf16.mxu0 0
      %923 = vmatmul.mubr.bf16.gmra.mrb[0].mxu0 %v872
      %v924 = vpop.f32.mrb[0].mxu0
      %v925 = vadd.f32 0.0, %v924
      %v926 = vpop.f32.mrb[0].mxu0
      %v927 = vadd.f32 0.0, %v926
      %v928 = vpop.f32.mrb[0].mxu0
      %v929 = vadd.f32 0.0, %v928
      %v930 = vpop.f32.mrb[0].mxu0
      %v931 = vadd.f32 0.0, %v930
      %932 = vdwg.mxu0
      %v933 = vadd.f32 %v843, %v915
      %v934 = vadd.f32 %v844, %v917
      %v935 = vadd.f32 %v845, %v919
      %v936 = vadd.f32 %v846, %v921
      %v937 = vadd.f32 %v847, %v925
      %v938 = vadd.f32 %v848, %v927
      %v939 = vadd.f32 %v849, %v929
      %v940 = vadd.f32 %v850, %v931
      %941 = vrot.lane.b32.xlu0 %v415, 127
      %v942 = vpop.permute.xlu0 %941
      %943 = vrot.lane.b32.xlu0 %v416, 127
      %v944 = vpop.permute.xlu0 %943
      %vm945 = vcmp.lt.s32.totalorder %v422, 127
      %v946 = vsel %vm945, %v942, %v944
      %v947 = vsel %vm945, %v944, %v942
      %s948 = scalar_lea.vmem %s1, 4
      %v949 = vld [vmem:[%s948] ss:$8 sm:$0x3]
      %v951 = vlaneseq
      %v952 = vshrl.u32 %v951, 7
      %v953 = vsub.s32 0, %v952
      %v954 = vrot.slane %v949, %v953
      %v955 = vlaneseq
      %v956 = vshrl.u32 %v955, 7
      %v957 = vsub.s32 1, %v956
      %v958 = vrot.slane %v949, %v957
      %v961 = vmul.f32 %v946, %v954
      %v962 = vmul.f32 %v947, %v958
      %s963 = scalar_lea.vmem %s2, 80
      %v964 = vld [vmem:[%s963] sm:$0xf]
      %v965 = vld [vmem:[%s963 + $0x4] sm:$0xf]
      %v966 = vld [vmem:[%s963 + $0x8] sm:$0xf]
      %v967 = vld [vmem:[%s963 + $0xc] sm:$0xf]
      %v968 = vpack.c.bf16 %v961, %v961
      %v969 = vpack.c.bf16 %v962, %v962
      %v974 = vunpack.c.l.b16 %v964
      %v975 = vunpack.c.l.b16 %v965
      %v976 = vunpack.c.l.b16 %v966
      %v977 = vunpack.c.l.b16 %v967
      %v978 = vpack.c.b16 %v975, %v974
      %v979 = vpack.c.b16 %v977, %v976
      %v981 = vsel %vm485, %v978, 0
      %v984 = vsel %vm485, %v979, 0
      %v987 = vsel %vm492, %v968, 0
      %v990 = vsel %vm492, %v969, 0
      %992 = vmatprep.subr.bf16.mxu0 %v990
      %993 = vmatpush1.bf16.msra.mxu0 %v987
      %994 = vmatprep.subr.bf16.mxu0 0
      %995 = vmatpush1.bf16.msra.mxu0 0
      %996 = vmatprep.subr.bf16.mxu0 0
      %997 = vmatpush1.bf16.msra.mxu0 0
      %998 = vmatprep.subr.bf16.mxu0 0
      %999 = vmatpush1.bf16.msra.mxu0 0
      %1000 = vmatprep.subr.bf16.mxu0 0
      %1001 = vmatpush1.bf16.msra.mxu0 0
      %1002 = vmatprep.subr.bf16.mxu0 0
      %1003 = vmatpush1.bf16.msra.mxu0 0
      %1004 = vmatprep.subr.bf16.mxu0 0
      %1005 = vmatpush1.bf16.msra.mxu0 0
      %1006 = vmatprep.subr.bf16.mxu0 0
      %1007 = vmatpush1.bf16.msra.mxu0 0
      %1008 = vmatprep.subr.bf16.mxu0 0
      %1009 = vmatpush1.bf16.msra.mxu0 0
      %1010 = vmatprep.subr.bf16.mxu0 0
      %1011 = vmatpush1.bf16.msra.mxu0 0
      %1012 = vmatprep.subr.bf16.mxu0 0
      %1013 = vmatpush1.bf16.msra.mxu0 0
      %1014 = vmatprep.subr.bf16.mxu0 0
      %1015 = vmatpush1.bf16.msra.mxu0 0
      %1016 = vmatprep.subr.bf16.mxu0 0
      %1017 = vmatpush1.bf16.msra.mxu0 0
      %1018 = vmatprep.subr.bf16.mxu0 0
      %1019 = vmatpush1.bf16.msra.mxu0 0
      %1020 = vmatprep.subr.bf16.mxu0 0
      %1021 = vmatpush1.bf16.msra.mxu0 0
      %1022 = vmatprep.subr.bf16.mxu0 0
      %1023 = vmatpush1.bf16.msra.mxu0 0
      %1024 = vmatprep.mubr.bf16.mxu0 0
      %1025 = vmatmul.mubr.bf16.gmra.mrb[0].mxu0 %v981
      %v1026 = vpop.f32.mrb[0].mxu0
      %v1027 = vadd.f32 0.0, %v1026
      %v1028 = vpop.f32.mrb[0].mxu0
      %v1029 = vadd.f32 0.0, %v1028
      %v1030 = vpop.f32.mrb[0].mxu0
      %v1031 = vadd.f32 0.0, %v1030
      %v1032 = vpop.f32.mrb[0].mxu0
      %v1033 = vadd.f32 0.0, %v1032
      %1034 = vmatprep.mubr.bf16.mxu0 0
      %1035 = vmatmul.mubr.bf16.gmra.mrb[0].mxu0 %v984
      %v1036 = vpop.f32.mrb[0].mxu0
      %v1037 = vadd.f32 0.0, %v1036
      %v1038 = vpop.f32.mrb[0].mxu0
      %v1039 = vadd.f32 0.0, %v1038
      %v1040 = vpop.f32.mrb[0].mxu0
      %v1041 = vadd.f32 0.0, %v1040
      %v1042 = vpop.f32.mrb[0].mxu0
      %v1043 = vadd.f32 0.0, %v1042
      %1044 = vdwg.mxu0
      %v1045 = vadd.f32 %v933, %v1027
      %v1046 = vadd.f32 %v934, %v1029
      %v1047 = vadd.f32 %v935, %v1031
      %v1048 = vadd.f32 %v936, %v1033
      %v1049 = vadd.f32 %v937, %v1037
      %v1050 = vadd.f32 %v938, %v1039
      %v1051 = vadd.f32 %v939, %v1041
      %v1052 = vadd.f32 %v940, %v1043
      %1053 = vrot.lane.b32.xlu0 %v415, 113
      %v1054 = vpop.permute.xlu0 %1053
      %1055 = vrot.lane.b32.xlu0 %v416, 113
      %v1056 = vpop.permute.xlu0 %1055
      %vm1057 = vcmp.lt.s32.totalorder %v422, 113
      %v1058 = vsel %vm1057, %v1054, %v1056
      %v1059 = vsel %vm1057, %v1056, %v1054
      %s1060 = scalar_lea.vmem %s1, 5
      %v1061 = vld [vmem:[%s1060] ss:$8 sm:$0x3]
      %v1063 = vlaneseq
      %v1064 = vshrl.u32 %v1063, 7
      %v1065 = vsub.s32 0, %v1064
      %v1066 = vrot.slane %v1061, %v1065
      %v1067 = vlaneseq
      %v1068 = vshrl.u32 %v1067, 7
      %v1069 = vsub.s32 1, %v1068
      %v1070 = vrot.slane %v1061, %v1069
      %v1073 = vmul.f32 %v1058, %v1066
      %v1074 = vmul.f32 %v1059, %v1070
      %s1075 = scalar_lea.vmem %s2, 96
      %v1076 = vld [vmem:[%s1075] sm:$0xf]
      %v1077 = vld [vmem:[%s1075 + $0x4] sm:$0xf]
      %v1078 = vld [vmem:[%s1075 + $0x8] sm:$0xf]
      %v1079 = vld [vmem:[%s1075 + $0xc] sm:$0xf]
      %v1080 = vpack.c.bf16 %v1073, %v1073
      %v1081 = vpack.c.bf16 %v1074, %v1074
      %v1086 = vunpack.c.l.b16 %v1076
      %v1087 = vunpack.c.l.b16 %v1077
      %v1088 = vunpack.c.l.b16 %v1078
      %v1089 = vunpack.c.l.b16 %v1079
      %v1090 = vpack.c.b16 %v1087, %v1086
      %v1091 = vpack.c.b16 %v1089, %v1088
      %v1093 = vsel %vm485, %v1090, 0
      %v1096 = vsel %vm485, %v1091, 0
      %v1099 = vsel %vm492, %v1080, 0
      %v1102 = vsel %vm492, %v1081, 0
      %1104 = vmatprep.subr.bf16.mxu0 %v1102
      %1105 = vmatpush1.bf16.msra.mxu0 %v1099
      %1106 = vmatprep.subr.bf16.mxu0 0
      %1107 = vmatpush1.bf16.msra.mxu0 0
      %1108 = vmatprep.subr.bf16.mxu0 0
      %1109 = vmatpush1.bf16.msra.mxu0 0
      %1110 = vmatprep.subr.bf16.mxu0 0
      %1111 = vmatpush1.bf16.msra.mxu0 0
      %1112 = vmatprep.subr.bf16.mxu0 0
      %1113 = vmatpush1.bf16.msra.mxu0 0
      %1114 = vmatprep.subr.bf16.mxu0 0
      %1115 = vmatpush1.bf16.msra.mxu0 0
      %1116 = vmatprep.subr.bf16.mxu0 0
      %1117 = vmatpush1.bf16.msra.mxu0 0
      %1118 = vmatprep.subr.bf16.mxu0 0
      %1119 = vmatpush1.bf16.msra.mxu0 0
      %1120 = vmatprep.subr.bf16.mxu0 0
      %1121 = vmatpush1.bf16.msra.mxu0 0
      %1122 = vmatprep.subr.bf16.mxu0 0
      %1123 = vmatpush1.bf16.msra.mxu0 0
      %1124 = vmatprep.subr.bf16.mxu0 0
      %1125 = vmatpush1.bf16.msra.mxu0 0
      %1126 = vmatprep.subr.bf16.mxu0 0
      %1127 = vmatpush1.bf16.msra.mxu0 0
      %1128 = vmatprep.subr.bf16.mxu0 0
      %1129 = vmatpush1.bf16.msra.mxu0 0
      %1130 = vmatprep.subr.bf16.mxu0 0
      %1131 = vmatpush1.bf16.msra.mxu0 0
      %1132 = vmatprep.subr.bf16.mxu0 0
      %1133 = vmatpush1.bf16.msra.mxu0 0
      %1134 = vmatprep.subr.bf16.mxu0 0
      %1135 = vmatpush1.bf16.msra.mxu0 0
      %1136 = vmatprep.mubr.bf16.mxu0 0
      %1137 = vmatmul.mubr.bf16.gmra.mrb[0].mxu0 %v1093
      %v1138 = vpop.f32.mrb[0].mxu0
      %v1139 = vadd.f32 0.0, %v1138
      %v1140 = vpop.f32.mrb[0].mxu0
      %v1141 = vadd.f32 0.0, %v1140
      %v1142 = vpop.f32.mrb[0].mxu0
      %v1143 = vadd.f32 0.0, %v1142
      %v1144 = vpop.f32.mrb[0].mxu0
      %v1145 = vadd.f32 0.0, %v1144
      %1146 = vmatprep.mubr.bf16.mxu0 0
      %1147 = vmatmul.mubr.bf16.gmra.mrb[0].mxu0 %v1096
      %v1148 = vpop.f32.mrb[0].mxu0
      %v1149 = vadd.f32 0.0, %v1148
      %v1150 = vpop.f32.mrb[0].mxu0
      %v1151 = vadd.f32 0.0, %v1150
      %v1152 = vpop.f32.mrb[0].mxu0
      %v1153 = vadd.f32 0.0, %v1152
      %v1154 = vpop.f32.mrb[0].mxu0
      %v1155 = vadd.f32 0.0, %v1154
      %1156 = vdwg.mxu0
      %v1157 = vadd.f32 %v1045, %v1139
      %v1158 = vadd.f32 %v1046, %v1141
      %v1159 = vadd.f32 %v1047, %v1143
      %v1160 = vadd.f32 %v1048, %v1145
      %v1161 = vadd.f32 %v1049, %v1149
      %v1162 = vadd.f32 %v1050, %v1151
      %v1163 = vadd.f32 %v1051, %v1153
      %v1164 = vadd.f32 %v1052, %v1155
      %1165 = vrot.lane.b32.xlu0 %v415, 112
      %v1166 = vpop.permute.xlu0 %1165
      %1167 = vrot.lane.b32.xlu0 %v416, 112
      %v1168 = vpop.permute.xlu0 %1167
      %vm1169 = vcmp.lt.s32.totalorder %v422, 112
      %v1170 = vsel %vm1169, %v1166, %v1168
      %v1171 = vsel %vm1169, %v1168, %v1166
      %s1172 = scalar_lea.vmem %s1, 6
      %v1173 = vld [vmem:[%s1172] ss:$8 sm:$0x3]
      %v1175 = vlaneseq
      %v1176 = vshrl.u32 %v1175, 7
      %v1177 = vsub.s32 0, %v1176
      %v1178 = vrot.slane %v1173, %v1177
      %v1179 = vlaneseq
      %v1180 = vshrl.u32 %v1179, 7
      %v1181 = vsub.s32 1, %v1180
      %v1182 = vrot.slane %v1173, %v1181
      %v1185 = vmul.f32 %v1170, %v1178
      %v1186 = vmul.f32 %v1171, %v1182
      %s1187 = scalar_lea.vmem %s2, 112
      %v1188 = vld [vmem:[%s1187] sm:$0xf]
      %v1189 = vld [vmem:[%s1187 + $0x4] sm:$0xf]
      %v1190 = vld [vmem:[%s1187 + $0x8] sm:$0xf]
      %v1191 = vld [vmem:[%s1187 + $0xc] sm:$0xf]
      %v1192 = vpack.c.bf16 %v1185, %v1185
      %v1193 = vpack.c.bf16 %v1186, %v1186
      %v1198 = vunpack.c.l.b16 %v1188
      %v1199 = vunpack.c.l.b16 %v1189
      %v1200 = vunpack.c.l.b16 %v1190
      %v1201 = vunpack.c.l.b16 %v1191
      %v1202 = vpack.c.b16 %v1199, %v1198
      %v1203 = vpack.c.b16 %v1201, %v1200
      %v1205 = vsel %vm485, %v1202, 0
      %v1208 = vsel %vm485, %v1203, 0
      %v1211 = vsel %vm492, %v1192, 0
      %v1214 = vsel %vm492, %v1193, 0
      %1216 = vmatprep.subr.bf16.mxu0 %v1214
      %1217 = vmatpush1.bf16.msra.mxu0 %v1211
      %1218 = vmatprep.subr.bf16.mxu0 0
      %1219 = vmatpush1.bf16.msra.mxu0 0
      %1220 = vmatprep.subr.bf16.mxu0 0
      %1221 = vmatpush1.bf16.msra.mxu0 0
      %1222 = vmatprep.subr.bf16.mxu0 0
      %1223 = vmatpush1.bf16.msra.mxu0 0
      %1224 = vmatprep.subr.bf16.mxu0 0
      %1225 = vmatpush1.bf16.msra.mxu0 0
      %1226 = vmatprep.subr.bf16.mxu0 0
      %1227 = vmatpush1.bf16.msra.mxu0 0
      %1228 = vmatprep.subr.bf16.mxu0 0
      %1229 = vmatpush1.bf16.msra.mxu0 0
      %1230 = vmatprep.subr.bf16.mxu0 0
      %1231 = vmatpush1.bf16.msra.mxu0 0
      %1232 = vmatprep.subr.bf16.mxu0 0
      %1233 = vmatpush1.bf16.msra.mxu0 0
      %1234 = vmatprep.subr.bf16.mxu0 0
      %1235 = vmatpush1.bf16.msra.mxu0 0
      %1236 = vmatprep.subr.bf16.mxu0 0
      %1237 = vmatpush1.bf16.msra.mxu0 0
      %1238 = vmatprep.subr.bf16.mxu0 0
      %1239 = vmatpush1.bf16.msra.mxu0 0
      %1240 = vmatprep.subr.bf16.mxu0 0
      %1241 = vmatpush1.bf16.msra.mxu0 0
      %1242 = vmatprep.subr.bf16.mxu0 0
      %1243 = vmatpush1.bf16.msra.mxu0 0
      %1244 = vmatprep.subr.bf16.mxu0 0
      %1245 = vmatpush1.bf16.msra.mxu0 0
      %1246 = vmatprep.subr.bf16.mxu0 0
      %1247 = vmatpush1.bf16.msra.mxu0 0
      %1248 = vmatprep.mubr.bf16.mxu0 0
      %1249 = vmatmul.mubr.bf16.gmra.mrb[0].mxu0 %v1205
      %v1250 = vpop.f32.mrb[0].mxu0
      %v1251 = vadd.f32 0.0, %v1250
      %v1252 = vpop.f32.mrb[0].mxu0
      %v1253 = vadd.f32 0.0, %v1252
      %v1254 = vpop.f32.mrb[0].mxu0
      %v1255 = vadd.f32 0.0, %v1254
      %v1256 = vpop.f32.mrb[0].mxu0
      %v1257 = vadd.f32 0.0, %v1256
      %1258 = vmatprep.mubr.bf16.mxu0 0
      %1259 = vmatmul.mubr.bf16.gmra.mrb[0].mxu0 %v1208
      %v1260 = vpop.f32.mrb[0].mxu0
      %v1261 = vadd.f32 0.0, %v1260
      %v1262 = vpop.f32.mrb[0].mxu0
      %v1263 = vadd.f32 0.0, %v1262
      %v1264 = vpop.f32.mrb[0].mxu0
      %v1265 = vadd.f32 0.0, %v1264
      %v1266 = vpop.f32.mrb[0].mxu0
      %v1267 = vadd.f32 0.0, %v1266
      %1268 = vdwg.mxu0
      %v1269 = vadd.f32 %v1157, %v1251
      %v1270 = vadd.f32 %v1158, %v1253
      %v1271 = vadd.f32 %v1159, %v1255
      %v1272 = vadd.f32 %v1160, %v1257
      %v1273 = vadd.f32 %v1161, %v1261
      %v1274 = vadd.f32 %v1162, %v1263
      %v1275 = vadd.f32 %v1163, %v1265
      %v1276 = vadd.f32 %v1164, %v1267
      %1277 = vrot.lane.b32.xlu0 %v415, 111
      %v1278 = vpop.permute.xlu0 %1277
      %1279 = vrot.lane.b32.xlu0 %v416, 111
      %v1280 = vpop.permute.xlu0 %1279
      %vm1281 = vcmp.lt.s32.totalorder %v422, 111
      %v1282 = vsel %vm1281, %v1278, %v1280
      %v1283 = vsel %vm1281, %v1280, %v1278
      %s1284 = scalar_lea.vmem %s1, 7
      %v1285 = vld [vmem:[%s1284] ss:$8 sm:$0x3]
      %v1287 = vlaneseq
      %v1288 = vshrl.u32 %v1287, 7
      %v1289 = vsub.s32 0, %v1288
      %v1290 = vrot.slane %v1285, %v1289
      %v1291 = vlaneseq
      %v1292 = vshrl.u32 %v1291, 7
      %v1293 = vsub.s32 1, %v1292
      %v1294 = vrot.slane %v1285, %v1293
      %v1297 = vmul.f32 %v1282, %v1290
      %v1298 = vmul.f32 %v1283, %v1294
      %s1299 = scalar_lea.vmem %s2, 128
      %v1300 = vld [vmem:[%s1299] sm:$0xf]
      %v1301 = vld [vmem:[%s1299 + $0x4] sm:$0xf]
      %v1302 = vld [vmem:[%s1299 + $0x8] sm:$0xf]
      %v1303 = vld [vmem:[%s1299 + $0xc] sm:$0xf]
      %v1304 = vpack.c.bf16 %v1297, %v1297
      %v1305 = vpack.c.bf16 %v1298, %v1298
      %v1310 = vunpack.c.l.b16 %v1300
      %v1311 = vunpack.c.l.b16 %v1301
      %v1312 = vunpack.c.l.b16 %v1302
      %v1313 = vunpack.c.l.b16 %v1303
      %v1314 = vpack.c.b16 %v1311, %v1310
      %v1315 = vpack.c.b16 %v1313, %v1312
      %v1317 = vsel %vm485, %v1314, 0
      %v1320 = vsel %vm485, %v1315, 0
      %v1323 = vsel %vm492, %v1304, 0
      %v1326 = vsel %vm492, %v1305, 0
      %1328 = vmatprep.subr.bf16.mxu0 %v1326
      %1329 = vmatpush1.bf16.msra.mxu0 %v1323
      %1330 = vmatprep.subr.bf16.mxu0 0
      %1331 = vmatpush1.bf16.msra.mxu0 0
      %1332 = vmatprep.subr.bf16.mxu0 0
      %1333 = vmatpush1.bf16.msra.mxu0 0
      %1334 = vmatprep.subr.bf16.mxu0 0
      %1335 = vmatpush1.bf16.msra.mxu0 0
      %1336 = vmatprep.subr.bf16.mxu0 0
      %1337 = vmatpush1.bf16.msra.mxu0 0
      %1338 = vmatprep.subr.bf16.mxu0 0
      %1339 = vmatpush1.bf16.msra.mxu0 0
      %1340 = vmatprep.subr.bf16.mxu0 0
      %1341 = vmatpush1.bf16.msra.mxu0 0
      %1342 = vmatprep.subr.bf16.mxu0 0
      %1343 = vmatpush1.bf16.msra.mxu0 0
      %1344 = vmatprep.subr.bf16.mxu0 0
      %1345 = vmatpush1.bf16.msra.mxu0 0
      %1346 = vmatprep.subr.bf16.mxu0 0
      %1347 = vmatpush1.bf16.msra.mxu0 0
      %1348 = vmatprep.subr.bf16.mxu0 0
      %1349 = vmatpush1.bf16.msra.mxu0 0
      %1350 = vmatprep.subr.bf16.mxu0 0
      %1351 = vmatpush1.bf16.msra.mxu0 0
      %1352 = vmatprep.subr.bf16.mxu0 0
      %1353 = vmatpush1.bf16.msra.mxu0 0
      %1354 = vmatprep.subr.bf16.mxu0 0
      %1355 = vmatpush1.bf16.msra.mxu0 0
      %1356 = vmatprep.subr.bf16.mxu0 0
      %1357 = vmatpush1.bf16.msra.mxu0 0
      %1358 = vmatprep.subr.bf16.mxu0 0
      %1359 = vmatpush1.bf16.msra.mxu0 0
      %1360 = vmatprep.mubr.bf16.mxu0 0
      %1361 = vmatmul.mubr.bf16.gmra.mrb[0].mxu0 %v1317
      %v1362 = vpop.f32.mrb[0].mxu0
      %v1363 = vadd.f32 0.0, %v1362
      %v1364 = vpop.f32.mrb[0].mxu0
      %v1365 = vadd.f32 0.0, %v1364
      %v1366 = vpop.f32.mrb[0].mxu0
      %v1367 = vadd.f32 0.0, %v1366
      %v1368 = vpop.f32.mrb[0].mxu0
      %v1369 = vadd.f32 0.0, %v1368
      %1370 = vmatprep.mubr.bf16.mxu0 0
      %1371 = vmatmul.mubr.bf16.gmra.mrb[0].mxu0 %v1320
      %v1372 = vpop.f32.mrb[0].mxu0
      %v1373 = vadd.f32 0.0, %v1372
      %v1374 = vpop.f32.mrb[0].mxu0
      %v1375 = vadd.f32 0.0, %v1374
      %v1376 = vpop.f32.mrb[0].mxu0
      %v1377 = vadd.f32 0.0, %v1376
      %v1378 = vpop.f32.mrb[0].mxu0
      %v1379 = vadd.f32 0.0, %v1378
      %1380 = vdwg.mxu0
      %v1381 = vadd.f32 %v1269, %v1363
      %v1382 = vadd.f32 %v1270, %v1365
      %v1383 = vadd.f32 %v1271, %v1367
      %v1384 = vadd.f32 %v1272, %v1369
      %v1385 = vadd.f32 %v1273, %v1373
      %v1386 = vadd.f32 %v1274, %v1375
      %v1387 = vadd.f32 %v1275, %v1377
      %v1388 = vadd.f32 %v1276, %v1379
      %v1389 = vld [vmem:[%s3] sm:$0xff]
      %v1390 = vld [vmem:[%s3 + $0x8] sm:$0xff]
      %v1391 = vld [vmem:[%s3 + $0x10] sm:$0xff]
      %v1392 = vld [vmem:[%s3 + $0x18] sm:$0xff]
      %1394 = vset.pattern.permute.xlu0 0
      %1395 = vperm.xlu0 %1394, %v1389
      %v1396 = vpop.permute.xlu0 %1395
      %1399 = vset.pattern.permute.xlu0 0
      %1400 = vperm.xlu0 %1399, %v1390
      %v1401 = vpop.permute.xlu0 %1400
      %1404 = vset.pattern.permute.xlu0 0
      %1405 = vperm.xlu0 %1404, %v1391
      %v1406 = vpop.permute.xlu0 %1405
      %1409 = vset.pattern.permute.xlu0 0
      %1410 = vperm.xlu0 %1409, %v1392
      %v1411 = vpop.permute.xlu0 %1410
      %v1413 = vadd.f32 %v1381, %v1396
      %v1414 = vadd.f32 %v1382, %v1396
      %v1415 = vadd.f32 %v1383, %v1401
      %v1416 = vadd.f32 %v1384, %v1401
      %v1417 = vadd.f32 %v1385, %v1406
      %v1418 = vadd.f32 %v1386, %v1406
      %v1419 = vadd.f32 %v1387, %v1411
      %v1420 = vadd.f32 %v1388, %v1411
      %v1421 = vmax.f32 %v1413, 0.0
      %v1422 = vmax.f32 %v1414, 0.0
      %v1423 = vmax.f32 %v1415, 0.0
      %v1424 = vmax.f32 %v1416, 0.0
      %v1425 = vmax.f32 %v1417, 0.0
      %v1426 = vmax.f32 %v1418, 0.0
      %v1427 = vmax.f32 %v1419, 0.0
      %v1428 = vmax.f32 %v1420, 0.0
      %1429 = vrot.lane.b32.xlu0 %v1421, 17
      %v1430 = vpop.permute.xlu0 %1429
      %1431 = vrot.lane.b32.xlu0 %v1423, 17
      %v1432 = vpop.permute.xlu0 %1431
      %1433 = vrot.lane.b32.xlu0 %v1425, 17
      %v1434 = vpop.permute.xlu0 %1433
      %1435 = vrot.lane.b32.xlu0 %v1427, 17
      %v1436 = vpop.permute.xlu0 %1435
      %1437 = vrot.lane.b32.xlu0 %v1422, 17
      %v1438 = vpop.permute.xlu0 %1437
      %1439 = vrot.lane.b32.xlu0 %v1424, 17
      %v1440 = vpop.permute.xlu0 %1439
      %1441 = vrot.lane.b32.xlu0 %v1426, 17
      %v1442 = vpop.permute.xlu0 %1441
      %1443 = vrot.lane.b32.xlu0 %v1428, 17
      %v1444 = vpop.permute.xlu0 %1443
      %v1445 = vsel %vm423, %v1430, %v1438
      %v1446 = vsel %vm423, %v1432, %v1440
      %v1447 = vsel %vm423, %v1434, %v1442
      %v1448 = vsel %vm423, %v1436, %v1444
      %v1449 = vsel %vm423, %v1438, %v1430
      %v1450 = vsel %vm423, %v1440, %v1432
      %v1451 = vsel %vm423, %v1442, %v1434
      %v1452 = vsel %vm423, %v1444, %v1436
      %v1453 = vmul.f32 %v1449, %v431
      %v1454 = vmul.f32 %v1445, %v435
      %v1455 = vmul.f32 %v1450, %v431
      %v1456 = vmul.f32 %v1446, %v435
      %v1457 = vmul.f32 %v1451, %v431
      %v1458 = vmul.f32 %v1447, %v435
      %v1459 = vmul.f32 %v1452, %v431
      %v1460 = vmul.f32 %v1448, %v435
      %v1461 = vld [vmem:[%s4] sm:$0xf]
      %v1462 = vld [vmem:[%s4 + $0x4] sm:$0xf]
      %v1463 = vld [vmem:[%s4 + $0x8] sm:$0xf]
      %v1464 = vld [vmem:[%s4 + $0xc] sm:$0xf]
      %v1465 = vpack.c.bf16 %v1455, %v1453
      %v1466 = vpack.c.bf16 %v1456, %v1454
      %v1467 = vpack.c.bf16 %v1459, %v1457
      %v1468 = vpack.c.bf16 %v1460, %v1458
      %1469 = vrot.lane.b32.xlu0 %v1421, 16
      %v1470 = vpop.permute.xlu0 %1469
      %1471 = vrot.lane.b32.xlu0 %v1423, 16
      %v1472 = vpop.permute.xlu0 %1471
      %1473 = vrot.lane.b32.xlu0 %v1425, 16
      %v1474 = vpop.permute.xlu0 %1473
      %1475 = vrot.lane.b32.xlu0 %v1427, 16
      %v1476 = vpop.permute.xlu0 %1475
      %1477 = vrot.lane.b32.xlu0 %v1422, 16
      %v1478 = vpop.permute.xlu0 %1477
      %1479 = vrot.lane.b32.xlu0 %v1424, 16
      %v1480 = vpop.permute.xlu0 %1479
      %1481 = vrot.lane.b32.xlu0 %v1426, 16
      %v1482 = vpop.permute.xlu0 %1481
      %1483 = vrot.lane.b32.xlu0 %v1428, 16
      %v1484 = vpop.permute.xlu0 %1483
      %v1485 = vsel %vm450, %v1470, %v1478
      %v1486 = vsel %vm450, %v1472, %v1480
      %v1487 = vsel %vm450, %v1474, %v1482
      %v1488 = vsel %vm450, %v1476, %v1484
      %v1489 = vsel %vm450, %v1478, %v1470
      %v1490 = vsel %vm450, %v1480, %v1472
      %v1491 = vsel %vm450, %v1482, %v1474
      %v1492 = vsel %vm450, %v1484, %v1476
      %v1493 = vmul.f32 %v1489, %v459
      %v1494 = vmul.f32 %v1485, %v463
      %v1495 = vmul.f32 %v1490, %v459
      %v1496 = vmul.f32 %v1486, %v463
      %v1497 = vmul.f32 %v1491, %v459
      %v1498 = vmul.f32 %v1487, %v463
      %v1499 = vmul.f32 %v1492, %v459
      %v1500 = vmul.f32 %v1488, %v463
      %s1501 = scalar_lea.vmem %s4, 16
      %v1502 = vld [vmem:[%s1501] sm:$0xf]
      %v1503 = vld [vmem:[%s1501 + $0x4] sm:$0xf]
      %v1504 = vld [vmem:[%s1501 + $0x8] sm:$0xf]
      %v1505 = vld [vmem:[%s1501 + $0xc] sm:$0xf]
      %v1506 = vpack.c.bf16 %v1495, %v1493
      %v1507 = vpack.c.bf16 %v1496, %v1494
      %v1508 = vpack.c.bf16 %v1499, %v1497
      %v1509 = vpack.c.bf16 %v1500, %v1498
      %v1514 = vunpack.c.l.b16 %v1502
      %v1515 = vunpack.c.l.b16 %v1503
      %v1516 = vunpack.c.l.b16 %v1504
      %v1517 = vunpack.c.l.b16 %v1505
      %v1518 = vpack.c.b16 %v1515, %v1514
      %v1519 = vpack.c.b16 %v1517, %v1516
      %vm1520 = vcmask 261120
      %v1522 = vsel %vm1520, %v1518, 0
      %v1525 = vsel %vm1520, %v1519, 0
      %1527 = vmatprep.subr.bf16.mxu0 %v1507
      %1528 = vmatpush1.bf16.msra.mxu0 %v1506
      %1529 = vmatprep.subr.bf16.mxu0 %v1509
      %1530 = vmatpush1.bf16.msra.mxu0 %v1508
      %1531 = vmatprep.subr.bf16.mxu0 0
      %1532 = vmatpush1.bf16.msra.mxu0 0
      %1533 = vmatprep.subr.bf16.mxu0 0
      %1534 = vmatpush1.bf16.msra.mxu0 0
      %1535 = vmatprep.subr.bf16.mxu0 0
      %1536 = vmatpush1.bf16.msra.mxu0 0
      %1537 = vmatprep.subr.bf16.mxu0 0
      %1538 = vmatpush1.bf16.msra.mxu0 0
      %1539 = vmatprep.subr.bf16.mxu0 0
      %1540 = vmatpush1.bf16.msra.mxu0 0
      %1541 = vmatprep.subr.bf16.mxu0 0
      %1542 = vmatpush1.bf16.msra.mxu0 0
      %1543 = vmatprep.subr.bf16.mxu0 0
      %1544 = vmatpush1.bf16.msra.mxu0 0
      %1545 = vmatprep.subr.bf16.mxu0 0
      %1546 = vmatpush1.bf16.msra.mxu0 0
      %1547 = vmatprep.subr.bf16.mxu0 0
      %1548 = vmatpush1.bf16.msra.mxu0 0
      %1549 = vmatprep.subr.bf16.mxu0 0
      %1550 = vmatpush1.bf16.msra.mxu0 0
      %1551 = vmatprep.subr.bf16.mxu0 0
      %1552 = vmatpush1.bf16.msra.mxu0 0
      %1553 = vmatprep.subr.bf16.mxu0 0
      %1554 = vmatpush1.bf16.msra.mxu0 0
      %1555 = vmatprep.subr.bf16.mxu0 0
      %1556 = vmatpush1.bf16.msra.mxu0 0
      %1557 = vmatprep.subr.bf16.mxu0 0
      %1558 = vmatpush1.bf16.msra.mxu0 0
      %1559 = vmatprep.mubr.bf16.mxu0 0
      %1560 = vmatmul.mubr.bf16.gmra.mrb[0].mxu0 %v1522
      %v1561 = vpop.f32.mrb[0].mxu0
      %v1562 = vadd.f32 0.0, %v1561
      %v1563 = vpop.f32.mrb[0].mxu0
      %v1564 = vadd.f32 0.0, %v1563
      %v1565 = vpop.f32.mrb[0].mxu0
      %v1566 = vadd.f32 0.0, %v1565
      %v1567 = vpop.f32.mrb[0].mxu0
      %v1568 = vadd.f32 0.0, %v1567
      %1569 = vmatprep.mubr.bf16.mxu0 0
      %1570 = vmatmul.mubr.bf16.gmra.mrb[0].mxu0 %v1525
      %v1571 = vpop.f32.mrb[0].mxu0
      %v1572 = vadd.f32 0.0, %v1571
      %v1573 = vpop.f32.mrb[0].mxu0
      %v1574 = vadd.f32 0.0, %v1573
      %v1575 = vpop.f32.mrb[0].mxu0
      %v1576 = vadd.f32 0.0, %v1575
      %v1577 = vpop.f32.mrb[0].mxu0
      %v1578 = vadd.f32 0.0, %v1577
      %1579 = vdwg.mxu0
      %v1584 = vunpack.c.l.b16 %v1461
      %v1585 = vunpack.c.l.b16 %v1462
      %v1586 = vunpack.c.l.b16 %v1463
      %v1587 = vunpack.c.l.b16 %v1464
      %v1588 = vpack.c.b16 %v1585, %v1584
      %v1589 = vpack.c.b16 %v1587, %v1586
      %v1591 = vsel %vm1520, %v1588, 0
      %v1594 = vsel %vm1520, %v1589, 0
      %1596 = vmatprep.subr.bf16.mxu0 %v1466
      %1597 = vmatpush1.bf16.msra.mxu0 %v1465
      %1598 = vmatprep.subr.bf16.mxu0 %v1468
      %1599 = vmatpush1.bf16.msra.mxu0 %v1467
      %1600 = vmatprep.subr.bf16.mxu0 0
      %1601 = vmatpush1.bf16.msra.mxu0 0
      %1602 = vmatprep.subr.bf16.mxu0 0
      %1603 = vmatpush1.bf16.msra.mxu0 0
      %1604 = vmatprep.subr.bf16.mxu0 0
      %1605 = vmatpush1.bf16.msra.mxu0 0
      %1606 = vmatprep.subr.bf16.mxu0 0
      %1607 = vmatpush1.bf16.msra.mxu0 0
      %1608 = vmatprep.subr.bf16.mxu0 0
      %1609 = vmatpush1.bf16.msra.mxu0 0
      %1610 = vmatprep.subr.bf16.mxu0 0
      %1611 = vmatpush1.bf16.msra.mxu0 0
      %1612 = vmatprep.subr.bf16.mxu0 0
      %1613 = vmatpush1.bf16.msra.mxu0 0
      %1614 = vmatprep.subr.bf16.mxu0 0
      %1615 = vmatpush1.bf16.msra.mxu0 0
      %1616 = vmatprep.subr.bf16.mxu0 0
      %1617 = vmatpush1.bf16.msra.mxu0 0
      %1618 = vmatprep.subr.bf16.mxu0 0
      %1619 = vmatpush1.bf16.msra.mxu0 0
      %1620 = vmatprep.subr.bf16.mxu0 0
      %1621 = vmatpush1.bf16.msra.mxu0 0
      %1622 = vmatprep.subr.bf16.mxu0 0
      %1623 = vmatpush1.bf16.msra.mxu0 0
      %1624 = vmatprep.subr.bf16.mxu0 0
      %1625 = vmatpush1.bf16.msra.mxu0 0
      %1626 = vmatprep.subr.bf16.mxu0 0
      %1627 = vmatpush1.bf16.msra.mxu0 0
      %1628 = vmatprep.mubr.bf16.mxu0 0
      %1629 = vmatmul.mubr.bf16.gmra.mrb[0].mxu0 %v1591
      %v1630 = vpop.f32.mrb[0].mxu0
      %v1631 = vadd.f32 %v1562, %v1630
      %v1632 = vpop.f32.mrb[0].mxu0
      %v1633 = vadd.f32 %v1564, %v1632
      %v1634 = vpop.f32.mrb[0].mxu0
      %v1635 = vadd.f32 %v1566, %v1634
      %v1636 = vpop.f32.mrb[0].mxu0
      %v1637 = vadd.f32 %v1568, %v1636
      %1638 = vmatprep.mubr.bf16.mxu0 0
      %1639 = vmatmul.mubr.bf16.gmra.mrb[0].mxu0 %v1594
      %v1640 = vpop.f32.mrb[0].mxu0
      %v1641 = vadd.f32 %v1572, %v1640
      %v1642 = vpop.f32.mrb[0].mxu0
      %v1643 = vadd.f32 %v1574, %v1642
      %v1644 = vpop.f32.mrb[0].mxu0
      %v1645 = vadd.f32 %v1576, %v1644
      %v1646 = vpop.f32.mrb[0].mxu0
      %v1647 = vadd.f32 %v1578, %v1646
      %1648 = vdwg.mxu0
      %1649 = vrot.lane.b32.xlu0 %v1421, 15
      %v1650 = vpop.permute.xlu0 %1649
      %1651 = vrot.lane.b32.xlu0 %v1423, 15
      %v1652 = vpop.permute.xlu0 %1651
      %1653 = vrot.lane.b32.xlu0 %v1425, 15
      %v1654 = vpop.permute.xlu0 %1653
      %1655 = vrot.lane.b32.xlu0 %v1427, 15
      %v1656 = vpop.permute.xlu0 %1655
      %1657 = vrot.lane.b32.xlu0 %v1422, 15
      %v1658 = vpop.permute.xlu0 %1657
      %1659 = vrot.lane.b32.xlu0 %v1424, 15
      %v1660 = vpop.permute.xlu0 %1659
      %1661 = vrot.lane.b32.xlu0 %v1426, 15
      %v1662 = vpop.permute.xlu0 %1661
      %1663 = vrot.lane.b32.xlu0 %v1428, 15
      %v1664 = vpop.permute.xlu0 %1663
      %v1665 = vsel %vm631, %v1650, %v1658
      %v1666 = vsel %vm631, %v1652, %v1660
      %v1667 = vsel %vm631, %v1654, %v1662
      %v1668 = vsel %vm631, %v1656, %v1664
      %v1669 = vsel %vm631, %v1658, %v1650
      %v1670 = vsel %vm631, %v1660, %v1652
      %v1671 = vsel %vm631, %v1662, %v1654
      %v1672 = vsel %vm631, %v1664, %v1656
      %v1673 = vmul.f32 %v1669, %v640
      %v1674 = vmul.f32 %v1665, %v644
      %v1675 = vmul.f32 %v1670, %v640
      %v1676 = vmul.f32 %v1666, %v644
      %v1677 = vmul.f32 %v1671, %v640
      %v1678 = vmul.f32 %v1667, %v644
      %v1679 = vmul.f32 %v1672, %v640
      %v1680 = vmul.f32 %v1668, %v644
      %s1681 = scalar_lea.vmem %s4, 32
      %v1682 = vld [vmem:[%s1681] sm:$0xf]
      %v1683 = vld [vmem:[%s1681 + $0x4] sm:$0xf]
      %v1684 = vld [vmem:[%s1681 + $0x8] sm:$0xf]
      %v1685 = vld [vmem:[%s1681 + $0xc] sm:$0xf]
      %v1686 = vpack.c.bf16 %v1675, %v1673
      %v1687 = vpack.c.bf16 %v1676, %v1674
      %v1688 = vpack.c.bf16 %v1679, %v1677
      %v1689 = vpack.c.bf16 %v1680, %v1678
      %v1694 = vunpack.c.l.b16 %v1682
      %v1695 = vunpack.c.l.b16 %v1683
      %v1696 = vunpack.c.l.b16 %v1684
      %v1697 = vunpack.c.l.b16 %v1685
      %v1698 = vpack.c.b16 %v1695, %v1694
      %v1699 = vpack.c.b16 %v1697, %v1696
      %v1701 = vsel %vm1520, %v1698, 0
      %v1704 = vsel %vm1520, %v1699, 0
      %1706 = vmatprep.subr.bf16.mxu0 %v1687
      %1707 = vmatpush1.bf16.msra.mxu0 %v1686
      %1708 = vmatprep.subr.bf16.mxu0 %v1689
      %1709 = vmatpush1.bf16.msra.mxu0 %v1688
      %1710 = vmatprep.subr.bf16.mxu0 0
      %1711 = vmatpush1.bf16.msra.mxu0 0
      %1712 = vmatprep.subr.bf16.mxu0 0
      %1713 = vmatpush1.bf16.msra.mxu0 0
      %1714 = vmatprep.subr.bf16.mxu0 0
      %1715 = vmatpush1.bf16.msra.mxu0 0
      %1716 = vmatprep.subr.bf16.mxu0 0
      %1717 = vmatpush1.bf16.msra.mxu0 0
      %1718 = vmatprep.subr.bf16.mxu0 0
      %1719 = vmatpush1.bf16.msra.mxu0 0
      %1720 = vmatprep.subr.bf16.mxu0 0
      %1721 = vmatpush1.bf16.msra.mxu0 0
      %1722 = vmatprep.subr.bf16.mxu0 0
      %1723 = vmatpush1.bf16.msra.mxu0 0
      %1724 = vmatprep.subr.bf16.mxu0 0
      %1725 = vmatpush1.bf16.msra.mxu0 0
      %1726 = vmatprep.subr.bf16.mxu0 0
      %1727 = vmatpush1.bf16.msra.mxu0 0
      %1728 = vmatprep.subr.bf16.mxu0 0
      %1729 = vmatpush1.bf16.msra.mxu0 0
      %1730 = vmatprep.subr.bf16.mxu0 0
      %1731 = vmatpush1.bf16.msra.mxu0 0
      %1732 = vmatprep.subr.bf16.mxu0 0
      %1733 = vmatpush1.bf16.msra.mxu0 0
      %1734 = vmatprep.subr.bf16.mxu0 0
      %1735 = vmatpush1.bf16.msra.mxu0 0
      %1736 = vmatprep.subr.bf16.mxu0 0
      %1737 = vmatpush1.bf16.msra.mxu0 0
      %1738 = vmatprep.mubr.bf16.mxu0 0
      %1739 = vmatmul.mubr.bf16.gmra.mrb[0].mxu0 %v1701
      %v1740 = vpop.f32.mrb[0].mxu0
      %v1741 = vadd.f32 0.0, %v1740
      %v1742 = vpop.f32.mrb[0].mxu0
      %v1743 = vadd.f32 0.0, %v1742
      %v1744 = vpop.f32.mrb[0].mxu0
      %v1745 = vadd.f32 0.0, %v1744
      %v1746 = vpop.f32.mrb[0].mxu0
      %v1747 = vadd.f32 0.0, %v1746
      %1748 = vmatprep.mubr.bf16.mxu0 0
      %1749 = vmatmul.mubr.bf16.gmra.mrb[0].mxu0 %v1704
      %v1750 = vpop.f32.mrb[0].mxu0
      %v1751 = vadd.f32 0.0, %v1750
      %v1752 = vpop.f32.mrb[0].mxu0
      %v1753 = vadd.f32 0.0, %v1752
      %v1754 = vpop.f32.mrb[0].mxu0
      %v1755 = vadd.f32 0.0, %v1754
      %v1756 = vpop.f32.mrb[0].mxu0
      %v1757 = vadd.f32 0.0, %v1756
      %1758 = vdwg.mxu0
      %v1759 = vadd.f32 %v1631, %v1741
      %v1760 = vadd.f32 %v1633, %v1743
      %v1761 = vadd.f32 %v1635, %v1745
      %v1762 = vadd.f32 %v1637, %v1747
      %v1763 = vadd.f32 %v1641, %v1751
      %v1764 = vadd.f32 %v1643, %v1753
      %v1765 = vadd.f32 %v1645, %v1755
      %v1766 = vadd.f32 %v1647, %v1757
      %1767 = vrot.lane.b32.xlu0 %v1421, 1
      %v1768 = vpop.permute.xlu0 %1767
      %1769 = vrot.lane.b32.xlu0 %v1423, 1
      %v1770 = vpop.permute.xlu0 %1769
      %1771 = vrot.lane.b32.xlu0 %v1425, 1
      %v1772 = vpop.permute.xlu0 %1771
      %1773 = vrot.lane.b32.xlu0 %v1427, 1
      %v1774 = vpop.permute.xlu0 %1773
      %1775 = vrot.lane.b32.xlu0 %v1422, 1
      %v1776 = vpop.permute.xlu0 %1775
      %1777 = vrot.lane.b32.xlu0 %v1424, 1
      %v1778 = vpop.permute.xlu0 %1777
      %1779 = vrot.lane.b32.xlu0 %v1426, 1
      %v1780 = vpop.permute.xlu0 %1779
      %1781 = vrot.lane.b32.xlu0 %v1428, 1
      %v1782 = vpop.permute.xlu0 %1781
      %v1783 = vsel %vm743, %v1768, %v1776
      %v1784 = vsel %vm743, %v1770, %v1778
      %v1785 = vsel %vm743, %v1772, %v1780
      %v1786 = vsel %vm743, %v1774, %v1782
      %v1787 = vsel %vm743, %v1776, %v1768
      %v1788 = vsel %vm743, %v1778, %v1770
      %v1789 = vsel %vm743, %v1780, %v1772
      %v1790 = vsel %vm743, %v1782, %v1774
      %v1791 = vmul.f32 %v1787, %v752
      %v1792 = vmul.f32 %v1783, %v756
      %v1793 = vmul.f32 %v1788, %v752
      %v1794 = vmul.f32 %v1784, %v756
      %v1795 = vmul.f32 %v1789, %v752
      %v1796 = vmul.f32 %v1785, %v756
      %v1797 = vmul.f32 %v1790, %v752
      %v1798 = vmul.f32 %v1786, %v756
      %s1799 = scalar_lea.vmem %s4, 48
      %v1800 = vld [vmem:[%s1799] sm:$0xf]
      %v1801 = vld [vmem:[%s1799 + $0x4] sm:$0xf]
      %v1802 = vld [vmem:[%s1799 + $0x8] sm:$0xf]
      %v1803 = vld [vmem:[%s1799 + $0xc] sm:$0xf]
      %v1804 = vpack.c.bf16 %v1793, %v1791
      %v1805 = vpack.c.bf16 %v1794, %v1792
      %v1806 = vpack.c.bf16 %v1797, %v1795
      %v1807 = vpack.c.bf16 %v1798, %v1796
      %v1812 = vunpack.c.l.b16 %v1800
      %v1813 = vunpack.c.l.b16 %v1801
      %v1814 = vunpack.c.l.b16 %v1802
      %v1815 = vunpack.c.l.b16 %v1803
      %v1816 = vpack.c.b16 %v1813, %v1812
      %v1817 = vpack.c.b16 %v1815, %v1814
      %v1819 = vsel %vm1520, %v1816, 0
      %v1822 = vsel %vm1520, %v1817, 0
      %1824 = vmatprep.subr.bf16.mxu0 %v1805
      %1825 = vmatpush1.bf16.msra.mxu0 %v1804
      %1826 = vmatprep.subr.bf16.mxu0 %v1807
      %1827 = vmatpush1.bf16.msra.mxu0 %v1806
      %1828 = vmatprep.subr.bf16.mxu0 0
      %1829 = vmatpush1.bf16.msra.mxu0 0
      %1830 = vmatprep.subr.bf16.mxu0 0
      %1831 = vmatpush1.bf16.msra.mxu0 0
      %1832 = vmatprep.subr.bf16.mxu0 0
      %1833 = vmatpush1.bf16.msra.mxu0 0
      %1834 = vmatprep.subr.bf16.mxu0 0
      %1835 = vmatpush1.bf16.msra.mxu0 0
      %1836 = vmatprep.subr.bf16.mxu0 0
      %1837 = vmatpush1.bf16.msra.mxu0 0
      %1838 = vmatprep.subr.bf16.mxu0 0
      %1839 = vmatpush1.bf16.msra.mxu0 0
      %1840 = vmatprep.subr.bf16.mxu0 0
      %1841 = vmatpush1.bf16.msra.mxu0 0
      %1842 = vmatprep.subr.bf16.mxu0 0
      %1843 = vmatpush1.bf16.msra.mxu0 0
      %1844 = vmatprep.subr.bf16.mxu0 0
      %1845 = vmatpush1.bf16.msra.mxu0 0
      %1846 = vmatprep.subr.bf16.mxu0 0
      %1847 = vmatpush1.bf16.msra.mxu0 0
      %1848 = vmatprep.subr.bf16.mxu0 0
      %1849 = vmatpush1.bf16.msra.mxu0 0
      %1850 = vmatprep.subr.bf16.mxu0 0
      %1851 = vmatpush1.bf16.msra.mxu0 0
      %1852 = vmatprep.subr.bf16.mxu0 0
      %1853 = vmatpush1.bf16.msra.mxu0 0
      %1854 = vmatprep.subr.bf16.mxu0 0
      %1855 = vmatpush1.bf16.msra.mxu0 0
      %1856 = vmatprep.mubr.bf16.mxu0 0
      %1857 = vmatmul.mubr.bf16.gmra.mrb[0].mxu0 %v1819
      %v1858 = vpop.f32.mrb[0].mxu0
      %v1859 = vadd.f32 0.0, %v1858
      %v1860 = vpop.f32.mrb[0].mxu0
      %v1861 = vadd.f32 0.0, %v1860
      %v1862 = vpop.f32.mrb[0].mxu0
      %v1863 = vadd.f32 0.0, %v1862
      %v1864 = vpop.f32.mrb[0].mxu0
      %v1865 = vadd.f32 0.0, %v1864
      %1866 = vmatprep.mubr.bf16.mxu0 0
      %1867 = vmatmul.mubr.bf16.gmra.mrb[0].mxu0 %v1822
      %v1868 = vpop.f32.mrb[0].mxu0
      %v1869 = vadd.f32 0.0, %v1868
      %v1870 = vpop.f32.mrb[0].mxu0
      %v1871 = vadd.f32 0.0, %v1870
      %v1872 = vpop.f32.mrb[0].mxu0
      %v1873 = vadd.f32 0.0, %v1872
      %v1874 = vpop.f32.mrb[0].mxu0
      %v1875 = vadd.f32 0.0, %v1874
      %1876 = vdwg.mxu0
      %v1877 = vadd.f32 %v1759, %v1859
      %v1878 = vadd.f32 %v1760, %v1861
      %v1879 = vadd.f32 %v1761, %v1863
      %v1880 = vadd.f32 %v1762, %v1865
      %v1881 = vadd.f32 %v1763, %v1869
      %v1882 = vadd.f32 %v1764, %v1871
      %v1883 = vadd.f32 %v1765, %v1873
      %v1884 = vadd.f32 %v1766, %v1875
      %s1885 = scalar_lea.vmem %s4, 64
      %v1886 = vld [vmem:[%s1885] sm:$0xf]
      %v1887 = vld [vmem:[%s1885 + $0x4] sm:$0xf]
      %v1888 = vld [vmem:[%s1885 + $0x8] sm:$0xf]
      %v1889 = vld [vmem:[%s1885 + $0xc] sm:$0xf]
      %v1890 = vpack.c.bf16 %v1423, %v1421
      %v1891 = vpack.c.bf16 %v1424, %v1422
      %v1892 = vpack.c.bf16 %v1427, %v1425
      %v1893 = vpack.c.bf16 %v1428, %v1426
      %v1898 = vunpack.c.l.b16 %v1886
      %v1899 = vunpack.c.l.b16 %v1887
      %v1900 = vunpack.c.l.b16 %v1888
      %v1901 = vunpack.c.l.b16 %v1889
      %v1902 = vpack.c.b16 %v1899, %v1898
      %v1903 = vpack.c.b16 %v1901, %v1900
      %v1905 = vsel %vm1520, %v1902, 0
      %v1908 = vsel %vm1520, %v1903, 0
      %1910 = vmatprep.subr.bf16.mxu0 %v1891
      %1911 = vmatpush1.bf16.msra.mxu0 %v1890
      %1912 = vmatprep.subr.bf16.mxu0 %v1893
      %1913 = vmatpush1.bf16.msra.mxu0 %v1892
      %1914 = vmatprep.subr.bf16.mxu0 0
      %1915 = vmatpush1.bf16.msra.mxu0 0
      %1916 = vmatprep.subr.bf16.mxu0 0
      %1917 = vmatpush1.bf16.msra.mxu0 0
      %1918 = vmatprep.subr.bf16.mxu0 0
      %1919 = vmatpush1.bf16.msra.mxu0 0
      %1920 = vmatprep.subr.bf16.mxu0 0
      %1921 = vmatpush1.bf16.msra.mxu0 0
      %1922 = vmatprep.subr.bf16.mxu0 0
      %1923 = vmatpush1.bf16.msra.mxu0 0
      %1924 = vmatprep.subr.bf16.mxu0 0
      %1925 = vmatpush1.bf16.msra.mxu0 0
      %1926 = vmatprep.subr.bf16.mxu0 0
      %1927 = vmatpush1.bf16.msra.mxu0 0
      %1928 = vmatprep.subr.bf16.mxu0 0
      %1929 = vmatpush1.bf16.msra.mxu0 0
      %1930 = vmatprep.subr.bf16.mxu0 0
      %1931 = vmatpush1.bf16.msra.mxu0 0
      %1932 = vmatprep.subr.bf16.mxu0 0
      %1933 = vmatpush1.bf16.msra.mxu0 0
      %1934 = vmatprep.subr.bf16.mxu0 0
      %1935 = vmatpush1.bf16.msra.mxu0 0
      %1936 = vmatprep.subr.bf16.mxu0 0
      %1937 = vmatpush1.bf16.msra.mxu0 0
      %1938 = vmatprep.subr.bf16.mxu0 0
      %1939 = vmatpush1.bf16.msra.mxu0 0
      %1940 = vmatprep.subr.bf16.mxu0 0
      %1941 = vmatpush1.bf16.msra.mxu0 0
      %1942 = vmatprep.mubr.bf16.mxu0 0
      %1943 = vmatmul.mubr.bf16.gmra.mrb[0].mxu0 %v1905
      %v1944 = vpop.f32.mrb[0].mxu0
      %v1945 = vadd.f32 0.0, %v1944
      %v1946 = vpop.f32.mrb[0].mxu0
      %v1947 = vadd.f32 0.0, %v1946
      %v1948 = vpop.f32.mrb[0].mxu0
      %v1949 = vadd.f32 0.0, %v1948
      %v1950 = vpop.f32.mrb[0].mxu0
      %v1951 = vadd.f32 0.0, %v1950
      %1952 = vmatprep.mubr.bf16.mxu0 0
      %1953 = vmatmul.mubr.bf16.gmra.mrb[0].mxu0 %v1908
      %v1954 = vpop.f32.mrb[0].mxu0
      %v1955 = vadd.f32 0.0, %v1954
      %v1956 = vpop.f32.mrb[0].mxu0
      %v1957 = vadd.f32 0.0, %v1956
      %v1958 = vpop.f32.mrb[0].mxu0
      %v1959 = vadd.f32 0.0, %v1958
      %v1960 = vpop.f32.mrb[0].mxu0
      %v1961 = vadd.f32 0.0, %v1960
      %1962 = vdwg.mxu0
      %v1963 = vadd.f32 %v1877, %v1945
      %v1964 = vadd.f32 %v1878, %v1947
      %v1965 = vadd.f32 %v1879, %v1949
      %v1966 = vadd.f32 %v1880, %v1951
      %v1967 = vadd.f32 %v1881, %v1955
      %v1968 = vadd.f32 %v1882, %v1957
      %v1969 = vadd.f32 %v1883, %v1959
      %v1970 = vadd.f32 %v1884, %v1961
      %1971 = vrot.lane.b32.xlu0 %v1421, 127
      %v1972 = vpop.permute.xlu0 %1971
      %1973 = vrot.lane.b32.xlu0 %v1423, 127
      %v1974 = vpop.permute.xlu0 %1973
      %1975 = vrot.lane.b32.xlu0 %v1425, 127
      %v1976 = vpop.permute.xlu0 %1975
      %1977 = vrot.lane.b32.xlu0 %v1427, 127
      %v1978 = vpop.permute.xlu0 %1977
      %1979 = vrot.lane.b32.xlu0 %v1422, 127
      %v1980 = vpop.permute.xlu0 %1979
      %1981 = vrot.lane.b32.xlu0 %v1424, 127
      %v1982 = vpop.permute.xlu0 %1981
      %1983 = vrot.lane.b32.xlu0 %v1426, 127
      %v1984 = vpop.permute.xlu0 %1983
      %1985 = vrot.lane.b32.xlu0 %v1428, 127
      %v1986 = vpop.permute.xlu0 %1985
      %v1987 = vsel %vm945, %v1972, %v1980
      %v1988 = vsel %vm945, %v1974, %v1982
      %v1989 = vsel %vm945, %v1976, %v1984
      %v1990 = vsel %vm945, %v1978, %v1986
      %v1991 = vsel %vm945, %v1980, %v1972
      %v1992 = vsel %vm945, %v1982, %v1974
      %v1993 = vsel %vm945, %v1984, %v1976
      %v1994 = vsel %vm945, %v1986, %v1978
      %v1995 = vmul.f32 %v1987, %v954
      %v1996 = vmul.f32 %v1991, %v958
      %v1997 = vmul.f32 %v1988, %v954
      %v1998 = vmul.f32 %v1992, %v958
      %v1999 = vmul.f32 %v1989, %v954
      %v2000 = vmul.f32 %v1993, %v958
      %v2001 = vmul.f32 %v1990, %v954
      %v2002 = vmul.f32 %v1994, %v958
      %s2003 = scalar_lea.vmem %s4, 80
      %v2004 = vld [vmem:[%s2003] sm:$0xf]
      %v2005 = vld [vmem:[%s2003 + $0x4] sm:$0xf]
      %v2006 = vld [vmem:[%s2003 + $0x8] sm:$0xf]
      %v2007 = vld [vmem:[%s2003 + $0xc] sm:$0xf]
      %v2008 = vpack.c.bf16 %v1997, %v1995
      %v2009 = vpack.c.bf16 %v1998, %v1996
      %v2010 = vpack.c.bf16 %v2001, %v1999
      %v2011 = vpack.c.bf16 %v2002, %v2000
      %v2016 = vunpack.c.l.b16 %v2004
      %v2017 = vunpack.c.l.b16 %v2005
      %v2018 = vunpack.c.l.b16 %v2006
      %v2019 = vunpack.c.l.b16 %v2007
      %v2020 = vpack.c.b16 %v2017, %v2016
      %v2021 = vpack.c.b16 %v2019, %v2018
      %v2023 = vsel %vm1520, %v2020, 0
      %v2026 = vsel %vm1520, %v2021, 0
      %2028 = vmatprep.subr.bf16.mxu0 %v2009
      %2029 = vmatpush1.bf16.msra.mxu0 %v2008
      %2030 = vmatprep.subr.bf16.mxu0 %v2011
      %2031 = vmatpush1.bf16.msra.mxu0 %v2010
      %2032 = vmatprep.subr.bf16.mxu0 0
      %2033 = vmatpush1.bf16.msra.mxu0 0
      %2034 = vmatprep.subr.bf16.mxu0 0
      %2035 = vmatpush1.bf16.msra.mxu0 0
      %2036 = vmatprep.subr.bf16.mxu0 0
      %2037 = vmatpush1.bf16.msra.mxu0 0
      %2038 = vmatprep.subr.bf16.mxu0 0
      %2039 = vmatpush1.bf16.msra.mxu0 0
      %2040 = vmatprep.subr.bf16.mxu0 0
      %2041 = vmatpush1.bf16.msra.mxu0 0
      %2042 = vmatprep.subr.bf16.mxu0 0
      %2043 = vmatpush1.bf16.msra.mxu0 0
      %2044 = vmatprep.subr.bf16.mxu0 0
      %2045 = vmatpush1.bf16.msra.mxu0 0
      %2046 = vmatprep.subr.bf16.mxu0 0
      %2047 = vmatpush1.bf16.msra.mxu0 0
      %2048 = vmatprep.subr.bf16.mxu0 0
      %2049 = vmatpush1.bf16.msra.mxu0 0
      %2050 = vmatprep.subr.bf16.mxu0 0
      %2051 = vmatpush1.bf16.msra.mxu0 0
      %2052 = vmatprep.subr.bf16.mxu0 0
      %2053 = vmatpush1.bf16.msra.mxu0 0
      %2054 = vmatprep.subr.bf16.mxu0 0
      %2055 = vmatpush1.bf16.msra.mxu0 0
      %2056 = vmatprep.subr.bf16.mxu0 0
      %2057 = vmatpush1.bf16.msra.mxu0 0
      %2058 = vmatprep.subr.bf16.mxu0 0
      %2059 = vmatpush1.bf16.msra.mxu0 0
      %2060 = vmatprep.mubr.bf16.mxu0 0
      %2061 = vmatmul.mubr.bf16.gmra.mrb[0].mxu0 %v2023
      %v2062 = vpop.f32.mrb[0].mxu0
      %v2063 = vadd.f32 0.0, %v2062
      %v2064 = vpop.f32.mrb[0].mxu0
      %v2065 = vadd.f32 0.0, %v2064
      %v2066 = vpop.f32.mrb[0].mxu0
      %v2067 = vadd.f32 0.0, %v2066
      %v2068 = vpop.f32.mrb[0].mxu0
      %v2069 = vadd.f32 0.0, %v2068
      %2070 = vmatprep.mubr.bf16.mxu0 0
      %2071 = vmatmul.mubr.bf16.gmra.mrb[0].mxu0 %v2026
      %v2072 = vpop.f32.mrb[0].mxu0
      %v2073 = vadd.f32 0.0, %v2072
      %v2074 = vpop.f32.mrb[0].mxu0
      %v2075 = vadd.f32 0.0, %v2074
      %v2076 = vpop.f32.mrb[0].mxu0
      %v2077 = vadd.f32 0.0, %v2076
      %v2078 = vpop.f32.mrb[0].mxu0
      %v2079 = vadd.f32 0.0, %v2078
      %2080 = vdwg.mxu0
      %v2081 = vadd.f32 %v1963, %v2063
      %v2082 = vadd.f32 %v1964, %v2065
      %v2083 = vadd.f32 %v1965, %v2067
      %v2084 = vadd.f32 %v1966, %v2069
      %v2085 = vadd.f32 %v1967, %v2073
      %v2086 = vadd.f32 %v1968, %v2075
      %v2087 = vadd.f32 %v1969, %v2077
      %v2088 = vadd.f32 %v1970, %v2079
      %2089 = vrot.lane.b32.xlu0 %v1421, 113
      %v2090 = vpop.permute.xlu0 %2089
      %2091 = vrot.lane.b32.xlu0 %v1423, 113
      %v2092 = vpop.permute.xlu0 %2091
      %2093 = vrot.lane.b32.xlu0 %v1425, 113
      %v2094 = vpop.permute.xlu0 %2093
      %2095 = vrot.lane.b32.xlu0 %v1427, 113
      %v2096 = vpop.permute.xlu0 %2095
      %2097 = vrot.lane.b32.xlu0 %v1422, 113
      %v2098 = vpop.permute.xlu0 %2097
      %2099 = vrot.lane.b32.xlu0 %v1424, 113
      %v2100 = vpop.permute.xlu0 %2099
      %2101 = vrot.lane.b32.xlu0 %v1426, 113
      %v2102 = vpop.permute.xlu0 %2101
      %2103 = vrot.lane.b32.xlu0 %v1428, 113
      %v2104 = vpop.permute.xlu0 %2103
      %v2105 = vsel %vm1057, %v2090, %v2098
      %v2106 = vsel %vm1057, %v2092, %v2100
      %v2107 = vsel %vm1057, %v2094, %v2102
      %v2108 = vsel %vm1057, %v2096, %v2104
      %v2109 = vsel %vm1057, %v2098, %v2090
      %v2110 = vsel %vm1057, %v2100, %v2092
      %v2111 = vsel %vm1057, %v2102, %v2094
      %v2112 = vsel %vm1057, %v2104, %v2096
      %v2113 = vmul.f32 %v2105, %v1066
      %v2114 = vmul.f32 %v2109, %v1070
      %v2115 = vmul.f32 %v2106, %v1066
      %v2116 = vmul.f32 %v2110, %v1070
      %v2117 = vmul.f32 %v2107, %v1066
      %v2118 = vmul.f32 %v2111, %v1070
      %v2119 = vmul.f32 %v2108, %v1066
      %v2120 = vmul.f32 %v2112, %v1070
      %s2121 = scalar_lea.vmem %s4, 96
      %v2122 = vld [vmem:[%s2121] sm:$0xf]
      %v2123 = vld [vmem:[%s2121 + $0x4] sm:$0xf]
      %v2124 = vld [vmem:[%s2121 + $0x8] sm:$0xf]
      %v2125 = vld [vmem:[%s2121 + $0xc] sm:$0xf]
      %v2126 = vpack.c.bf16 %v2115, %v2113
      %v2127 = vpack.c.bf16 %v2116, %v2114
      %v2128 = vpack.c.bf16 %v2119, %v2117
      %v2129 = vpack.c.bf16 %v2120, %v2118
      %v2134 = vunpack.c.l.b16 %v2122
      %v2135 = vunpack.c.l.b16 %v2123
      %v2136 = vunpack.c.l.b16 %v2124
      %v2137 = vunpack.c.l.b16 %v2125
      %v2138 = vpack.c.b16 %v2135, %v2134
      %v2139 = vpack.c.b16 %v2137, %v2136
      %v2141 = vsel %vm1520, %v2138, 0
      %v2144 = vsel %vm1520, %v2139, 0
      %2146 = vmatprep.subr.bf16.mxu0 %v2127
      %2147 = vmatpush1.bf16.msra.mxu0 %v2126
      %2148 = vmatprep.subr.bf16.mxu0 %v2129
      %2149 = vmatpush1.bf16.msra.mxu0 %v2128
      %2150 = vmatprep.subr.bf16.mxu0 0
      %2151 = vmatpush1.bf16.msra.mxu0 0
      %2152 = vmatprep.subr.bf16.mxu0 0
      %2153 = vmatpush1.bf16.msra.mxu0 0
      %2154 = vmatprep.subr.bf16.mxu0 0
      %2155 = vmatpush1.bf16.msra.mxu0 0
      %2156 = vmatprep.subr.bf16.mxu0 0
      %2157 = vmatpush1.bf16.msra.mxu0 0
      %2158 = vmatprep.subr.bf16.mxu0 0
      %2159 = vmatpush1.bf16.msra.mxu0 0
      %2160 = vmatprep.subr.bf16.mxu0 0
      %2161 = vmatpush1.bf16.msra.mxu0 0
      %2162 = vmatprep.subr.bf16.mxu0 0
      %2163 = vmatpush1.bf16.msra.mxu0 0
      %2164 = vmatprep.subr.bf16.mxu0 0
      %2165 = vmatpush1.bf16.msra.mxu0 0
      %2166 = vmatprep.subr.bf16.mxu0 0
      %2167 = vmatpush1.bf16.msra.mxu0 0
      %2168 = vmatprep.subr.bf16.mxu0 0
      %2169 = vmatpush1.bf16.msra.mxu0 0
      %2170 = vmatprep.subr.bf16.mxu0 0
      %2171 = vmatpush1.bf16.msra.mxu0 0
      %2172 = vmatprep.subr.bf16.mxu0 0
      %2173 = vmatpush1.bf16.msra.mxu0 0
      %2174 = vmatprep.subr.bf16.mxu0 0
      %2175 = vmatpush1.bf16.msra.mxu0 0
      %2176 = vmatprep.subr.bf16.mxu0 0
      %2177 = vmatpush1.bf16.msra.mxu0 0
      %2178 = vmatprep.mubr.bf16.mxu0 0
      %2179 = vmatmul.mubr.bf16.gmra.mrb[0].mxu0 %v2141
      %v2180 = vpop.f32.mrb[0].mxu0
      %v2181 = vadd.f32 0.0, %v2180
      %v2182 = vpop.f32.mrb[0].mxu0
      %v2183 = vadd.f32 0.0, %v2182
      %v2184 = vpop.f32.mrb[0].mxu0
      %v2185 = vadd.f32 0.0, %v2184
      %v2186 = vpop.f32.mrb[0].mxu0
      %v2187 = vadd.f32 0.0, %v2186
      %2188 = vmatprep.mubr.bf16.mxu0 0
      %2189 = vmatmul.mubr.bf16.gmra.mrb[0].mxu0 %v2144
      %v2190 = vpop.f32.mrb[0].mxu0
      %v2191 = vadd.f32 0.0, %v2190
      %v2192 = vpop.f32.mrb[0].mxu0
      %v2193 = vadd.f32 0.0, %v2192
      %v2194 = vpop.f32.mrb[0].mxu0
      %v2195 = vadd.f32 0.0, %v2194
      %v2196 = vpop.f32.mrb[0].mxu0
      %v2197 = vadd.f32 0.0, %v2196
      %2198 = vdwg.mxu0
      %v2199 = vadd.f32 %v2081, %v2181
      %v2200 = vadd.f32 %v2082, %v2183
      %v2201 = vadd.f32 %v2083, %v2185
      %v2202 = vadd.f32 %v2084, %v2187
      %v2203 = vadd.f32 %v2085, %v2191
      %v2204 = vadd.f32 %v2086, %v2193
      %v2205 = vadd.f32 %v2087, %v2195
      %v2206 = vadd.f32 %v2088, %v2197
      %2207 = vrot.lane.b32.xlu0 %v1421, 112
      %v2208 = vpop.permute.xlu0 %2207
      %2209 = vrot.lane.b32.xlu0 %v1423, 112
      %v2210 = vpop.permute.xlu0 %2209
      %2211 = vrot.lane.b32.xlu0 %v1425, 112
      %v2212 = vpop.permute.xlu0 %2211
      %2213 = vrot.lane.b32.xlu0 %v1427, 112
      %v2214 = vpop.permute.xlu0 %2213
      %2215 = vrot.lane.b32.xlu0 %v1422, 112
      %v2216 = vpop.permute.xlu0 %2215
      %2217 = vrot.lane.b32.xlu0 %v1424, 112
      %v2218 = vpop.permute.xlu0 %2217
      %2219 = vrot.lane.b32.xlu0 %v1426, 112
      %v2220 = vpop.permute.xlu0 %2219
      %2221 = vrot.lane.b32.xlu0 %v1428, 112
      %v2222 = vpop.permute.xlu0 %2221
      %v2223 = vsel %vm1169, %v2208, %v2216
      %v2224 = vsel %vm1169, %v2210, %v2218
      %v2225 = vsel %vm1169, %v2212, %v2220
      %v2226 = vsel %vm1169, %v2214, %v2222
      %v2227 = vsel %vm1169, %v2216, %v2208
      %v2228 = vsel %vm1169, %v2218, %v2210
      %v2229 = vsel %vm1169, %v2220, %v2212
      %v2230 = vsel %vm1169, %v2222, %v2214
      %v2231 = vmul.f32 %v2223, %v1178
      %v2232 = vmul.f32 %v2227, %v1182
      %v2233 = vmul.f32 %v2224, %v1178
      %v2234 = vmul.f32 %v2228, %v1182
      %v2235 = vmul.f32 %v2225, %v1178
      %v2236 = vmul.f32 %v2229, %v1182
      %v2237 = vmul.f32 %v2226, %v1178
      %v2238 = vmul.f32 %v2230, %v1182
      %s2239 = scalar_lea.vmem %s4, 112
      %v2240 = vld [vmem:[%s2239] sm:$0xf]
      %v2241 = vld [vmem:[%s2239 + $0x4] sm:$0xf]
      %v2242 = vld [vmem:[%s2239 + $0x8] sm:$0xf]
      %v2243 = vld [vmem:[%s2239 + $0xc] sm:$0xf]
      %v2244 = vpack.c.bf16 %v2233, %v2231
      %v2245 = vpack.c.bf16 %v2234, %v2232
      %v2246 = vpack.c.bf16 %v2237, %v2235
      %v2247 = vpack.c.bf16 %v2238, %v2236
      %v2252 = vunpack.c.l.b16 %v2240
      %v2253 = vunpack.c.l.b16 %v2241
      %v2254 = vunpack.c.l.b16 %v2242
      %v2255 = vunpack.c.l.b16 %v2243
      %v2256 = vpack.c.b16 %v2253, %v2252
      %v2257 = vpack.c.b16 %v2255, %v2254
      %v2259 = vsel %vm1520, %v2256, 0
      %v2262 = vsel %vm1520, %v2257, 0
      %2264 = vmatprep.subr.bf16.mxu0 %v2245
      %2265 = vmatpush1.bf16.msra.mxu0 %v2244
      %2266 = vmatprep.subr.bf16.mxu0 %v2247
      %2267 = vmatpush1.bf16.msra.mxu0 %v2246
      %2268 = vmatprep.subr.bf16.mxu0 0
      %2269 = vmatpush1.bf16.msra.mxu0 0
      %2270 = vmatprep.subr.bf16.mxu0 0
      %2271 = vmatpush1.bf16.msra.mxu0 0
      %2272 = vmatprep.subr.bf16.mxu0 0
      %2273 = vmatpush1.bf16.msra.mxu0 0
      %2274 = vmatprep.subr.bf16.mxu0 0
      %2275 = vmatpush1.bf16.msra.mxu0 0
      %2276 = vmatprep.subr.bf16.mxu0 0
      %2277 = vmatpush1.bf16.msra.mxu0 0
      %2278 = vmatprep.subr.bf16.mxu0 0
      %2279 = vmatpush1.bf16.msra.mxu0 0
      %2280 = vmatprep.subr.bf16.mxu0 0
      %2281 = vmatpush1.bf16.msra.mxu0 0
      %2282 = vmatprep.subr.bf16.mxu0 0
      %2283 = vmatpush1.bf16.msra.mxu0 0
      %2284 = vmatprep.subr.bf16.mxu0 0
      %2285 = vmatpush1.bf16.msra.mxu0 0
      %2286 = vmatprep.subr.bf16.mxu0 0
      %2287 = vmatpush1.bf16.msra.mxu0 0
      %2288 = vmatprep.subr.bf16.mxu0 0
      %2289 = vmatpush1.bf16.msra.mxu0 0
      %2290 = vmatprep.subr.bf16.mxu0 0
      %2291 = vmatpush1.bf16.msra.mxu0 0
      %2292 = vmatprep.subr.bf16.mxu0 0
      %2293 = vmatpush1.bf16.msra.mxu0 0
      %2294 = vmatprep.subr.bf16.mxu0 0
      %2295 = vmatpush1.bf16.msra.mxu0 0
      %2296 = vmatprep.mubr.bf16.mxu0 0
      %2297 = vmatmul.mubr.bf16.gmra.mrb[0].mxu0 %v2259
      %v2298 = vpop.f32.mrb[0].mxu0
      %v2299 = vadd.f32 0.0, %v2298
      %v2300 = vpop.f32.mrb[0].mxu0
      %v2301 = vadd.f32 0.0, %v2300
      %v2302 = vpop.f32.mrb[0].mxu0
      %v2303 = vadd.f32 0.0, %v2302
      %v2304 = vpop.f32.mrb[0].mxu0
      %v2305 = vadd.f32 0.0, %v2304
      %2306 = vmatprep.mubr.bf16.mxu0 0
      %2307 = vmatmul.mubr.bf16.gmra.mrb[0].mxu0 %v2262
      %v2308 = vpop.f32.mrb[0].mxu0
      %v2309 = vadd.f32 0.0, %v2308
      %v2310 = vpop.f32.mrb[0].mxu0
      %v2311 = vadd.f32 0.0, %v2310
      %v2312 = vpop.f32.mrb[0].mxu0
      %v2313 = vadd.f32 0.0, %v2312
      %v2314 = vpop.f32.mrb[0].mxu0
      %v2315 = vadd.f32 0.0, %v2314
      %2316 = vdwg.mxu0
      %v2317 = vadd.f32 %v2199, %v2299
      %v2318 = vadd.f32 %v2200, %v2301
      %v2319 = vadd.f32 %v2201, %v2303
      %v2320 = vadd.f32 %v2202, %v2305
      %v2321 = vadd.f32 %v2203, %v2309
      %v2322 = vadd.f32 %v2204, %v2311
      %v2323 = vadd.f32 %v2205, %v2313
      %v2324 = vadd.f32 %v2206, %v2315
      %2325 = vrot.lane.b32.xlu0 %v1421, 111
      %v2326 = vpop.permute.xlu0 %2325
      %2327 = vrot.lane.b32.xlu0 %v1423, 111
      %v2328 = vpop.permute.xlu0 %2327
      %2329 = vrot.lane.b32.xlu0 %v1425, 111
      %v2330 = vpop.permute.xlu0 %2329
      %2331 = vrot.lane.b32.xlu0 %v1427, 111
      %v2332 = vpop.permute.xlu0 %2331
      %2333 = vrot.lane.b32.xlu0 %v1422, 111
      %v2334 = vpop.permute.xlu0 %2333
      %2335 = vrot.lane.b32.xlu0 %v1424, 111
      %v2336 = vpop.permute.xlu0 %2335
      %2337 = vrot.lane.b32.xlu0 %v1426, 111
      %v2338 = vpop.permute.xlu0 %2337
      %2339 = vrot.lane.b32.xlu0 %v1428, 111
      %v2340 = vpop.permute.xlu0 %2339
      %v2341 = vsel %vm1281, %v2326, %v2334
      %v2342 = vsel %vm1281, %v2328, %v2336
      %v2343 = vsel %vm1281, %v2330, %v2338
      %v2344 = vsel %vm1281, %v2332, %v2340
      %v2345 = vsel %vm1281, %v2334, %v2326
      %v2346 = vsel %vm1281, %v2336, %v2328
      %v2347 = vsel %vm1281, %v2338, %v2330
      %v2348 = vsel %vm1281, %v2340, %v2332
      %v2349 = vmul.f32 %v2341, %v1290
      %v2350 = vmul.f32 %v2345, %v1294
      %v2351 = vmul.f32 %v2342, %v1290
      %v2352 = vmul.f32 %v2346, %v1294
      %v2353 = vmul.f32 %v2343, %v1290
      %v2354 = vmul.f32 %v2347, %v1294
      %v2355 = vmul.f32 %v2344, %v1290
      %v2356 = vmul.f32 %v2348, %v1294
      %s2357 = scalar_lea.vmem %s4, 128
      %v2358 = vld [vmem:[%s2357] sm:$0xf]
      %v2359 = vld [vmem:[%s2357 + $0x4] sm:$0xf]
      %v2360 = vld [vmem:[%s2357 + $0x8] sm:$0xf]
      %v2361 = vld [vmem:[%s2357 + $0xc] sm:$0xf]
      %v2362 = vpack.c.bf16 %v2351, %v2349
      %v2363 = vpack.c.bf16 %v2352, %v2350
      %v2364 = vpack.c.bf16 %v2355, %v2353
      %v2365 = vpack.c.bf16 %v2356, %v2354
      %v2370 = vunpack.c.l.b16 %v2358
      %v2371 = vunpack.c.l.b16 %v2359
      %v2372 = vunpack.c.l.b16 %v2360
      %v2373 = vunpack.c.l.b16 %v2361
      %v2374 = vpack.c.b16 %v2371, %v2370
      %v2375 = vpack.c.b16 %v2373, %v2372
      %v2377 = vsel %vm1520, %v2374, 0
      %v2380 = vsel %vm1520, %v2375, 0
      %2382 = vmatprep.subr.bf16.mxu0 %v2363
      %2383 = vmatpush1.bf16.msra.mxu0 %v2362
      %2384 = vmatprep.subr.bf16.mxu0 %v2365
      %2385 = vmatpush1.bf16.msra.mxu0 %v2364
      %2386 = vmatprep.subr.bf16.mxu0 0
      %2387 = vmatpush1.bf16.msra.mxu0 0
      %2388 = vmatprep.subr.bf16.mxu0 0
      %2389 = vmatpush1.bf16.msra.mxu0 0
      %2390 = vmatprep.subr.bf16.mxu0 0
      %2391 = vmatpush1.bf16.msra.mxu0 0
      %2392 = vmatprep.subr.bf16.mxu0 0
      %2393 = vmatpush1.bf16.msra.mxu0 0
      %2394 = vmatprep.subr.bf16.mxu0 0
      %2395 = vmatpush1.bf16.msra.mxu0 0
      %2396 = vmatprep.subr.bf16.mxu0 0
      %2397 = vmatpush1.bf16.msra.mxu0 0
      %2398 = vmatprep.subr.bf16.mxu0 0
      %2399 = vmatpush1.bf16.msra.mxu0 0
      %2400 = vmatprep.subr.bf16.mxu0 0
      %2401 = vmatpush1.bf16.msra.mxu0 0
      %2402 = vmatprep.subr.bf16.mxu0 0
      %2403 = vmatpush1.bf16.msra.mxu0 0
      %2404 = vmatprep.subr.bf16.mxu0 0
      %2405 = vmatpush1.bf16.msra.mxu0 0
      %2406 = vmatprep.subr.bf16.mxu0 0
      %2407 = vmatpush1.bf16.msra.mxu0 0
      %2408 = vmatprep.subr.bf16.mxu0 0
      %2409 = vmatpush1.bf16.msra.mxu0 0
      %2410 = vmatprep.subr.bf16.mxu0 0
      %2411 = vmatpush1.bf16.msra.mxu0 0
      %2412 = vmatprep.subr.bf16.mxu0 0
      %2413 = vmatpush1.bf16.msra.mxu0 0
      %2414 = vmatprep.mubr.bf16.mxu0 0
      %2415 = vmatmul.mubr.bf16.gmra.mrb[0].mxu0 %v2377
      %v2416 = vpop.f32.mrb[0].mxu0
      %v2417 = vadd.f32 0.0, %v2416
      %v2418 = vpop.f32.mrb[0].mxu0
      %v2419 = vadd.f32 0.0, %v2418
      %v2420 = vpop.f32.mrb[0].mxu0
      %v2421 = vadd.f32 0.0, %v2420
      %v2422 = vpop.f32.mrb[0].mxu0
      %v2423 = vadd.f32 0.0, %v2422
      %2424 = vmatprep.mubr.bf16.mxu0 0
      %2425 = vmatmul.mubr.bf16.gmra.mrb[0].mxu0 %v2380
      %v2426 = vpop.f32.mrb[0].mxu0
      %v2427 = vadd.f32 0.0, %v2426
      %v2428 = vpop.f32.mrb[0].mxu0
      %v2429 = vadd.f32 0.0, %v2428
      %v2430 = vpop.f32.mrb[0].mxu0
      %v2431 = vadd.f32 0.0, %v2430
      %v2432 = vpop.f32.mrb[0].mxu0
      %v2433 = vadd.f32 0.0, %v2432
      %2434 = vdwg.mxu0
      %v2435 = vadd.f32 %v2317, %v2417
      %v2436 = vadd.f32 %v2318, %v2419
      %v2437 = vadd.f32 %v2319, %v2421
      %v2438 = vadd.f32 %v2320, %v2423
      %v2439 = vadd.f32 %v2321, %v2427
      %v2440 = vadd.f32 %v2322, %v2429
      %v2441 = vadd.f32 %v2323, %v2431
      %v2442 = vadd.f32 %v2324, %v2433
      %v2443 = vld [vmem:[%s5] sm:$0xff]
      %v2444 = vld [vmem:[%s5 + $0x8] sm:$0xff]
      %v2445 = vld [vmem:[%s5 + $0x10] sm:$0xff]
      %v2446 = vld [vmem:[%s5 + $0x18] sm:$0xff]
      %2448 = vset.pattern.permute.xlu0 0
      %2449 = vperm.xlu0 %2448, %v2443
      %v2450 = vpop.permute.xlu0 %2449
      %2453 = vset.pattern.permute.xlu0 0
      %2454 = vperm.xlu0 %2453, %v2444
      %v2455 = vpop.permute.xlu0 %2454
      %2458 = vset.pattern.permute.xlu0 0
      %2459 = vperm.xlu0 %2458, %v2445
      %v2460 = vpop.permute.xlu0 %2459
      %2463 = vset.pattern.permute.xlu0 0
      %2464 = vperm.xlu0 %2463, %v2446
      %v2465 = vpop.permute.xlu0 %2464
      %v2467 = vadd.f32 %v2435, %v2450
      %v2468 = vadd.f32 %v2436, %v2450
      %v2469 = vadd.f32 %v2437, %v2455
      %v2470 = vadd.f32 %v2438, %v2455
      %v2471 = vadd.f32 %v2439, %v2460
      %v2472 = vadd.f32 %v2440, %v2460
      %v2473 = vadd.f32 %v2441, %v2465
      %v2474 = vadd.f32 %v2442, %v2465
      %v2475 = vmax.f32 %v2467, 0.0
      %v2476 = vmax.f32 %v2468, 0.0
      %v2477 = vmax.f32 %v2469, 0.0
      %v2478 = vmax.f32 %v2470, 0.0
      %v2479 = vmax.f32 %v2471, 0.0
      %v2480 = vmax.f32 %v2472, 0.0
      %v2481 = vmax.f32 %v2473, 0.0
      %v2482 = vmax.f32 %v2474, 0.0
      %2483 = vrot.lane.b32.xlu0 %v2475, 17
      %v2484 = vpop.permute.xlu0 %2483
      %2485 = vrot.lane.b32.xlu0 %v2477, 17
      %v2486 = vpop.permute.xlu0 %2485
      %2487 = vrot.lane.b32.xlu0 %v2479, 17
      %v2488 = vpop.permute.xlu0 %2487
      %2489 = vrot.lane.b32.xlu0 %v2481, 17
      %v2490 = vpop.permute.xlu0 %2489
      %2491 = vrot.lane.b32.xlu0 %v2476, 17
      %v2492 = vpop.permute.xlu0 %2491
      %2493 = vrot.lane.b32.xlu0 %v2478, 17
      %v2494 = vpop.permute.xlu0 %2493
      %2495 = vrot.lane.b32.xlu0 %v2480, 17
      %v2496 = vpop.permute.xlu0 %2495
      %2497 = vrot.lane.b32.xlu0 %v2482, 17
      %v2498 = vpop.permute.xlu0 %2497
      %v2499 = vsel %vm423, %v2484, %v2492
      %v2500 = vsel %vm423, %v2486, %v2494
      %v2501 = vsel %vm423, %v2488, %v2496
      %v2502 = vsel %vm423, %v2490, %v2498
      %v2503 = vsel %vm423, %v2492, %v2484
      %v2504 = vsel %vm423, %v2494, %v2486
      %v2505 = vsel %vm423, %v2496, %v2488
      %v2506 = vsel %vm423, %v2498, %v2490
      %v2507 = vmul.f32 %v2503, %v431
      %v2508 = vmul.f32 %v2499, %v435
      %v2509 = vmul.f32 %v2504, %v431
      %v2510 = vmul.f32 %v2500, %v435
      %v2511 = vmul.f32 %v2505, %v431
      %v2512 = vmul.f32 %v2501, %v435
      %v2513 = vmul.f32 %v2506, %v431
      %v2514 = vmul.f32 %v2502, %v435
      %v2515 = vld [vmem:[%s6] sm:$0xf]
      %v2516 = vld [vmem:[%s6 + $0x4] sm:$0xf]
      %v2517 = vld [vmem:[%s6 + $0x8] sm:$0xf]
      %v2518 = vld [vmem:[%s6 + $0xc] sm:$0xf]
      %v2519 = vpack.c.bf16 %v2509, %v2507
      %v2520 = vpack.c.bf16 %v2510, %v2508
      %v2521 = vpack.c.bf16 %v2513, %v2511
      %v2522 = vpack.c.bf16 %v2514, %v2512
      %2523 = vrot.lane.b32.xlu0 %v2475, 16
      %v2524 = vpop.permute.xlu0 %2523
      %2525 = vrot.lane.b32.xlu0 %v2477, 16
      %v2526 = vpop.permute.xlu0 %2525
      %2527 = vrot.lane.b32.xlu0 %v2479, 16
      %v2528 = vpop.permute.xlu0 %2527
      %2529 = vrot.lane.b32.xlu0 %v2481, 16
      %v2530 = vpop.permute.xlu0 %2529
      %2531 = vrot.lane.b32.xlu0 %v2476, 16
      %v2532 = vpop.permute.xlu0 %2531
      %2533 = vrot.lane.b32.xlu0 %v2478, 16
      %v2534 = vpop.permute.xlu0 %2533
      %2535 = vrot.lane.b32.xlu0 %v2480, 16
      %v2536 = vpop.permute.xlu0 %2535
      %2537 = vrot.lane.b32.xlu0 %v2482, 16
      %v2538 = vpop.permute.xlu0 %2537
      %v2539 = vsel %vm450, %v2524, %v2532
      %v2540 = vsel %vm450, %v2526, %v2534
      %v2541 = vsel %vm450, %v2528, %v2536
      %v2542 = vsel %vm450, %v2530, %v2538
      %v2543 = vsel %vm450, %v2532, %v2524
      %v2544 = vsel %vm450, %v2534, %v2526
      %v2545 = vsel %vm450, %v2536, %v2528
      %v2546 = vsel %vm450, %v2538, %v2530
      %v2547 = vmul.f32 %v2543, %v459
      %v2548 = vmul.f32 %v2539, %v463
      %v2549 = vmul.f32 %v2544, %v459
      %v2550 = vmul.f32 %v2540, %v463
      %v2551 = vmul.f32 %v2545, %v459
      %v2552 = vmul.f32 %v2541, %v463
      %v2553 = vmul.f32 %v2546, %v459
      %v2554 = vmul.f32 %v2542, %v463
      %s2555 = scalar_lea.vmem %s6, 16
      %v2556 = vld [vmem:[%s2555] sm:$0xf]
      %v2557 = vld [vmem:[%s2555 + $0x4] sm:$0xf]
      %v2558 = vld [vmem:[%s2555 + $0x8] sm:$0xf]
      %v2559 = vld [vmem:[%s2555 + $0xc] sm:$0xf]
      %v2560 = vpack.c.bf16 %v2549, %v2547
      %v2561 = vpack.c.bf16 %v2550, %v2548
      %v2562 = vpack.c.bf16 %v2553, %v2551
      %v2563 = vpack.c.bf16 %v2554, %v2552
      %v2568 = vunpack.c.l.b16 %v2556
      %v2569 = vunpack.c.l.b16 %v2557
      %v2570 = vunpack.c.l.b16 %v2558
      %v2571 = vunpack.c.l.b16 %v2559
      %v2572 = vpack.c.b16 %v2569, %v2568
      %v2573 = vpack.c.b16 %v2571, %v2570
      %v2575 = vsel %vm1520, %v2572, 0
      %v2578 = vsel %vm1520, %v2573, 0
      %2580 = vmatprep.subr.bf16.mxu0 %v2561
      %2581 = vmatpush1.bf16.msra.mxu0 %v2560
      %2582 = vmatprep.subr.bf16.mxu0 %v2563
      %2583 = vmatpush1.bf16.msra.mxu0 %v2562
      %2584 = vmatprep.subr.bf16.mxu0 0
      %2585 = vmatpush1.bf16.msra.mxu0 0
      %2586 = vmatprep.subr.bf16.mxu0 0
      %2587 = vmatpush1.bf16.msra.mxu0 0
      %2588 = vmatprep.subr.bf16.mxu0 0
      %2589 = vmatpush1.bf16.msra.mxu0 0
      %2590 = vmatprep.subr.bf16.mxu0 0
      %2591 = vmatpush1.bf16.msra.mxu0 0
      %2592 = vmatprep.subr.bf16.mxu0 0
      %2593 = vmatpush1.bf16.msra.mxu0 0
      %2594 = vmatprep.subr.bf16.mxu0 0
      %2595 = vmatpush1.bf16.msra.mxu0 0
      %2596 = vmatprep.subr.bf16.mxu0 0
      %2597 = vmatpush1.bf16.msra.mxu0 0
      %2598 = vmatprep.subr.bf16.mxu0 0
      %2599 = vmatpush1.bf16.msra.mxu0 0
      %2600 = vmatprep.subr.bf16.mxu0 0
      %2601 = vmatpush1.bf16.msra.mxu0 0
      %2602 = vmatprep.subr.bf16.mxu0 0
      %2603 = vmatpush1.bf16.msra.mxu0 0
      %2604 = vmatprep.subr.bf16.mxu0 0
      %2605 = vmatpush1.bf16.msra.mxu0 0
      %2606 = vmatprep.subr.bf16.mxu0 0
      %2607 = vmatpush1.bf16.msra.mxu0 0
      %2608 = vmatprep.subr.bf16.mxu0 0
      %2609 = vmatpush1.bf16.msra.mxu0 0
      %2610 = vmatprep.subr.bf16.mxu0 0
      %2611 = vmatpush1.bf16.msra.mxu0 0
      %2612 = vmatprep.mubr.bf16.mxu0 0
      %2613 = vmatmul.mubr.bf16.gmra.mrb[0].mxu0 %v2575
      %v2614 = vpop.f32.mrb[0].mxu0
      %v2615 = vadd.f32 0.0, %v2614
      %v2616 = vpop.f32.mrb[0].mxu0
      %v2617 = vadd.f32 0.0, %v2616
      %v2618 = vpop.f32.mrb[0].mxu0
      %v2619 = vadd.f32 0.0, %v2618
      %v2620 = vpop.f32.mrb[0].mxu0
      %v2621 = vadd.f32 0.0, %v2620
      %2622 = vmatprep.mubr.bf16.mxu0 0
      %2623 = vmatmul.mubr.bf16.gmra.mrb[0].mxu0 %v2578
      %v2624 = vpop.f32.mrb[0].mxu0
      %v2625 = vadd.f32 0.0, %v2624
      %v2626 = vpop.f32.mrb[0].mxu0
      %v2627 = vadd.f32 0.0, %v2626
      %v2628 = vpop.f32.mrb[0].mxu0
      %v2629 = vadd.f32 0.0, %v2628
      %v2630 = vpop.f32.mrb[0].mxu0
      %v2631 = vadd.f32 0.0, %v2630
      %2632 = vdwg.mxu0
      %v2637 = vunpack.c.l.b16 %v2515
      %v2638 = vunpack.c.l.b16 %v2516
      %v2639 = vunpack.c.l.b16 %v2517
      %v2640 = vunpack.c.l.b16 %v2518
      %v2641 = vpack.c.b16 %v2638, %v2637
      %v2642 = vpack.c.b16 %v2640, %v2639
      %v2644 = vsel %vm1520, %v2641, 0
      %v2647 = vsel %vm1520, %v2642, 0
      %2649 = vmatprep.subr.bf16.mxu0 %v2520
      %2650 = vmatpush1.bf16.msra.mxu0 %v2519
      %2651 = vmatprep.subr.bf16.mxu0 %v2522
      %2652 = vmatpush1.bf16.msra.mxu0 %v2521
      %2653 = vmatprep.subr.bf16.mxu0 0
      %2654 = vmatpush1.bf16.msra.mxu0 0
      %2655 = vmatprep.subr.bf16.mxu0 0
      %2656 = vmatpush1.bf16.msra.mxu0 0
      %2657 = vmatprep.subr.bf16.mxu0 0
      %2658 = vmatpush1.bf16.msra.mxu0 0
      %2659 = vmatprep.subr.bf16.mxu0 0
      %2660 = vmatpush1.bf16.msra.mxu0 0
      %2661 = vmatprep.subr.bf16.mxu0 0
      %2662 = vmatpush1.bf16.msra.mxu0 0
      %2663 = vmatprep.subr.bf16.mxu0 0
      %2664 = vmatpush1.bf16.msra.mxu0 0
      %2665 = vmatprep.subr.bf16.mxu0 0
      %2666 = vmatpush1.bf16.msra.mxu0 0
      %2667 = vmatprep.subr.bf16.mxu0 0
      %2668 = vmatpush1.bf16.msra.mxu0 0
      %2669 = vmatprep.subr.bf16.mxu0 0
      %2670 = vmatpush1.bf16.msra.mxu0 0
      %2671 = vmatprep.subr.bf16.mxu0 0
      %2672 = vmatpush1.bf16.msra.mxu0 0
      %2673 = vmatprep.subr.bf16.mxu0 0
      %2674 = vmatpush1.bf16.msra.mxu0 0
      %2675 = vmatprep.subr.bf16.mxu0 0
      %2676 = vmatpush1.bf16.msra.mxu0 0
      %2677 = vmatprep.subr.bf16.mxu0 0
      %2678 = vmatpush1.bf16.msra.mxu0 0
      %2679 = vmatprep.subr.bf16.mxu0 0
      %2680 = vmatpush1.bf16.msra.mxu0 0
      %2681 = vmatprep.mubr.bf16.mxu0 0
      %2682 = vmatmul.mubr.bf16.gmra.mrb[0].mxu0 %v2644
      %v2683 = vpop.f32.mrb[0].mxu0
      %v2684 = vadd.f32 %v2615, %v2683
      %v2685 = vpop.f32.mrb[0].mxu0
      %v2686 = vadd.f32 %v2617, %v2685
      %v2687 = vpop.f32.mrb[0].mxu0
      %v2688 = vadd.f32 %v2619, %v2687
      %v2689 = vpop.f32.mrb[0].mxu0
      %v2690 = vadd.f32 %v2621, %v2689
      %2691 = vmatprep.mubr.bf16.mxu0 0
      %2692 = vmatmul.mubr.bf16.gmra.mrb[0].mxu0 %v2647
      %v2693 = vpop.f32.mrb[0].mxu0
      %v2694 = vadd.f32 %v2625, %v2693
      %v2695 = vpop.f32.mrb[0].mxu0
      %v2696 = vadd.f32 %v2627, %v2695
      %v2697 = vpop.f32.mrb[0].mxu0
      %v2698 = vadd.f32 %v2629, %v2697
      %v2699 = vpop.f32.mrb[0].mxu0
      %v2700 = vadd.f32 %v2631, %v2699
      %2701 = vdwg.mxu0
      %2702 = vrot.lane.b32.xlu0 %v2475, 15
      %v2703 = vpop.permute.xlu0 %2702
      %2704 = vrot.lane.b32.xlu0 %v2477, 15
      %v2705 = vpop.permute.xlu0 %2704
      %2706 = vrot.lane.b32.xlu0 %v2479, 15
      %v2707 = vpop.permute.xlu0 %2706
      %2708 = vrot.lane.b32.xlu0 %v2481, 15
      %v2709 = vpop.permute.xlu0 %2708
      %2710 = vrot.lane.b32.xlu0 %v2476, 15
      %v2711 = vpop.permute.xlu0 %2710
      %2712 = vrot.lane.b32.xlu0 %v2478, 15
      %v2713 = vpop.permute.xlu0 %2712
      %2714 = vrot.lane.b32.xlu0 %v2480, 15
      %v2715 = vpop.permute.xlu0 %2714
      %2716 = vrot.lane.b32.xlu0 %v2482, 15
      %v2717 = vpop.permute.xlu0 %2716
      %v2718 = vsel %vm631, %v2703, %v2711
      %v2719 = vsel %vm631, %v2705, %v2713
      %v2720 = vsel %vm631, %v2707, %v2715
      %v2721 = vsel %vm631, %v2709, %v2717
      %v2722 = vsel %vm631, %v2711, %v2703
      %v2723 = vsel %vm631, %v2713, %v2705
      %v2724 = vsel %vm631, %v2715, %v2707
      %v2725 = vsel %vm631, %v2717, %v2709
      %v2726 = vmul.f32 %v2722, %v640
      %v2727 = vmul.f32 %v2718, %v644
      %v2728 = vmul.f32 %v2723, %v640
      %v2729 = vmul.f32 %v2719, %v644
      %v2730 = vmul.f32 %v2724, %v640
      %v2731 = vmul.f32 %v2720, %v644
      %v2732 = vmul.f32 %v2725, %v640
      %v2733 = vmul.f32 %v2721, %v644
      %s2734 = scalar_lea.vmem %s6, 32
      %v2735 = vld [vmem:[%s2734] sm:$0xf]
      %v2736 = vld [vmem:[%s2734 + $0x4] sm:$0xf]
      %v2737 = vld [vmem:[%s2734 + $0x8] sm:$0xf]
      %v2738 = vld [vmem:[%s2734 + $0xc] sm:$0xf]
      %v2739 = vpack.c.bf16 %v2728, %v2726
      %v2740 = vpack.c.bf16 %v2729, %v2727
      %v2741 = vpack.c.bf16 %v2732, %v2730
      %v2742 = vpack.c.bf16 %v2733, %v2731
      %v2747 = vunpack.c.l.b16 %v2735
      %v2748 = vunpack.c.l.b16 %v2736
      %v2749 = vunpack.c.l.b16 %v2737
      %v2750 = vunpack.c.l.b16 %v2738
      %v2751 = vpack.c.b16 %v2748, %v2747
      %v2752 = vpack.c.b16 %v2750, %v2749
      %v2754 = vsel %vm1520, %v2751, 0
      %v2757 = vsel %vm1520, %v2752, 0
      %2759 = vmatprep.subr.bf16.mxu0 %v2740
      %2760 = vmatpush1.bf16.msra.mxu0 %v2739
      %2761 = vmatprep.subr.bf16.mxu0 %v2742
      %2762 = vmatpush1.bf16.msra.mxu0 %v2741
      %2763 = vmatprep.subr.bf16.mxu0 0
      %2764 = vmatpush1.bf16.msra.mxu0 0
      %2765 = vmatprep.subr.bf16.mxu0 0
      %2766 = vmatpush1.bf16.msra.mxu0 0
      %2767 = vmatprep.subr.bf16.mxu0 0
      %2768 = vmatpush1.bf16.msra.mxu0 0
      %2769 = vmatprep.subr.bf16.mxu0 0
      %2770 = vmatpush1.bf16.msra.mxu0 0
      %2771 = vmatprep.subr.bf16.mxu0 0
      %2772 = vmatpush1.bf16.msra.mxu0 0
      %2773 = vmatprep.subr.bf16.mxu0 0
      %2774 = vmatpush1.bf16.msra.mxu0 0
      %2775 = vmatprep.subr.bf16.mxu0 0
      %2776 = vmatpush1.bf16.msra.mxu0 0
      %2777 = vmatprep.subr.bf16.mxu0 0
      %2778 = vmatpush1.bf16.msra.mxu0 0
      %2779 = vmatprep.subr.bf16.mxu0 0
      %2780 = vmatpush1.bf16.msra.mxu0 0
      %2781 = vmatprep.subr.bf16.mxu0 0
      %2782 = vmatpush1.bf16.msra.mxu0 0
      %2783 = vmatprep.subr.bf16.mxu0 0
      %2784 = vmatpush1.bf16.msra.mxu0 0
      %2785 = vmatprep.subr.bf16.mxu0 0
      %2786 = vmatpush1.bf16.msra.mxu0 0
      %2787 = vmatprep.subr.bf16.mxu0 0
      %2788 = vmatpush1.bf16.msra.mxu0 0
      %2789 = vmatprep.subr.bf16.mxu0 0
      %2790 = vmatpush1.bf16.msra.mxu0 0
      %2791 = vmatprep.mubr.bf16.mxu0 0
      %2792 = vmatmul.mubr.bf16.gmra.mrb[0].mxu0 %v2754
      %v2793 = vpop.f32.mrb[0].mxu0
      %v2794 = vadd.f32 0.0, %v2793
      %v2795 = vpop.f32.mrb[0].mxu0
      %v2796 = vadd.f32 0.0, %v2795
      %v2797 = vpop.f32.mrb[0].mxu0
      %v2798 = vadd.f32 0.0, %v2797
      %v2799 = vpop.f32.mrb[0].mxu0
      %v2800 = vadd.f32 0.0, %v2799
      %2801 = vmatprep.mubr.bf16.mxu0 0
      %2802 = vmatmul.mubr.bf16.gmra.mrb[0].mxu0 %v2757
      %v2803 = vpop.f32.mrb[0].mxu0
      %v2804 = vadd.f32 0.0, %v2803
      %v2805 = vpop.f32.mrb[0].mxu0
      %v2806 = vadd.f32 0.0, %v2805
      %v2807 = vpop.f32.mrb[0].mxu0
      %v2808 = vadd.f32 0.0, %v2807
      %v2809 = vpop.f32.mrb[0].mxu0
      %v2810 = vadd.f32 0.0, %v2809
      %2811 = vdwg.mxu0
      %v2812 = vadd.f32 %v2684, %v2794
      %v2813 = vadd.f32 %v2686, %v2796
      %v2814 = vadd.f32 %v2688, %v2798
      %v2815 = vadd.f32 %v2690, %v2800
      %v2816 = vadd.f32 %v2694, %v2804
      %v2817 = vadd.f32 %v2696, %v2806
      %v2818 = vadd.f32 %v2698, %v2808
      %v2819 = vadd.f32 %v2700, %v2810
      %2820 = vrot.lane.b32.xlu0 %v2475, 1
      %v2821 = vpop.permute.xlu0 %2820
      %2822 = vrot.lane.b32.xlu0 %v2477, 1
      %v2823 = vpop.permute.xlu0 %2822
      %2824 = vrot.lane.b32.xlu0 %v2479, 1
      %v2825 = vpop.permute.xlu0 %2824
      %2826 = vrot.lane.b32.xlu0 %v2481, 1
      %v2827 = vpop.permute.xlu0 %2826
      %2828 = vrot.lane.b32.xlu0 %v2476, 1
      %v2829 = vpop.permute.xlu0 %2828
      %2830 = vrot.lane.b32.xlu0 %v2478, 1
      %v2831 = vpop.permute.xlu0 %2830
      %2832 = vrot.lane.b32.xlu0 %v2480, 1
      %v2833 = vpop.permute.xlu0 %2832
      %2834 = vrot.lane.b32.xlu0 %v2482, 1
      %v2835 = vpop.permute.xlu0 %2834
      %v2836 = vsel %vm743, %v2821, %v2829
      %v2837 = vsel %vm743, %v2823, %v2831
      %v2838 = vsel %vm743, %v2825, %v2833
      %v2839 = vsel %vm743, %v2827, %v2835
      %v2840 = vsel %vm743, %v2829, %v2821
      %v2841 = vsel %vm743, %v2831, %v2823
      %v2842 = vsel %vm743, %v2833, %v2825
      %v2843 = vsel %vm743, %v2835, %v2827
      %v2844 = vmul.f32 %v2840, %v752
      %v2845 = vmul.f32 %v2836, %v756
      %v2846 = vmul.f32 %v2841, %v752
      %v2847 = vmul.f32 %v2837, %v756
      %v2848 = vmul.f32 %v2842, %v752
      %v2849 = vmul.f32 %v2838, %v756
      %v2850 = vmul.f32 %v2843, %v752
      %v2851 = vmul.f32 %v2839, %v756
      %s2852 = scalar_lea.vmem %s6, 48
      %v2853 = vld [vmem:[%s2852] sm:$0xf]
      %v2854 = vld [vmem:[%s2852 + $0x4] sm:$0xf]
      %v2855 = vld [vmem:[%s2852 + $0x8] sm:$0xf]
      %v2856 = vld [vmem:[%s2852 + $0xc] sm:$0xf]
      %v2857 = vpack.c.bf16 %v2846, %v2844
      %v2858 = vpack.c.bf16 %v2847, %v2845
      %v2859 = vpack.c.bf16 %v2850, %v2848
      %v2860 = vpack.c.bf16 %v2851, %v2849
      %v2865 = vunpack.c.l.b16 %v2853
      %v2866 = vunpack.c.l.b16 %v2854
      %v2867 = vunpack.c.l.b16 %v2855
      %v2868 = vunpack.c.l.b16 %v2856
      %v2869 = vpack.c.b16 %v2866, %v2865
      %v2870 = vpack.c.b16 %v2868, %v2867
      %v2872 = vsel %vm1520, %v2869, 0
      %v2875 = vsel %vm1520, %v2870, 0
      %2877 = vmatprep.subr.bf16.mxu0 %v2858
      %2878 = vmatpush1.bf16.msra.mxu0 %v2857
      %2879 = vmatprep.subr.bf16.mxu0 %v2860
      %2880 = vmatpush1.bf16.msra.mxu0 %v2859
      %2881 = vmatprep.subr.bf16.mxu0 0
      %2882 = vmatpush1.bf16.msra.mxu0 0
      %2883 = vmatprep.subr.bf16.mxu0 0
      %2884 = vmatpush1.bf16.msra.mxu0 0
      %2885 = vmatprep.subr.bf16.mxu0 0
      %2886 = vmatpush1.bf16.msra.mxu0 0
      %2887 = vmatprep.subr.bf16.mxu0 0
      %2888 = vmatpush1.bf16.msra.mxu0 0
      %2889 = vmatprep.subr.bf16.mxu0 0
      %2890 = vmatpush1.bf16.msra.mxu0 0
      %2891 = vmatprep.subr.bf16.mxu0 0
      %2892 = vmatpush1.bf16.msra.mxu0 0
      %2893 = vmatprep.subr.bf16.mxu0 0
      %2894 = vmatpush1.bf16.msra.mxu0 0
      %2895 = vmatprep.subr.bf16.mxu0 0
      %2896 = vmatpush1.bf16.msra.mxu0 0
      %2897 = vmatprep.subr.bf16.mxu0 0
      %2898 = vmatpush1.bf16.msra.mxu0 0
      %2899 = vmatprep.subr.bf16.mxu0 0
      %2900 = vmatpush1.bf16.msra.mxu0 0
      %2901 = vmatprep.subr.bf16.mxu0 0
      %2902 = vmatpush1.bf16.msra.mxu0 0
      %2903 = vmatprep.subr.bf16.mxu0 0
      %2904 = vmatpush1.bf16.msra.mxu0 0
      %2905 = vmatprep.subr.bf16.mxu0 0
      %2906 = vmatpush1.bf16.msra.mxu0 0
      %2907 = vmatprep.subr.bf16.mxu0 0
      %2908 = vmatpush1.bf16.msra.mxu0 0
      %2909 = vmatprep.mubr.bf16.mxu0 0
      %2910 = vmatmul.mubr.bf16.gmra.mrb[0].mxu0 %v2872
      %v2911 = vpop.f32.mrb[0].mxu0
      %v2912 = vadd.f32 0.0, %v2911
      %v2913 = vpop.f32.mrb[0].mxu0
      %v2914 = vadd.f32 0.0, %v2913
      %v2915 = vpop.f32.mrb[0].mxu0
      %v2916 = vadd.f32 0.0, %v2915
      %v2917 = vpop.f32.mrb[0].mxu0
      %v2918 = vadd.f32 0.0, %v2917
      %2919 = vmatprep.mubr.bf16.mxu0 0
      %2920 = vmatmul.mubr.bf16.gmra.mrb[0].mxu0 %v2875
      %v2921 = vpop.f32.mrb[0].mxu0
      %v2922 = vadd.f32 0.0, %v2921
      %v2923 = vpop.f32.mrb[0].mxu0
      %v2924 = vadd.f32 0.0, %v2923
      %v2925 = vpop.f32.mrb[0].mxu0
      %v2926 = vadd.f32 0.0, %v2925
      %v2927 = vpop.f32.mrb[0].mxu0
      %v2928 = vadd.f32 0.0, %v2927
      %2929 = vdwg.mxu0
      %v2930 = vadd.f32 %v2812, %v2912
      %v2931 = vadd.f32 %v2813, %v2914
      %v2932 = vadd.f32 %v2814, %v2916
      %v2933 = vadd.f32 %v2815, %v2918
      %v2934 = vadd.f32 %v2816, %v2922
      %v2935 = vadd.f32 %v2817, %v2924
      %v2936 = vadd.f32 %v2818, %v2926
      %v2937 = vadd.f32 %v2819, %v2928
      %s2938 = scalar_lea.vmem %s6, 64
      %v2939 = vld [vmem:[%s2938] sm:$0xf]
      %v2940 = vld [vmem:[%s2938 + $0x4] sm:$0xf]
      %v2941 = vld [vmem:[%s2938 + $0x8] sm:$0xf]
      %v2942 = vld [vmem:[%s2938 + $0xc] sm:$0xf]
      %v2943 = vpack.c.bf16 %v2477, %v2475
      %v2944 = vpack.c.bf16 %v2478, %v2476
      %v2945 = vpack.c.bf16 %v2481, %v2479
      %v2946 = vpack.c.bf16 %v2482, %v2480
      %v2951 = vunpack.c.l.b16 %v2939
      %v2952 = vunpack.c.l.b16 %v2940
      %v2953 = vunpack.c.l.b16 %v2941
      %v2954 = vunpack.c.l.b16 %v2942
      %v2955 = vpack.c.b16 %v2952, %v2951
      %v2956 = vpack.c.b16 %v2954, %v2953
      %v2958 = vsel %vm1520, %v2955, 0
      %v2961 = vsel %vm1520, %v2956, 0
      %2963 = vmatprep.subr.bf16.mxu0 %v2944
      %2964 = vmatpush1.bf16.msra.mxu0 %v2943
      %2965 = vmatprep.subr.bf16.mxu0 %v2946
      %2966 = vmatpush1.bf16.msra.mxu0 %v2945
      %2967 = vmatprep.subr.bf16.mxu0 0
      %2968 = vmatpush1.bf16.msra.mxu0 0
      %2969 = vmatprep.subr.bf16.mxu0 0
      %2970 = vmatpush1.bf16.msra.mxu0 0
      %2971 = vmatprep.subr.bf16.mxu0 0
      %2972 = vmatpush1.bf16.msra.mxu0 0
      %2973 = vmatprep.subr.bf16.mxu0 0
      %2974 = vmatpush1.bf16.msra.mxu0 0
      %2975 = vmatprep.subr.bf16.mxu0 0
      %2976 = vmatpush1.bf16.msra.mxu0 0
      %2977 = vmatprep.subr.bf16.mxu0 0
      %2978 = vmatpush1.bf16.msra.mxu0 0
      %2979 = vmatprep.subr.bf16.mxu0 0
      %2980 = vmatpush1.bf16.msra.mxu0 0
      %2981 = vmatprep.subr.bf16.mxu0 0
      %2982 = vmatpush1.bf16.msra.mxu0 0
      %2983 = vmatprep.subr.bf16.mxu0 0
      %2984 = vmatpush1.bf16.msra.mxu0 0
      %2985 = vmatprep.subr.bf16.mxu0 0
      %2986 = vmatpush1.bf16.msra.mxu0 0
      %2987 = vmatprep.subr.bf16.mxu0 0
      %2988 = vmatpush1.bf16.msra.mxu0 0
      %2989 = vmatprep.subr.bf16.mxu0 0
      %2990 = vmatpush1.bf16.msra.mxu0 0
      %2991 = vmatprep.subr.bf16.mxu0 0
      %2992 = vmatpush1.bf16.msra.mxu0 0
      %2993 = vmatprep.subr.bf16.mxu0 0
      %2994 = vmatpush1.bf16.msra.mxu0 0
      %2995 = vmatprep.mubr.bf16.mxu0 0
      %2996 = vmatmul.mubr.bf16.gmra.mrb[0].mxu0 %v2958
      %v2997 = vpop.f32.mrb[0].mxu0
      %v2998 = vadd.f32 0.0, %v2997
      %v2999 = vpop.f32.mrb[0].mxu0
      %v3000 = vadd.f32 0.0, %v2999
      %v3001 = vpop.f32.mrb[0].mxu0
      %v3002 = vadd.f32 0.0, %v3001
      %v3003 = vpop.f32.mrb[0].mxu0
      %v3004 = vadd.f32 0.0, %v3003
      %3005 = vmatprep.mubr.bf16.mxu0 0
      %3006 = vmatmul.mubr.bf16.gmra.mrb[0].mxu0 %v2961
      %v3007 = vpop.f32.mrb[0].mxu0
      %v3008 = vadd.f32 0.0, %v3007
      %v3009 = vpop.f32.mrb[0].mxu0
      %v3010 = vadd.f32 0.0, %v3009
      %v3011 = vpop.f32.mrb[0].mxu0
      %v3012 = vadd.f32 0.0, %v3011
      %v3013 = vpop.f32.mrb[0].mxu0
      %v3014 = vadd.f32 0.0, %v3013
      %3015 = vdwg.mxu0
      %v3016 = vadd.f32 %v2930, %v2998
      %v3017 = vadd.f32 %v2931, %v3000
      %v3018 = vadd.f32 %v2932, %v3002
      %v3019 = vadd.f32 %v2933, %v3004
      %v3020 = vadd.f32 %v2934, %v3008
      %v3021 = vadd.f32 %v2935, %v3010
      %v3022 = vadd.f32 %v2936, %v3012
      %v3023 = vadd.f32 %v2937, %v3014
      %3024 = vrot.lane.b32.xlu0 %v2475, 127
      %v3025 = vpop.permute.xlu0 %3024
      %3026 = vrot.lane.b32.xlu0 %v2477, 127
      %v3027 = vpop.permute.xlu0 %3026
      %3028 = vrot.lane.b32.xlu0 %v2479, 127
      %v3029 = vpop.permute.xlu0 %3028
      %3030 = vrot.lane.b32.xlu0 %v2481, 127
      %v3031 = vpop.permute.xlu0 %3030
      %3032 = vrot.lane.b32.xlu0 %v2476, 127
      %v3033 = vpop.permute.xlu0 %3032
      %3034 = vrot.lane.b32.xlu0 %v2478, 127
      %v3035 = vpop.permute.xlu0 %3034
      %3036 = vrot.lane.b32.xlu0 %v2480, 127
      %v3037 = vpop.permute.xlu0 %3036
      %3038 = vrot.lane.b32.xlu0 %v2482, 127
      %v3039 = vpop.permute.xlu0 %3038
      %v3040 = vsel %vm945, %v3025, %v3033
      %v3041 = vsel %vm945, %v3027, %v3035
      %v3042 = vsel %vm945, %v3029, %v3037
      %v3043 = vsel %vm945, %v3031, %v3039
      %v3044 = vsel %vm945, %v3033, %v3025
      %v3045 = vsel %vm945, %v3035, %v3027
      %v3046 = vsel %vm945, %v3037, %v3029
      %v3047 = vsel %vm945, %v3039, %v3031
      %v3048 = vmul.f32 %v3040, %v954
      %v3049 = vmul.f32 %v3044, %v958
      %v3050 = vmul.f32 %v3041, %v954
      %v3051 = vmul.f32 %v3045, %v958
      %v3052 = vmul.f32 %v3042, %v954
      %v3053 = vmul.f32 %v3046, %v958
      %v3054 = vmul.f32 %v3043, %v954
      %v3055 = vmul.f32 %v3047, %v958
      %s3056 = scalar_lea.vmem %s6, 80
      %v3057 = vld [vmem:[%s3056] sm:$0xf]
      %v3058 = vld [vmem:[%s3056 + $0x4] sm:$0xf]
      %v3059 = vld [vmem:[%s3056 + $0x8] sm:$0xf]
      %v3060 = vld [vmem:[%s3056 + $0xc] sm:$0xf]
      %v3061 = vpack.c.bf16 %v3050, %v3048
      %v3062 = vpack.c.bf16 %v3051, %v3049
      %v3063 = vpack.c.bf16 %v3054, %v3052
      %v3064 = vpack.c.bf16 %v3055, %v3053
      %v3069 = vunpack.c.l.b16 %v3057
      %v3070 = vunpack.c.l.b16 %v3058
      %v3071 = vunpack.c.l.b16 %v3059
      %v3072 = vunpack.c.l.b16 %v3060
      %v3073 = vpack.c.b16 %v3070, %v3069
      %v3074 = vpack.c.b16 %v3072, %v3071
      %v3076 = vsel %vm1520, %v3073, 0
      %v3079 = vsel %vm1520, %v3074, 0
      %3081 = vmatprep.subr.bf16.mxu0 %v3062
      %3082 = vmatpush1.bf16.msra.mxu0 %v3061
      %3083 = vmatprep.subr.bf16.mxu0 %v3064
      %3084 = vmatpush1.bf16.msra.mxu0 %v3063
      %3085 = vmatprep.subr.bf16.mxu0 0
      %3086 = vmatpush1.bf16.msra.mxu0 0
      %3087 = vmatprep.subr.bf16.mxu0 0
      %3088 = vmatpush1.bf16.msra.mxu0 0
      %3089 = vmatprep.subr.bf16.mxu0 0
      %3090 = vmatpush1.bf16.msra.mxu0 0
      %3091 = vmatprep.subr.bf16.mxu0 0
      %3092 = vmatpush1.bf16.msra.mxu0 0
      %3093 = vmatprep.subr.bf16.mxu0 0
      %3094 = vmatpush1.bf16.msra.mxu0 0
      %3095 = vmatprep.subr.bf16.mxu0 0
      %3096 = vmatpush1.bf16.msra.mxu0 0
      %3097 = vmatprep.subr.bf16.mxu0 0
      %3098 = vmatpush1.bf16.msra.mxu0 0
      %3099 = vmatprep.subr.bf16.mxu0 0
      %3100 = vmatpush1.bf16.msra.mxu0 0
      %3101 = vmatprep.subr.bf16.mxu0 0
      %3102 = vmatpush1.bf16.msra.mxu0 0
      %3103 = vmatprep.subr.bf16.mxu0 0
      %3104 = vmatpush1.bf16.msra.mxu0 0
      %3105 = vmatprep.subr.bf16.mxu0 0
      %3106 = vmatpush1.bf16.msra.mxu0 0
      %3107 = vmatprep.subr.bf16.mxu0 0
      %3108 = vmatpush1.bf16.msra.mxu0 0
      %3109 = vmatprep.subr.bf16.mxu0 0
      %3110 = vmatpush1.bf16.msra.mxu0 0
      %3111 = vmatprep.subr.bf16.mxu0 0
      %3112 = vmatpush1.bf16.msra.mxu0 0
      %3113 = vmatprep.mubr.bf16.mxu0 0
      %3114 = vmatmul.mubr.bf16.gmra.mrb[0].mxu0 %v3076
      %v3115 = vpop.f32.mrb[0].mxu0
      %v3116 = vadd.f32 0.0, %v3115
      %v3117 = vpop.f32.mrb[0].mxu0
      %v3118 = vadd.f32 0.0, %v3117
      %v3119 = vpop.f32.mrb[0].mxu0
      %v3120 = vadd.f32 0.0, %v3119
      %v3121 = vpop.f32.mrb[0].mxu0
      %v3122 = vadd.f32 0.0, %v3121
      %3123 = vmatprep.mubr.bf16.mxu0 0
      %3124 = vmatmul.mubr.bf16.gmra.mrb[0].mxu0 %v3079
      %v3125 = vpop.f32.mrb[0].mxu0
      %v3126 = vadd.f32 0.0, %v3125
      %v3127 = vpop.f32.mrb[0].mxu0
      %v3128 = vadd.f32 0.0, %v3127
      %v3129 = vpop.f32.mrb[0].mxu0
      %v3130 = vadd.f32 0.0, %v3129
      %v3131 = vpop.f32.mrb[0].mxu0
      %v3132 = vadd.f32 0.0, %v3131
      %3133 = vdwg.mxu0
      %v3134 = vadd.f32 %v3016, %v3116
      %v3135 = vadd.f32 %v3017, %v3118
      %v3136 = vadd.f32 %v3018, %v3120
      %v3137 = vadd.f32 %v3019, %v3122
      %v3138 = vadd.f32 %v3020, %v3126
      %v3139 = vadd.f32 %v3021, %v3128
      %v3140 = vadd.f32 %v3022, %v3130
      %v3141 = vadd.f32 %v3023, %v3132
      %3142 = vrot.lane.b32.xlu0 %v2475, 113
      %v3143 = vpop.permute.xlu0 %3142
      %3144 = vrot.lane.b32.xlu0 %v2477, 113
      %v3145 = vpop.permute.xlu0 %3144
      %3146 = vrot.lane.b32.xlu0 %v2479, 113
      %v3147 = vpop.permute.xlu0 %3146
      %3148 = vrot.lane.b32.xlu0 %v2481, 113
      %v3149 = vpop.permute.xlu0 %3148
      %3150 = vrot.lane.b32.xlu0 %v2476, 113
      %v3151 = vpop.permute.xlu0 %3150
      %3152 = vrot.lane.b32.xlu0 %v2478, 113
      %v3153 = vpop.permute.xlu0 %3152
      %3154 = vrot.lane.b32.xlu0 %v2480, 113
      %v3155 = vpop.permute.xlu0 %3154
      %3156 = vrot.lane.b32.xlu0 %v2482, 113
      %v3157 = vpop.permute.xlu0 %3156
      %v3158 = vsel %vm1057, %v3143, %v3151
      %v3159 = vsel %vm1057, %v3145, %v3153
      %v3160 = vsel %vm1057, %v3147, %v3155
      %v3161 = vsel %vm1057, %v3149, %v3157
      %v3162 = vsel %vm1057, %v3151, %v3143
      %v3163 = vsel %vm1057, %v3153, %v3145
      %v3164 = vsel %vm1057, %v3155, %v3147
      %v3165 = vsel %vm1057, %v3157, %v3149
      %v3166 = vmul.f32 %v3158, %v1066
      %v3167 = vmul.f32 %v3162, %v1070
      %v3168 = vmul.f32 %v3159, %v1066
      %v3169 = vmul.f32 %v3163, %v1070
      %v3170 = vmul.f32 %v3160, %v1066
      %v3171 = vmul.f32 %v3164, %v1070
      %v3172 = vmul.f32 %v3161, %v1066
      %v3173 = vmul.f32 %v3165, %v1070
      %s3174 = scalar_lea.vmem %s6, 96
      %v3175 = vld [vmem:[%s3174] sm:$0xf]
      %v3176 = vld [vmem:[%s3174 + $0x4] sm:$0xf]
      %v3177 = vld [vmem:[%s3174 + $0x8] sm:$0xf]
      %v3178 = vld [vmem:[%s3174 + $0xc] sm:$0xf]
      %v3179 = vpack.c.bf16 %v3168, %v3166
      %v3180 = vpack.c.bf16 %v3169, %v3167
      %v3181 = vpack.c.bf16 %v3172, %v3170
      %v3182 = vpack.c.bf16 %v3173, %v3171
      %v3187 = vunpack.c.l.b16 %v3175
      %v3188 = vunpack.c.l.b16 %v3176
      %v3189 = vunpack.c.l.b16 %v3177
      %v3190 = vunpack.c.l.b16 %v3178
      %v3191 = vpack.c.b16 %v3188, %v3187
      %v3192 = vpack.c.b16 %v3190, %v3189
      %v3194 = vsel %vm1520, %v3191, 0
      %v3197 = vsel %vm1520, %v3192, 0
      %3199 = vmatprep.subr.bf16.mxu0 %v3180
      %3200 = vmatpush1.bf16.msra.mxu0 %v3179
      %3201 = vmatprep.subr.bf16.mxu0 %v3182
      %3202 = vmatpush1.bf16.msra.mxu0 %v3181
      %3203 = vmatprep.subr.bf16.mxu0 0
      %3204 = vmatpush1.bf16.msra.mxu0 0
      %3205 = vmatprep.subr.bf16.mxu0 0
      %3206 = vmatpush1.bf16.msra.mxu0 0
      %3207 = vmatprep.subr.bf16.mxu0 0
      %3208 = vmatpush1.bf16.msra.mxu0 0
      %3209 = vmatprep.subr.bf16.mxu0 0
      %3210 = vmatpush1.bf16.msra.mxu0 0
      %3211 = vmatprep.subr.bf16.mxu0 0
      %3212 = vmatpush1.bf16.msra.mxu0 0
      %3213 = vmatprep.subr.bf16.mxu0 0
      %3214 = vmatpush1.bf16.msra.mxu0 0
      %3215 = vmatprep.subr.bf16.mxu0 0
      %3216 = vmatpush1.bf16.msra.mxu0 0
      %3217 = vmatprep.subr.bf16.mxu0 0
      %3218 = vmatpush1.bf16.msra.mxu0 0
      %3219 = vmatprep.subr.bf16.mxu0 0
      %3220 = vmatpush1.bf16.msra.mxu0 0
      %3221 = vmatprep.subr.bf16.mxu0 0
      %3222 = vmatpush1.bf16.msra.mxu0 0
      %3223 = vmatprep.subr.bf16.mxu0 0
      %3224 = vmatpush1.bf16.msra.mxu0 0
      %3225 = vmatprep.subr.bf16.mxu0 0
      %3226 = vmatpush1.bf16.msra.mxu0 0
      %3227 = vmatprep.subr.bf16.mxu0 0
      %3228 = vmatpush1.bf16.msra.mxu0 0
      %3229 = vmatprep.subr.bf16.mxu0 0
      %3230 = vmatpush1.bf16.msra.mxu0 0
      %3231 = vmatprep.mubr.bf16.mxu0 0
      %3232 = vmatmul.mubr.bf16.gmra.mrb[0].mxu0 %v3194
      %v3233 = vpop.f32.mrb[0].mxu0
      %v3234 = vadd.f32 0.0, %v3233
      %v3235 = vpop.f32.mrb[0].mxu0
      %v3236 = vadd.f32 0.0, %v3235
      %v3237 = vpop.f32.mrb[0].mxu0
      %v3238 = vadd.f32 0.0, %v3237
      %v3239 = vpop.f32.mrb[0].mxu0
      %v3240 = vadd.f32 0.0, %v3239
      %3241 = vmatprep.mubr.bf16.mxu0 0
      %3242 = vmatmul.mubr.bf16.gmra.mrb[0].mxu0 %v3197
      %v3243 = vpop.f32.mrb[0].mxu0
      %v3244 = vadd.f32 0.0, %v3243
      %v3245 = vpop.f32.mrb[0].mxu0
      %v3246 = vadd.f32 0.0, %v3245
      %v3247 = vpop.f32.mrb[0].mxu0
      %v3248 = vadd.f32 0.0, %v3247
      %v3249 = vpop.f32.mrb[0].mxu0
      %v3250 = vadd.f32 0.0, %v3249
      %3251 = vdwg.mxu0
      %v3252 = vadd.f32 %v3134, %v3234
      %v3253 = vadd.f32 %v3135, %v3236
      %v3254 = vadd.f32 %v3136, %v3238
      %v3255 = vadd.f32 %v3137, %v3240
      %v3256 = vadd.f32 %v3138, %v3244
      %v3257 = vadd.f32 %v3139, %v3246
      %v3258 = vadd.f32 %v3140, %v3248
      %v3259 = vadd.f32 %v3141, %v3250
      %3260 = vrot.lane.b32.xlu0 %v2475, 112
      %v3261 = vpop.permute.xlu0 %3260
      %3262 = vrot.lane.b32.xlu0 %v2477, 112
      %v3263 = vpop.permute.xlu0 %3262
      %3264 = vrot.lane.b32.xlu0 %v2479, 112
      %v3265 = vpop.permute.xlu0 %3264
      %3266 = vrot.lane.b32.xlu0 %v2481, 112
      %v3267 = vpop.permute.xlu0 %3266
      %3268 = vrot.lane.b32.xlu0 %v2476, 112
      %v3269 = vpop.permute.xlu0 %3268
      %3270 = vrot.lane.b32.xlu0 %v2478, 112
      %v3271 = vpop.permute.xlu0 %3270
      %3272 = vrot.lane.b32.xlu0 %v2480, 112
      %v3273 = vpop.permute.xlu0 %3272
      %3274 = vrot.lane.b32.xlu0 %v2482, 112
      %v3275 = vpop.permute.xlu0 %3274
      %v3276 = vsel %vm1169, %v3261, %v3269
      %v3277 = vsel %vm1169, %v3263, %v3271
      %v3278 = vsel %vm1169, %v3265, %v3273
      %v3279 = vsel %vm1169, %v3267, %v3275
      %v3280 = vsel %vm1169, %v3269, %v3261
      %v3281 = vsel %vm1169, %v3271, %v3263
      %v3282 = vsel %vm1169, %v3273, %v3265
      %v3283 = vsel %vm1169, %v3275, %v3267
      %v3284 = vmul.f32 %v3276, %v1178
      %v3285 = vmul.f32 %v3280, %v1182
      %v3286 = vmul.f32 %v3277, %v1178
      %v3287 = vmul.f32 %v3281, %v1182
      %v3288 = vmul.f32 %v3278, %v1178
      %v3289 = vmul.f32 %v3282, %v1182
      %v3290 = vmul.f32 %v3279, %v1178
      %v3291 = vmul.f32 %v3283, %v1182
      %s3292 = scalar_lea.vmem %s6, 112
      %v3293 = vld [vmem:[%s3292] sm:$0xf]
      %v3294 = vld [vmem:[%s3292 + $0x4] sm:$0xf]
      %v3295 = vld [vmem:[%s3292 + $0x8] sm:$0xf]
      %v3296 = vld [vmem:[%s3292 + $0xc] sm:$0xf]
      %v3297 = vpack.c.bf16 %v3286, %v3284
      %v3298 = vpack.c.bf16 %v3287, %v3285
      %v3299 = vpack.c.bf16 %v3290, %v3288
      %v3300 = vpack.c.bf16 %v3291, %v3289
      %v3305 = vunpack.c.l.b16 %v3293
      %v3306 = vunpack.c.l.b16 %v3294
      %v3307 = vunpack.c.l.b16 %v3295
      %v3308 = vunpack.c.l.b16 %v3296
      %v3309 = vpack.c.b16 %v3306, %v3305
      %v3310 = vpack.c.b16 %v3308, %v3307
      %v3312 = vsel %vm1520, %v3309, 0
      %v3315 = vsel %vm1520, %v3310, 0
      %3317 = vmatprep.subr.bf16.mxu0 %v3298
      %3318 = vmatpush1.bf16.msra.mxu0 %v3297
      %3319 = vmatprep.subr.bf16.mxu0 %v3300
      %3320 = vmatpush1.bf16.msra.mxu0 %v3299
      %3321 = vmatprep.subr.bf16.mxu0 0
      %3322 = vmatpush1.bf16.msra.mxu0 0
      %3323 = vmatprep.subr.bf16.mxu0 0
      %3324 = vmatpush1.bf16.msra.mxu0 0
      %3325 = vmatprep.subr.bf16.mxu0 0
      %3326 = vmatpush1.bf16.msra.mxu0 0
      %3327 = vmatprep.subr.bf16.mxu0 0
      %3328 = vmatpush1.bf16.msra.mxu0 0
      %3329 = vmatprep.subr.bf16.mxu0 0
      %3330 = vmatpush1.bf16.msra.mxu0 0
      %3331 = vmatprep.subr.bf16.mxu0 0
      %3332 = vmatpush1.bf16.msra.mxu0 0
      %3333 = vmatprep.subr.bf16.mxu0 0
      %3334 = vmatpush1.bf16.msra.mxu0 0
      %3335 = vmatprep.subr.bf16.mxu0 0
      %3336 = vmatpush1.bf16.msra.mxu0 0
      %3337 = vmatprep.subr.bf16.mxu0 0
      %3338 = vmatpush1.bf16.msra.mxu0 0
      %3339 = vmatprep.subr.bf16.mxu0 0
      %3340 = vmatpush1.bf16.msra.mxu0 0
      %3341 = vmatprep.subr.bf16.mxu0 0
      %3342 = vmatpush1.bf16.msra.mxu0 0
      %3343 = vmatprep.subr.bf16.mxu0 0
      %3344 = vmatpush1.bf16.msra.mxu0 0
      %3345 = vmatprep.subr.bf16.mxu0 0
      %3346 = vmatpush1.bf16.msra.mxu0 0
      %3347 = vmatprep.subr.bf16.mxu0 0
      %3348 = vmatpush1.bf16.msra.mxu0 0
      %3349 = vmatprep.mubr.bf16.mxu0 0
      %3350 = vmatmul.mubr.bf16.gmra.mrb[0].mxu0 %v3312
      %v3351 = vpop.f32.mrb[0].mxu0
      %v3352 = vadd.f32 0.0, %v3351
      %v3353 = vpop.f32.mrb[0].mxu0
      %v3354 = vadd.f32 0.0, %v3353
      %v3355 = vpop.f32.mrb[0].mxu0
      %v3356 = vadd.f32 0.0, %v3355
      %v3357 = vpop.f32.mrb[0].mxu0
      %v3358 = vadd.f32 0.0, %v3357
      %3359 = vmatprep.mubr.bf16.mxu0 0
      %3360 = vmatmul.mubr.bf16.gmra.mrb[0].mxu0 %v3315
      %v3361 = vpop.f32.mrb[0].mxu0
      %v3362 = vadd.f32 0.0, %v3361
      %v3363 = vpop.f32.mrb[0].mxu0
      %v3364 = vadd.f32 0.0, %v3363
      %v3365 = vpop.f32.mrb[0].mxu0
      %v3366 = vadd.f32 0.0, %v3365
      %v3367 = vpop.f32.mrb[0].mxu0
      %v3368 = vadd.f32 0.0, %v3367
      %3369 = vdwg.mxu0
      %v3370 = vadd.f32 %v3252, %v3352
      %v3371 = vadd.f32 %v3253, %v3354
      %v3372 = vadd.f32 %v3254, %v3356
      %v3373 = vadd.f32 %v3255, %v3358
      %v3374 = vadd.f32 %v3256, %v3362
      %v3375 = vadd.f32 %v3257, %v3364
      %v3376 = vadd.f32 %v3258, %v3366
      %v3377 = vadd.f32 %v3259, %v3368
      %3378 = vrot.lane.b32.xlu0 %v2475, 111
      %v3379 = vpop.permute.xlu0 %3378
      %3380 = vrot.lane.b32.xlu0 %v2477, 111
      %v3381 = vpop.permute.xlu0 %3380
      %3382 = vrot.lane.b32.xlu0 %v2479, 111
      %v3383 = vpop.permute.xlu0 %3382
      %3384 = vrot.lane.b32.xlu0 %v2481, 111
      %v3385 = vpop.permute.xlu0 %3384
      %3386 = vrot.lane.b32.xlu0 %v2476, 111
      %v3387 = vpop.permute.xlu0 %3386
      %3388 = vrot.lane.b32.xlu0 %v2478, 111
      %v3389 = vpop.permute.xlu0 %3388
      %3390 = vrot.lane.b32.xlu0 %v2480, 111
      %v3391 = vpop.permute.xlu0 %3390
      %3392 = vrot.lane.b32.xlu0 %v2482, 111
      %v3393 = vpop.permute.xlu0 %3392
      %v3394 = vsel %vm1281, %v3379, %v3387
      %v3395 = vsel %vm1281, %v3381, %v3389
      %v3396 = vsel %vm1281, %v3383, %v3391
      %v3397 = vsel %vm1281, %v3385, %v3393
      %v3398 = vsel %vm1281, %v3387, %v3379
      %v3399 = vsel %vm1281, %v3389, %v3381
      %v3400 = vsel %vm1281, %v3391, %v3383
      %v3401 = vsel %vm1281, %v3393, %v3385
      %v3402 = vmul.f32 %v3394, %v1290
      %v3403 = vmul.f32 %v3398, %v1294
      %v3404 = vmul.f32 %v3395, %v1290
      %v3405 = vmul.f32 %v3399, %v1294
      %v3406 = vmul.f32 %v3396, %v1290
      %v3407 = vmul.f32 %v3400, %v1294
      %v3408 = vmul.f32 %v3397, %v1290
      %v3409 = vmul.f32 %v3401, %v1294
      %s3410 = scalar_lea.vmem %s6, 128
      %v3411 = vld [vmem:[%s3410] sm:$0xf]
      %v3412 = vld [vmem:[%s3410 + $0x4] sm:$0xf]
      %v3413 = vld [vmem:[%s3410 + $0x8] sm:$0xf]
      %v3414 = vld [vmem:[%s3410 + $0xc] sm:$0xf]
      %v3415 = vpack.c.bf16 %v3404, %v3402
      %v3416 = vpack.c.bf16 %v3405, %v3403
      %v3417 = vpack.c.bf16 %v3408, %v3406
      %v3418 = vpack.c.bf16 %v3409, %v3407
      %v3423 = vunpack.c.l.b16 %v3411
      %v3424 = vunpack.c.l.b16 %v3412
      %v3425 = vunpack.c.l.b16 %v3413
      %v3426 = vunpack.c.l.b16 %v3414
      %v3427 = vpack.c.b16 %v3424, %v3423
      %v3428 = vpack.c.b16 %v3426, %v3425
      %v3430 = vsel %vm1520, %v3427, 0
      %v3433 = vsel %vm1520, %v3428, 0
      %3435 = vmatprep.subr.bf16.mxu0 %v3416
      %3436 = vmatpush1.bf16.msra.mxu0 %v3415
      %3437 = vmatprep.subr.bf16.mxu0 %v3418
      %3438 = vmatpush1.bf16.msra.mxu0 %v3417
      %3439 = vmatprep.subr.bf16.mxu0 0
      %3440 = vmatpush1.bf16.msra.mxu0 0
      %3441 = vmatprep.subr.bf16.mxu0 0
      %3442 = vmatpush1.bf16.msra.mxu0 0
      %3443 = vmatprep.subr.bf16.mxu0 0
      %3444 = vmatpush1.bf16.msra.mxu0 0
      %3445 = vmatprep.subr.bf16.mxu0 0
      %3446 = vmatpush1.bf16.msra.mxu0 0
      %3447 = vmatprep.subr.bf16.mxu0 0
      %3448 = vmatpush1.bf16.msra.mxu0 0
      %3449 = vmatprep.subr.bf16.mxu0 0
      %3450 = vmatpush1.bf16.msra.mxu0 0
      %3451 = vmatprep.subr.bf16.mxu0 0
      %3452 = vmatpush1.bf16.msra.mxu0 0
      %3453 = vmatprep.subr.bf16.mxu0 0
      %3454 = vmatpush1.bf16.msra.mxu0 0
      %3455 = vmatprep.subr.bf16.mxu0 0
      %3456 = vmatpush1.bf16.msra.mxu0 0
      %3457 = vmatprep.subr.bf16.mxu0 0
      %3458 = vmatpush1.bf16.msra.mxu0 0
      %3459 = vmatprep.subr.bf16.mxu0 0
      %3460 = vmatpush1.bf16.msra.mxu0 0
      %3461 = vmatprep.subr.bf16.mxu0 0
      %3462 = vmatpush1.bf16.msra.mxu0 0
      %3463 = vmatprep.subr.bf16.mxu0 0
      %3464 = vmatpush1.bf16.msra.mxu0 0
      %3465 = vmatprep.subr.bf16.mxu0 0
      %3466 = vmatpush1.bf16.msra.mxu0 0
      %3467 = vmatprep.mubr.bf16.mxu0 0
      %3468 = vmatmul.mubr.bf16.gmra.mrb[0].mxu0 %v3430
      %v3469 = vpop.f32.mrb[0].mxu0
      %v3470 = vadd.f32 0.0, %v3469
      %v3471 = vpop.f32.mrb[0].mxu0
      %v3472 = vadd.f32 0.0, %v3471
      %v3473 = vpop.f32.mrb[0].mxu0
      %v3474 = vadd.f32 0.0, %v3473
      %v3475 = vpop.f32.mrb[0].mxu0
      %v3476 = vadd.f32 0.0, %v3475
      %3477 = vmatprep.mubr.bf16.mxu0 0
      %3478 = vmatmul.mubr.bf16.gmra.mrb[0].mxu0 %v3433
      %v3479 = vpop.f32.mrb[0].mxu0
      %v3480 = vadd.f32 0.0, %v3479
      %v3481 = vpop.f32.mrb[0].mxu0
      %v3482 = vadd.f32 0.0, %v3481
      %v3483 = vpop.f32.mrb[0].mxu0
      %v3484 = vadd.f32 0.0, %v3483
      %v3485 = vpop.f32.mrb[0].mxu0
      %v3486 = vadd.f32 0.0, %v3485
      %3487 = vdwg.mxu0
      %v3488 = vadd.f32 %v3370, %v3470
      %v3489 = vadd.f32 %v3371, %v3472
      %v3490 = vadd.f32 %v3372, %v3474
      %v3491 = vadd.f32 %v3373, %v3476
      %v3492 = vadd.f32 %v3374, %v3480
      %v3493 = vadd.f32 %v3375, %v3482
      %v3494 = vadd.f32 %v3376, %v3484
      %v3495 = vadd.f32 %v3377, %v3486
      %v3496 = vld [vmem:[%s7] sm:$0xff]
      %v3497 = vld [vmem:[%s7 + $0x8] sm:$0xff]
      %v3498 = vld [vmem:[%s7 + $0x10] sm:$0xff]
      %v3499 = vld [vmem:[%s7 + $0x18] sm:$0xff]
      %3501 = vset.pattern.permute.xlu0 0
      %3502 = vperm.xlu0 %3501, %v3496
      %v3503 = vpop.permute.xlu0 %3502
      %3506 = vset.pattern.permute.xlu0 0
      %3507 = vperm.xlu0 %3506, %v3497
      %v3508 = vpop.permute.xlu0 %3507
      %3511 = vset.pattern.permute.xlu0 0
      %3512 = vperm.xlu0 %3511, %v3498
      %v3513 = vpop.permute.xlu0 %3512
      %3516 = vset.pattern.permute.xlu0 0
      %3517 = vperm.xlu0 %3516, %v3499
      %v3518 = vpop.permute.xlu0 %3517
      %v3520 = vadd.f32 %v3488, %v3503
      %v3521 = vadd.f32 %v3489, %v3503
      %v3522 = vadd.f32 %v3490, %v3508
      %v3523 = vadd.f32 %v3491, %v3508
      %v3524 = vadd.f32 %v3492, %v3513
      %v3525 = vadd.f32 %v3493, %v3513
      %v3526 = vadd.f32 %v3494, %v3518
      %v3527 = vadd.f32 %v3495, %v3518
      %v3528 = vmax.f32 %v3520, 0.0
      %v3529 = vmax.f32 %v3521, 0.0
      %v3530 = vmax.f32 %v3522, 0.0
      %v3531 = vmax.f32 %v3523, 0.0
      %v3532 = vmax.f32 %v3524, 0.0
      %v3533 = vmax.f32 %v3525, 0.0
      %v3534 = vmax.f32 %v3526, 0.0
      %v3535 = vmax.f32 %v3527, 0.0
      %3536 = vrot.lane.b32.xlu0 %v3528, 17
      %v3537 = vpop.permute.xlu0 %3536
      %3538 = vrot.lane.b32.xlu0 %v3530, 17
      %v3539 = vpop.permute.xlu0 %3538
      %3540 = vrot.lane.b32.xlu0 %v3532, 17
      %v3541 = vpop.permute.xlu0 %3540
      %3542 = vrot.lane.b32.xlu0 %v3534, 17
      %v3543 = vpop.permute.xlu0 %3542
      %3544 = vrot.lane.b32.xlu0 %v3529, 17
      %v3545 = vpop.permute.xlu0 %3544
      %3546 = vrot.lane.b32.xlu0 %v3531, 17
      %v3547 = vpop.permute.xlu0 %3546
      %3548 = vrot.lane.b32.xlu0 %v3533, 17
      %v3549 = vpop.permute.xlu0 %3548
      %3550 = vrot.lane.b32.xlu0 %v3535, 17
      %v3551 = vpop.permute.xlu0 %3550
      %v3552 = vsel %vm423, %v3537, %v3545
      %v3553 = vsel %vm423, %v3539, %v3547
      %v3554 = vsel %vm423, %v3541, %v3549
      %v3555 = vsel %vm423, %v3543, %v3551
      %v3556 = vsel %vm423, %v3545, %v3537
      %v3557 = vsel %vm423, %v3547, %v3539
      %v3558 = vsel %vm423, %v3549, %v3541
      %v3559 = vsel %vm423, %v3551, %v3543
      %v3560 = vmul.f32 %v3556, %v431
      %v3561 = vmul.f32 %v3552, %v435
      %v3562 = vmul.f32 %v3557, %v431
      %v3563 = vmul.f32 %v3553, %v435
      %v3564 = vmul.f32 %v3558, %v431
      %v3565 = vmul.f32 %v3554, %v435
      %v3566 = vmul.f32 %v3559, %v431
      %v3567 = vmul.f32 %v3555, %v435
      %v3568 = vld [vmem:[%s8] sm:$0xf]
      %v3569 = vpack.c.bf16 %v3562, %v3560
      %v3570 = vpack.c.bf16 %v3563, %v3561
      %v3571 = vpack.c.bf16 %v3566, %v3564
      %v3572 = vpack.c.bf16 %v3567, %v3565
      %3573 = vrot.lane.b32.xlu0 %v3528, 16
      %v3574 = vpop.permute.xlu0 %3573
      %3575 = vrot.lane.b32.xlu0 %v3530, 16
      %v3576 = vpop.permute.xlu0 %3575
      %3577 = vrot.lane.b32.xlu0 %v3532, 16
      %v3578 = vpop.permute.xlu0 %3577
      %3579 = vrot.lane.b32.xlu0 %v3534, 16
      %v3580 = vpop.permute.xlu0 %3579
      %3581 = vrot.lane.b32.xlu0 %v3529, 16
      %v3582 = vpop.permute.xlu0 %3581
      %3583 = vrot.lane.b32.xlu0 %v3531, 16
      %v3584 = vpop.permute.xlu0 %3583
      %3585 = vrot.lane.b32.xlu0 %v3533, 16
      %v3586 = vpop.permute.xlu0 %3585
      %3587 = vrot.lane.b32.xlu0 %v3535, 16
      %v3588 = vpop.permute.xlu0 %3587
      %v3589 = vsel %vm450, %v3574, %v3582
      %v3590 = vsel %vm450, %v3576, %v3584
      %v3591 = vsel %vm450, %v3578, %v3586
      %v3592 = vsel %vm450, %v3580, %v3588
      %v3593 = vsel %vm450, %v3582, %v3574
      %v3594 = vsel %vm450, %v3584, %v3576
      %v3595 = vsel %vm450, %v3586, %v3578
      %v3596 = vsel %vm450, %v3588, %v3580
      %v3597 = vmul.f32 %v3593, %v459
      %v3598 = vmul.f32 %v3589, %v463
      %v3599 = vmul.f32 %v3594, %v459
      %v3600 = vmul.f32 %v3590, %v463
      %v3601 = vmul.f32 %v3595, %v459
      %v3602 = vmul.f32 %v3591, %v463
      %v3603 = vmul.f32 %v3596, %v459
      %v3604 = vmul.f32 %v3592, %v463
      %s3605 = scalar_lea.vmem %s8, 4
      %v3606 = vld [vmem:[%s3605] sm:$0xf]
      %v3607 = vpack.c.bf16 %v3599, %v3597
      %v3608 = vpack.c.bf16 %v3600, %v3598
      %v3609 = vpack.c.bf16 %v3603, %v3601
      %v3610 = vpack.c.bf16 %v3604, %v3602
      %v3612 = vsel %vm1520, %v3606, 0
      %3614 = vmatprep.subr.bf16.mxu0 %v3608
      %3615 = vmatpush1.bf16.msra.mxu0 %v3607
      %3616 = vmatprep.subr.bf16.mxu0 %v3610
      %3617 = vmatpush1.bf16.msra.mxu0 %v3609
      %3618 = vmatprep.subr.bf16.mxu0 0
      %3619 = vmatpush1.bf16.msra.mxu0 0
      %3620 = vmatprep.subr.bf16.mxu0 0
      %3621 = vmatpush1.bf16.msra.mxu0 0
      %3622 = vmatprep.subr.bf16.mxu0 0
      %3623 = vmatpush1.bf16.msra.mxu0 0
      %3624 = vmatprep.subr.bf16.mxu0 0
      %3625 = vmatpush1.bf16.msra.mxu0 0
      %3626 = vmatprep.subr.bf16.mxu0 0
      %3627 = vmatpush1.bf16.msra.mxu0 0
      %3628 = vmatprep.subr.bf16.mxu0 0
      %3629 = vmatpush1.bf16.msra.mxu0 0
      %3630 = vmatprep.subr.bf16.mxu0 0
      %3631 = vmatpush1.bf16.msra.mxu0 0
      %3632 = vmatprep.subr.bf16.mxu0 0
      %3633 = vmatpush1.bf16.msra.mxu0 0
      %3634 = vmatprep.subr.bf16.mxu0 0
      %3635 = vmatpush1.bf16.msra.mxu0 0
      %3636 = vmatprep.subr.bf16.mxu0 0
      %3637 = vmatpush1.bf16.msra.mxu0 0
      %3638 = vmatprep.subr.bf16.mxu0 0
      %3639 = vmatpush1.bf16.msra.mxu0 0
      %3640 = vmatprep.subr.bf16.mxu0 0
      %3641 = vmatpush1.bf16.msra.mxu0 0
      %3642 = vmatprep.subr.bf16.mxu0 0
      %3643 = vmatpush1.bf16.msra.mxu0 0
      %3644 = vmatprep.subr.bf16.mxu0 0
      %3645 = vmatpush1.bf16.msra.mxu0 0
      %3646 = vmatprep.mubr.bf16.mxu0 0
      %3647 = vmatmul.mubr.bf16.gmra.mrb[0].mxu0 %v3612
      %v3648 = vpop.f32.mrb[0].mxu0
      %v3649 = vadd.f32 0.0, %v3648
      %v3650 = vpop.f32.mrb[0].mxu0
      %v3651 = vadd.f32 0.0, %v3650
      %v3652 = vpop.f32.mrb[0].mxu0
      %v3653 = vpop.f32.mrb[0].mxu0
      %3654 = vdwg.mxu0
      %v3656 = vsel %vm1520, %v3568, 0
      %3658 = vmatprep.subr.bf16.mxu0 %v3570
      %3659 = vmatpush1.bf16.msra.mxu0 %v3569
      %3660 = vmatprep.subr.bf16.mxu0 %v3572
      %3661 = vmatpush1.bf16.msra.mxu0 %v3571
      %3662 = vmatprep.subr.bf16.mxu0 0
      %3663 = vmatpush1.bf16.msra.mxu0 0
      %3664 = vmatprep.subr.bf16.mxu0 0
      %3665 = vmatpush1.bf16.msra.mxu0 0
      %3666 = vmatprep.subr.bf16.mxu0 0
      %3667 = vmatpush1.bf16.msra.mxu0 0
      %3668 = vmatprep.subr.bf16.mxu0 0
      %3669 = vmatpush1.bf16.msra.mxu0 0
      %3670 = vmatprep.subr.bf16.mxu0 0
      %3671 = vmatpush1.bf16.msra.mxu0 0
      %3672 = vmatprep.subr.bf16.mxu0 0
      %3673 = vmatpush1.bf16.msra.mxu0 0
      %3674 = vmatprep.subr.bf16.mxu0 0
      %3675 = vmatpush1.bf16.msra.mxu0 0
      %3676 = vmatprep.subr.bf16.mxu0 0
      %3677 = vmatpush1.bf16.msra.mxu0 0
      %3678 = vmatprep.subr.bf16.mxu0 0
      %3679 = vmatpush1.bf16.msra.mxu0 0
      %3680 = vmatprep.subr.bf16.mxu0 0
      %3681 = vmatpush1.bf16.msra.mxu0 0
      %3682 = vmatprep.subr.bf16.mxu0 0
      %3683 = vmatpush1.bf16.msra.mxu0 0
      %3684 = vmatprep.subr.bf16.mxu0 0
      %3685 = vmatpush1.bf16.msra.mxu0 0
      %3686 = vmatprep.subr.bf16.mxu0 0
      %3687 = vmatpush1.bf16.msra.mxu0 0
      %3688 = vmatprep.subr.bf16.mxu0 0
      %3689 = vmatpush1.bf16.msra.mxu0 0
      %3690 = vmatprep.mubr.bf16.mxu0 0
      %3691 = vmatmul.mubr.bf16.gmra.mrb[0].mxu0 %v3656
      %v3692 = vpop.f32.mrb[0].mxu0
      %v3693 = vadd.f32 %v3649, %v3692
      %v3694 = vpop.f32.mrb[0].mxu0
      %v3695 = vadd.f32 %v3651, %v3694
      %v3696 = vpop.f32.mrb[0].mxu0
      %v3697 = vpop.f32.mrb[0].mxu0
      %3698 = vdwg.mxu0
      %3699 = vrot.lane.b32.xlu0 %v3528, 15
      %v3700 = vpop.permute.xlu0 %3699
      %3701 = vrot.lane.b32.xlu0 %v3530, 15
      %v3702 = vpop.permute.xlu0 %3701
      %3703 = vrot.lane.b32.xlu0 %v3532, 15
      %v3704 = vpop.permute.xlu0 %3703
      %3705 = vrot.lane.b32.xlu0 %v3534, 15
      %v3706 = vpop.permute.xlu0 %3705
      %3707 = vrot.lane.b32.xlu0 %v3529, 15
      %v3708 = vpop.permute.xlu0 %3707
      %3709 = vrot.lane.b32.xlu0 %v3531, 15
      %v3710 = vpop.permute.xlu0 %3709
      %3711 = vrot.lane.b32.xlu0 %v3533, 15
      %v3712 = vpop.permute.xlu0 %3711
      %3713 = vrot.lane.b32.xlu0 %v3535, 15
      %v3714 = vpop.permute.xlu0 %3713
      %v3715 = vsel %vm631, %v3700, %v3708
      %v3716 = vsel %vm631, %v3702, %v3710
      %v3717 = vsel %vm631, %v3704, %v3712
      %v3718 = vsel %vm631, %v3706, %v3714
      %v3719 = vsel %vm631, %v3708, %v3700
      %v3720 = vsel %vm631, %v3710, %v3702
      %v3721 = vsel %vm631, %v3712, %v3704
      %v3722 = vsel %vm631, %v3714, %v3706
      %v3723 = vmul.f32 %v3719, %v640
      %v3724 = vmul.f32 %v3715, %v644
      %v3725 = vmul.f32 %v3720, %v640
      %v3726 = vmul.f32 %v3716, %v644
      %v3727 = vmul.f32 %v3721, %v640
      %v3728 = vmul.f32 %v3717, %v644
      %v3729 = vmul.f32 %v3722, %v640
      %v3730 = vmul.f32 %v3718, %v644
      %s3731 = scalar_lea.vmem %s8, 8
      %v3732 = vld [vmem:[%s3731] sm:$0xf]
      %v3733 = vpack.c.bf16 %v3725, %v3723
      %v3734 = vpack.c.bf16 %v3726, %v3724
      %v3735 = vpack.c.bf16 %v3729, %v3727
      %v3736 = vpack.c.bf16 %v3730, %v3728
      %v3738 = vsel %vm1520, %v3732, 0
      %3740 = vmatprep.subr.bf16.mxu0 %v3734
      %3741 = vmatpush1.bf16.msra.mxu0 %v3733
      %3742 = vmatprep.subr.bf16.mxu0 %v3736
      %3743 = vmatpush1.bf16.msra.mxu0 %v3735
      %3744 = vmatprep.subr.bf16.mxu0 0
      %3745 = vmatpush1.bf16.msra.mxu0 0
      %3746 = vmatprep.subr.bf16.mxu0 0
      %3747 = vmatpush1.bf16.msra.mxu0 0
      %3748 = vmatprep.subr.bf16.mxu0 0
      %3749 = vmatpush1.bf16.msra.mxu0 0
      %3750 = vmatprep.subr.bf16.mxu0 0
      %3751 = vmatpush1.bf16.msra.mxu0 0
      %3752 = vmatprep.subr.bf16.mxu0 0
      %3753 = vmatpush1.bf16.msra.mxu0 0
      %3754 = vmatprep.subr.bf16.mxu0 0
      %3755 = vmatpush1.bf16.msra.mxu0 0
      %3756 = vmatprep.subr.bf16.mxu0 0
      %3757 = vmatpush1.bf16.msra.mxu0 0
      %3758 = vmatprep.subr.bf16.mxu0 0
      %3759 = vmatpush1.bf16.msra.mxu0 0
      %3760 = vmatprep.subr.bf16.mxu0 0
      %3761 = vmatpush1.bf16.msra.mxu0 0
      %3762 = vmatprep.subr.bf16.mxu0 0
      %3763 = vmatpush1.bf16.msra.mxu0 0
      %3764 = vmatprep.subr.bf16.mxu0 0
      %3765 = vmatpush1.bf16.msra.mxu0 0
      %3766 = vmatprep.subr.bf16.mxu0 0
      %3767 = vmatpush1.bf16.msra.mxu0 0
      %3768 = vmatprep.subr.bf16.mxu0 0
      %3769 = vmatpush1.bf16.msra.mxu0 0
      %3770 = vmatprep.subr.bf16.mxu0 0
      %3771 = vmatpush1.bf16.msra.mxu0 0
      %3772 = vmatprep.mubr.bf16.mxu0 0
      %3773 = vmatmul.mubr.bf16.gmra.mrb[0].mxu0 %v3738
      %v3774 = vpop.f32.mrb[0].mxu0
      %v3775 = vadd.f32 0.0, %v3774
      %v3776 = vpop.f32.mrb[0].mxu0
      %v3777 = vadd.f32 0.0, %v3776
      %v3778 = vpop.f32.mrb[0].mxu0
      %v3779 = vpop.f32.mrb[0].mxu0
      %3780 = vdwg.mxu0
      %v3781 = vadd.f32 %v3693, %v3775
      %v3782 = vadd.f32 %v3695, %v3777
      %3783 = vrot.lane.b32.xlu0 %v3528, 1
      %v3784 = vpop.permute.xlu0 %3783
      %3785 = vrot.lane.b32.xlu0 %v3530, 1
      %v3786 = vpop.permute.xlu0 %3785
      %3787 = vrot.lane.b32.xlu0 %v3532, 1
      %v3788 = vpop.permute.xlu0 %3787
      %3789 = vrot.lane.b32.xlu0 %v3534, 1
      %v3790 = vpop.permute.xlu0 %3789
      %3791 = vrot.lane.b32.xlu0 %v3529, 1
      %v3792 = vpop.permute.xlu0 %3791
      %3793 = vrot.lane.b32.xlu0 %v3531, 1
      %v3794 = vpop.permute.xlu0 %3793
      %3795 = vrot.lane.b32.xlu0 %v3533, 1
      %v3796 = vpop.permute.xlu0 %3795
      %3797 = vrot.lane.b32.xlu0 %v3535, 1
      %v3798 = vpop.permute.xlu0 %3797
      %v3799 = vsel %vm743, %v3784, %v3792
      %v3800 = vsel %vm743, %v3786, %v3794
      %v3801 = vsel %vm743, %v3788, %v3796
      %v3802 = vsel %vm743, %v3790, %v3798
      %v3803 = vsel %vm743, %v3792, %v3784
      %v3804 = vsel %vm743, %v3794, %v3786
      %v3805 = vsel %vm743, %v3796, %v3788
      %v3806 = vsel %vm743, %v3798, %v3790
      %v3807 = vmul.f32 %v3803, %v752
      %v3808 = vmul.f32 %v3799, %v756
      %v3809 = vmul.f32 %v3804, %v752
      %v3810 = vmul.f32 %v3800, %v756
      %v3811 = vmul.f32 %v3805, %v752
      %v3812 = vmul.f32 %v3801, %v756
      %v3813 = vmul.f32 %v3806, %v752
      %v3814 = vmul.f32 %v3802, %v756
      %s3815 = scalar_lea.vmem %s8, 12
      %v3816 = vld [vmem:[%s3815] sm:$0xf]
      %v3817 = vpack.c.bf16 %v3809, %v3807
      %v3818 = vpack.c.bf16 %v3810, %v3808
      %v3819 = vpack.c.bf16 %v3813, %v3811
      %v3820 = vpack.c.bf16 %v3814, %v3812
      %v3822 = vsel %vm1520, %v3816, 0
      %3824 = vmatprep.subr.bf16.mxu0 %v3818
      %3825 = vmatpush1.bf16.msra.mxu0 %v3817
      %3826 = vmatprep.subr.bf16.mxu0 %v3820
      %3827 = vmatpush1.bf16.msra.mxu0 %v3819
      %3828 = vmatprep.subr.bf16.mxu0 0
      %3829 = vmatpush1.bf16.msra.mxu0 0
      %3830 = vmatprep.subr.bf16.mxu0 0
      %3831 = vmatpush1.bf16.msra.mxu0 0
      %3832 = vmatprep.subr.bf16.mxu0 0
      %3833 = vmatpush1.bf16.msra.mxu0 0
      %3834 = vmatprep.subr.bf16.mxu0 0
      %3835 = vmatpush1.bf16.msra.mxu0 0
      %3836 = vmatprep.subr.bf16.mxu0 0
      %3837 = vmatpush1.bf16.msra.mxu0 0
      %3838 = vmatprep.subr.bf16.mxu0 0
      %3839 = vmatpush1.bf16.msra.mxu0 0
      %3840 = vmatprep.subr.bf16.mxu0 0
      %3841 = vmatpush1.bf16.msra.mxu0 0
      %3842 = vmatprep.subr.bf16.mxu0 0
      %3843 = vmatpush1.bf16.msra.mxu0 0
      %3844 = vmatprep.subr.bf16.mxu0 0
      %3845 = vmatpush1.bf16.msra.mxu0 0
      %3846 = vmatprep.subr.bf16.mxu0 0
      %3847 = vmatpush1.bf16.msra.mxu0 0
      %3848 = vmatprep.subr.bf16.mxu0 0
      %3849 = vmatpush1.bf16.msra.mxu0 0
      %3850 = vmatprep.subr.bf16.mxu0 0
      %3851 = vmatpush1.bf16.msra.mxu0 0
      %3852 = vmatprep.subr.bf16.mxu0 0
      %3853 = vmatpush1.bf16.msra.mxu0 0
      %3854 = vmatprep.subr.bf16.mxu0 0
      %3855 = vmatpush1.bf16.msra.mxu0 0
      %3856 = vmatprep.mubr.bf16.mxu0 0
      %3857 = vmatmul.mubr.bf16.gmra.mrb[0].mxu0 %v3822
      %v3858 = vpop.f32.mrb[0].mxu0
      %v3859 = vadd.f32 0.0, %v3858
      %v3860 = vpop.f32.mrb[0].mxu0
      %v3861 = vadd.f32 0.0, %v3860
      %v3862 = vpop.f32.mrb[0].mxu0
      %v3863 = vpop.f32.mrb[0].mxu0
      %3864 = vdwg.mxu0
      %v3865 = vadd.f32 %v3781, %v3859
      %v3866 = vadd.f32 %v3782, %v3861
      %s3867 = scalar_lea.vmem %s8, 16
      %v3868 = vld [vmem:[%s3867] sm:$0xf]
      %v3869 = vpack.c.bf16 %v3530, %v3528
      %v3870 = vpack.c.bf16 %v3531, %v3529
      %v3871 = vpack.c.bf16 %v3534, %v3532
      %v3872 = vpack.c.bf16 %v3535, %v3533
      %v3874 = vsel %vm1520, %v3868, 0
      %3876 = vmatprep.subr.bf16.mxu0 %v3870
      %3877 = vmatpush1.bf16.msra.mxu0 %v3869
      %3878 = vmatprep.subr.bf16.mxu0 %v3872
      %3879 = vmatpush1.bf16.msra.mxu0 %v3871
      %3880 = vmatprep.subr.bf16.mxu0 0
      %3881 = vmatpush1.bf16.msra.mxu0 0
      %3882 = vmatprep.subr.bf16.mxu0 0
      %3883 = vmatpush1.bf16.msra.mxu0 0
      %3884 = vmatprep.subr.bf16.mxu0 0
      %3885 = vmatpush1.bf16.msra.mxu0 0
      %3886 = vmatprep.subr.bf16.mxu0 0
      %3887 = vmatpush1.bf16.msra.mxu0 0
      %3888 = vmatprep.subr.bf16.mxu0 0
      %3889 = vmatpush1.bf16.msra.mxu0 0
      %3890 = vmatprep.subr.bf16.mxu0 0
      %3891 = vmatpush1.bf16.msra.mxu0 0
      %3892 = vmatprep.subr.bf16.mxu0 0
      %3893 = vmatpush1.bf16.msra.mxu0 0
      %3894 = vmatprep.subr.bf16.mxu0 0
      %3895 = vmatpush1.bf16.msra.mxu0 0
      %3896 = vmatprep.subr.bf16.mxu0 0
      %3897 = vmatpush1.bf16.msra.mxu0 0
      %3898 = vmatprep.subr.bf16.mxu0 0
      %3899 = vmatpush1.bf16.msra.mxu0 0
      %3900 = vmatprep.subr.bf16.mxu0 0
      %3901 = vmatpush1.bf16.msra.mxu0 0
      %3902 = vmatprep.subr.bf16.mxu0 0
      %3903 = vmatpush1.bf16.msra.mxu0 0
      %3904 = vmatprep.subr.bf16.mxu0 0
      %3905 = vmatpush1.bf16.msra.mxu0 0
      %3906 = vmatprep.subr.bf16.mxu0 0
      %3907 = vmatpush1.bf16.msra.mxu0 0
      %3908 = vmatprep.mubr.bf16.mxu0 0
      %3909 = vmatmul.mubr.bf16.gmra.mrb[0].mxu0 %v3874
      %v3910 = vpop.f32.mrb[0].mxu0
      %v3911 = vadd.f32 0.0, %v3910
      %v3912 = vpop.f32.mrb[0].mxu0
      %v3913 = vadd.f32 0.0, %v3912
      %v3914 = vpop.f32.mrb[0].mxu0
      %v3915 = vpop.f32.mrb[0].mxu0
      %3916 = vdwg.mxu0
      %v3917 = vadd.f32 %v3865, %v3911
      %v3918 = vadd.f32 %v3866, %v3913
      %3919 = vrot.lane.b32.xlu0 %v3528, 127
      %v3920 = vpop.permute.xlu0 %3919
      %3921 = vrot.lane.b32.xlu0 %v3530, 127
      %v3922 = vpop.permute.xlu0 %3921
      %3923 = vrot.lane.b32.xlu0 %v3532, 127
      %v3924 = vpop.permute.xlu0 %3923
      %3925 = vrot.lane.b32.xlu0 %v3534, 127
      %v3926 = vpop.permute.xlu0 %3925
      %3927 = vrot.lane.b32.xlu0 %v3529, 127
      %v3928 = vpop.permute.xlu0 %3927
      %3929 = vrot.lane.b32.xlu0 %v3531, 127
      %v3930 = vpop.permute.xlu0 %3929
      %3931 = vrot.lane.b32.xlu0 %v3533, 127
      %v3932 = vpop.permute.xlu0 %3931
      %3933 = vrot.lane.b32.xlu0 %v3535, 127
      %v3934 = vpop.permute.xlu0 %3933
      %v3935 = vsel %vm945, %v3920, %v3928
      %v3936 = vsel %vm945, %v3922, %v3930
      %v3937 = vsel %vm945, %v3924, %v3932
      %v3938 = vsel %vm945, %v3926, %v3934
      %v3939 = vsel %vm945, %v3928, %v3920
      %v3940 = vsel %vm945, %v3930, %v3922
      %v3941 = vsel %vm945, %v3932, %v3924
      %v3942 = vsel %vm945, %v3934, %v3926
      %v3943 = vmul.f32 %v3935, %v954
      %v3944 = vmul.f32 %v3939, %v958
      %v3945 = vmul.f32 %v3936, %v954
      %v3946 = vmul.f32 %v3940, %v958
      %v3947 = vmul.f32 %v3937, %v954
      %v3948 = vmul.f32 %v3941, %v958
      %v3949 = vmul.f32 %v3938, %v954
      %v3950 = vmul.f32 %v3942, %v958
      %s3951 = scalar_lea.vmem %s8, 20
      %v3952 = vld [vmem:[%s3951] sm:$0xf]
      %v3953 = vpack.c.bf16 %v3945, %v3943
      %v3954 = vpack.c.bf16 %v3946, %v3944
      %v3955 = vpack.c.bf16 %v3949, %v3947
      %v3956 = vpack.c.bf16 %v3950, %v3948
      %v3958 = vsel %vm1520, %v3952, 0
      %3960 = vmatprep.subr.bf16.mxu0 %v3954
      %3961 = vmatpush1.bf16.msra.mxu0 %v3953
      %3962 = vmatprep.subr.bf16.mxu0 %v3956
      %3963 = vmatpush1.bf16.msra.mxu0 %v3955
      %3964 = vmatprep.subr.bf16.mxu0 0
      %3965 = vmatpush1.bf16.msra.mxu0 0
      %3966 = vmatprep.subr.bf16.mxu0 0
      %3967 = vmatpush1.bf16.msra.mxu0 0
      %3968 = vmatprep.subr.bf16.mxu0 0
      %3969 = vmatpush1.bf16.msra.mxu0 0
      %3970 = vmatprep.subr.bf16.mxu0 0
      %3971 = vmatpush1.bf16.msra.mxu0 0
      %3972 = vmatprep.subr.bf16.mxu0 0
      %3973 = vmatpush1.bf16.msra.mxu0 0
      %3974 = vmatprep.subr.bf16.mxu0 0
      %3975 = vmatpush1.bf16.msra.mxu0 0
      %3976 = vmatprep.subr.bf16.mxu0 0
      %3977 = vmatpush1.bf16.msra.mxu0 0
      %3978 = vmatprep.subr.bf16.mxu0 0
      %3979 = vmatpush1.bf16.msra.mxu0 0
      %3980 = vmatprep.subr.bf16.mxu0 0
      %3981 = vmatpush1.bf16.msra.mxu0 0
      %3982 = vmatprep.subr.bf16.mxu0 0
      %3983 = vmatpush1.bf16.msra.mxu0 0
      %3984 = vmatprep.subr.bf16.mxu0 0
      %3985 = vmatpush1.bf16.msra.mxu0 0
      %3986 = vmatprep.subr.bf16.mxu0 0
      %3987 = vmatpush1.bf16.msra.mxu0 0
      %3988 = vmatprep.subr.bf16.mxu0 0
      %3989 = vmatpush1.bf16.msra.mxu0 0
      %3990 = vmatprep.subr.bf16.mxu0 0
      %3991 = vmatpush1.bf16.msra.mxu0 0
      %3992 = vmatprep.mubr.bf16.mxu0 0
      %3993 = vmatmul.mubr.bf16.gmra.mrb[0].mxu0 %v3958
      %v3994 = vpop.f32.mrb[0].mxu0
      %v3995 = vadd.f32 0.0, %v3994
      %v3996 = vpop.f32.mrb[0].mxu0
      %v3997 = vadd.f32 0.0, %v3996
      %v3998 = vpop.f32.mrb[0].mxu0
      %v3999 = vpop.f32.mrb[0].mxu0
      %4000 = vdwg.mxu0
      %v4001 = vadd.f32 %v3917, %v3995
      %v4002 = vadd.f32 %v3918, %v3997
      %4003 = vrot.lane.b32.xlu0 %v3528, 113
      %v4004 = vpop.permute.xlu0 %4003
      %4005 = vrot.lane.b32.xlu0 %v3530, 113
      %v4006 = vpop.permute.xlu0 %4005
      %4007 = vrot.lane.b32.xlu0 %v3532, 113
      %v4008 = vpop.permute.xlu0 %4007
      %4009 = vrot.lane.b32.xlu0 %v3534, 113
      %v4010 = vpop.permute.xlu0 %4009
      %4011 = vrot.lane.b32.xlu0 %v3529, 113
      %v4012 = vpop.permute.xlu0 %4011
      %4013 = vrot.lane.b32.xlu0 %v3531, 113
      %v4014 = vpop.permute.xlu0 %4013
      %4015 = vrot.lane.b32.xlu0 %v3533, 113
      %v4016 = vpop.permute.xlu0 %4015
      %4017 = vrot.lane.b32.xlu0 %v3535, 113
      %v4018 = vpop.permute.xlu0 %4017
      %v4019 = vsel %vm1057, %v4004, %v4012
      %v4020 = vsel %vm1057, %v4006, %v4014
      %v4021 = vsel %vm1057, %v4008, %v4016
      %v4022 = vsel %vm1057, %v4010, %v4018
      %v4023 = vsel %vm1057, %v4012, %v4004
      %v4024 = vsel %vm1057, %v4014, %v4006
      %v4025 = vsel %vm1057, %v4016, %v4008
      %v4026 = vsel %vm1057, %v4018, %v4010
      %v4027 = vmul.f32 %v4019, %v1066
      %v4028 = vmul.f32 %v4023, %v1070
      %v4029 = vmul.f32 %v4020, %v1066
      %v4030 = vmul.f32 %v4024, %v1070
      %v4031 = vmul.f32 %v4021, %v1066
      %v4032 = vmul.f32 %v4025, %v1070
      %v4033 = vmul.f32 %v4022, %v1066
      %v4034 = vmul.f32 %v4026, %v1070
      %s4035 = scalar_lea.vmem %s8, 24
      %v4036 = vld [vmem:[%s4035] sm:$0xf]
      %v4037 = vpack.c.bf16 %v4029, %v4027
      %v4038 = vpack.c.bf16 %v4030, %v4028
      %v4039 = vpack.c.bf16 %v4033, %v4031
      %v4040 = vpack.c.bf16 %v4034, %v4032
      %v4042 = vsel %vm1520, %v4036, 0
      %4044 = vmatprep.subr.bf16.mxu0 %v4038
      %4045 = vmatpush1.bf16.msra.mxu0 %v4037
      %4046 = vmatprep.subr.bf16.mxu0 %v4040
      %4047 = vmatpush1.bf16.msra.mxu0 %v4039
      %4048 = vmatprep.subr.bf16.mxu0 0
      %4049 = vmatpush1.bf16.msra.mxu0 0
      %4050 = vmatprep.subr.bf16.mxu0 0
      %4051 = vmatpush1.bf16.msra.mxu0 0
      %4052 = vmatprep.subr.bf16.mxu0 0
      %4053 = vmatpush1.bf16.msra.mxu0 0
      %4054 = vmatprep.subr.bf16.mxu0 0
      %4055 = vmatpush1.bf16.msra.mxu0 0
      %4056 = vmatprep.subr.bf16.mxu0 0
      %4057 = vmatpush1.bf16.msra.mxu0 0
      %4058 = vmatprep.subr.bf16.mxu0 0
      %4059 = vmatpush1.bf16.msra.mxu0 0
      %4060 = vmatprep.subr.bf16.mxu0 0
      %4061 = vmatpush1.bf16.msra.mxu0 0
      %4062 = vmatprep.subr.bf16.mxu0 0
      %4063 = vmatpush1.bf16.msra.mxu0 0
      %4064 = vmatprep.subr.bf16.mxu0 0
      %4065 = vmatpush1.bf16.msra.mxu0 0
      %4066 = vmatprep.subr.bf16.mxu0 0
      %4067 = vmatpush1.bf16.msra.mxu0 0
      %4068 = vmatprep.subr.bf16.mxu0 0
      %4069 = vmatpush1.bf16.msra.mxu0 0
      %4070 = vmatprep.subr.bf16.mxu0 0
      %4071 = vmatpush1.bf16.msra.mxu0 0
      %4072 = vmatprep.subr.bf16.mxu0 0
      %4073 = vmatpush1.bf16.msra.mxu0 0
      %4074 = vmatprep.subr.bf16.mxu0 0
      %4075 = vmatpush1.bf16.msra.mxu0 0
      %4076 = vmatprep.mubr.bf16.mxu0 0
      %4077 = vmatmul.mubr.bf16.gmra.mrb[0].mxu0 %v4042
      %v4078 = vpop.f32.mrb[0].mxu0
      %v4079 = vadd.f32 0.0, %v4078
      %v4080 = vpop.f32.mrb[0].mxu0
      %v4081 = vadd.f32 0.0, %v4080
      %v4082 = vpop.f32.mrb[0].mxu0
      %v4083 = vpop.f32.mrb[0].mxu0
      %4084 = vdwg.mxu0
      %v4085 = vadd.f32 %v4001, %v4079
      %v4086 = vadd.f32 %v4002, %v4081
      %4087 = vrot.lane.b32.xlu0 %v3528, 112
      %v4088 = vpop.permute.xlu0 %4087
      %4089 = vrot.lane.b32.xlu0 %v3530, 112
      %v4090 = vpop.permute.xlu0 %4089
      %4091 = vrot.lane.b32.xlu0 %v3532, 112
      %v4092 = vpop.permute.xlu0 %4091
      %4093 = vrot.lane.b32.xlu0 %v3534, 112
      %v4094 = vpop.permute.xlu0 %4093
      %4095 = vrot.lane.b32.xlu0 %v3529, 112
      %v4096 = vpop.permute.xlu0 %4095
      %4097 = vrot.lane.b32.xlu0 %v3531, 112
      %v4098 = vpop.permute.xlu0 %4097
      %4099 = vrot.lane.b32.xlu0 %v3533, 112
      %v4100 = vpop.permute.xlu0 %4099
      %4101 = vrot.lane.b32.xlu0 %v3535, 112
      %v4102 = vpop.permute.xlu0 %4101
      %v4103 = vsel %vm1169, %v4088, %v4096
      %v4104 = vsel %vm1169, %v4090, %v4098
      %v4105 = vsel %vm1169, %v4092, %v4100
      %v4106 = vsel %vm1169, %v4094, %v4102
      %v4107 = vsel %vm1169, %v4096, %v4088
      %v4108 = vsel %vm1169, %v4098, %v4090
      %v4109 = vsel %vm1169, %v4100, %v4092
      %v4110 = vsel %vm1169, %v4102, %v4094
      %v4111 = vmul.f32 %v4103, %v1178
      %v4112 = vmul.f32 %v4107, %v1182
      %v4113 = vmul.f32 %v4104, %v1178
      %v4114 = vmul.f32 %v4108, %v1182
      %v4115 = vmul.f32 %v4105, %v1178
      %v4116 = vmul.f32 %v4109, %v1182
      %v4117 = vmul.f32 %v4106, %v1178
      %v4118 = vmul.f32 %v4110, %v1182
      %s4119 = scalar_lea.vmem %s8, 28
      %v4120 = vld [vmem:[%s4119] sm:$0xf]
      %v4121 = vpack.c.bf16 %v4113, %v4111
      %v4122 = vpack.c.bf16 %v4114, %v4112
      %v4123 = vpack.c.bf16 %v4117, %v4115
      %v4124 = vpack.c.bf16 %v4118, %v4116
      %v4126 = vsel %vm1520, %v4120, 0
      %4128 = vmatprep.subr.bf16.mxu0 %v4122
      %4129 = vmatpush1.bf16.msra.mxu0 %v4121
      %4130 = vmatprep.subr.bf16.mxu0 %v4124
      %4131 = vmatpush1.bf16.msra.mxu0 %v4123
      %4132 = vmatprep.subr.bf16.mxu0 0
      %4133 = vmatpush1.bf16.msra.mxu0 0
      %4134 = vmatprep.subr.bf16.mxu0 0
      %4135 = vmatpush1.bf16.msra.mxu0 0
      %4136 = vmatprep.subr.bf16.mxu0 0
      %4137 = vmatpush1.bf16.msra.mxu0 0
      %4138 = vmatprep.subr.bf16.mxu0 0
      %4139 = vmatpush1.bf16.msra.mxu0 0
      %4140 = vmatprep.subr.bf16.mxu0 0
      %4141 = vmatpush1.bf16.msra.mxu0 0
      %4142 = vmatprep.subr.bf16.mxu0 0
      %4143 = vmatpush1.bf16.msra.mxu0 0
      %4144 = vmatprep.subr.bf16.mxu0 0
      %4145 = vmatpush1.bf16.msra.mxu0 0
      %4146 = vmatprep.subr.bf16.mxu0 0
      %4147 = vmatpush1.bf16.msra.mxu0 0
      %4148 = vmatprep.subr.bf16.mxu0 0
      %4149 = vmatpush1.bf16.msra.mxu0 0
      %4150 = vmatprep.subr.bf16.mxu0 0
      %4151 = vmatpush1.bf16.msra.mxu0 0
      %4152 = vmatprep.subr.bf16.mxu0 0
      %4153 = vmatpush1.bf16.msra.mxu0 0
      %4154 = vmatprep.subr.bf16.mxu0 0
      %4155 = vmatpush1.bf16.msra.mxu0 0
      %4156 = vmatprep.subr.bf16.mxu0 0
      %4157 = vmatpush1.bf16.msra.mxu0 0
      %4158 = vmatprep.subr.bf16.mxu0 0
      %4159 = vmatpush1.bf16.msra.mxu0 0
      %4160 = vmatprep.mubr.bf16.mxu0 0
      %4161 = vmatmul.mubr.bf16.gmra.mrb[0].mxu0 %v4126
      %v4162 = vpop.f32.mrb[0].mxu0
      %v4163 = vadd.f32 0.0, %v4162
      %v4164 = vpop.f32.mrb[0].mxu0
      %v4165 = vadd.f32 0.0, %v4164
      %v4166 = vpop.f32.mrb[0].mxu0
      %v4167 = vpop.f32.mrb[0].mxu0
      %4168 = vdwg.mxu0
      %v4169 = vadd.f32 %v4085, %v4163
      %v4170 = vadd.f32 %v4086, %v4165
      %4171 = vrot.lane.b32.xlu0 %v3528, 111
      %v4172 = vpop.permute.xlu0 %4171
      %4173 = vrot.lane.b32.xlu0 %v3530, 111
      %v4174 = vpop.permute.xlu0 %4173
      %4175 = vrot.lane.b32.xlu0 %v3532, 111
      %v4176 = vpop.permute.xlu0 %4175
      %4177 = vrot.lane.b32.xlu0 %v3534, 111
      %v4178 = vpop.permute.xlu0 %4177
      %4179 = vrot.lane.b32.xlu0 %v3529, 111
      %v4180 = vpop.permute.xlu0 %4179
      %4181 = vrot.lane.b32.xlu0 %v3531, 111
      %v4182 = vpop.permute.xlu0 %4181
      %4183 = vrot.lane.b32.xlu0 %v3533, 111
      %v4184 = vpop.permute.xlu0 %4183
      %4185 = vrot.lane.b32.xlu0 %v3535, 111
      %v4186 = vpop.permute.xlu0 %4185
      %v4187 = vsel %vm1281, %v4172, %v4180
      %v4188 = vsel %vm1281, %v4174, %v4182
      %v4189 = vsel %vm1281, %v4176, %v4184
      %v4190 = vsel %vm1281, %v4178, %v4186
      %v4191 = vsel %vm1281, %v4180, %v4172
      %v4192 = vsel %vm1281, %v4182, %v4174
      %v4193 = vsel %vm1281, %v4184, %v4176
      %v4194 = vsel %vm1281, %v4186, %v4178
      %v4195 = vmul.f32 %v4187, %v1290
      %v4196 = vmul.f32 %v4191, %v1294
      %v4197 = vmul.f32 %v4188, %v1290
      %v4198 = vmul.f32 %v4192, %v1294
      %v4199 = vmul.f32 %v4189, %v1290
      %v4200 = vmul.f32 %v4193, %v1294
      %v4201 = vmul.f32 %v4190, %v1290
      %v4202 = vmul.f32 %v4194, %v1294
      %s4203 = scalar_lea.vmem %s8, 32
      %v4204 = vld [vmem:[%s4203] sm:$0xf]
      %v4205 = vpack.c.bf16 %v4197, %v4195
      %v4206 = vpack.c.bf16 %v4198, %v4196
      %v4207 = vpack.c.bf16 %v4201, %v4199
      %v4208 = vpack.c.bf16 %v4202, %v4200
      %v4210 = vsel %vm1520, %v4204, 0
      %4212 = vmatprep.subr.bf16.mxu0 %v4206
      %4213 = vmatpush1.bf16.msra.mxu0 %v4205
      %4214 = vmatprep.subr.bf16.mxu0 %v4208
      %4215 = vmatpush1.bf16.msra.mxu0 %v4207
      %4216 = vmatprep.subr.bf16.mxu0 0
      %4217 = vmatpush1.bf16.msra.mxu0 0
      %4218 = vmatprep.subr.bf16.mxu0 0
      %4219 = vmatpush1.bf16.msra.mxu0 0
      %4220 = vmatprep.subr.bf16.mxu0 0
      %4221 = vmatpush1.bf16.msra.mxu0 0
      %4222 = vmatprep.subr.bf16.mxu0 0
      %4223 = vmatpush1.bf16.msra.mxu0 0
      %4224 = vmatprep.subr.bf16.mxu0 0
      %4225 = vmatpush1.bf16.msra.mxu0 0
      %4226 = vmatprep.subr.bf16.mxu0 0
      %4227 = vmatpush1.bf16.msra.mxu0 0
      %4228 = vmatprep.subr.bf16.mxu0 0
      %4229 = vmatpush1.bf16.msra.mxu0 0
      %4230 = vmatprep.subr.bf16.mxu0 0
      %4231 = vmatpush1.bf16.msra.mxu0 0
      %4232 = vmatprep.subr.bf16.mxu0 0
      %4233 = vmatpush1.bf16.msra.mxu0 0
      %4234 = vmatprep.subr.bf16.mxu0 0
      %4235 = vmatpush1.bf16.msra.mxu0 0
      %4236 = vmatprep.subr.bf16.mxu0 0
      %4237 = vmatpush1.bf16.msra.mxu0 0
      %4238 = vmatprep.subr.bf16.mxu0 0
      %4239 = vmatpush1.bf16.msra.mxu0 0
      %4240 = vmatprep.subr.bf16.mxu0 0
      %4241 = vmatpush1.bf16.msra.mxu0 0
      %4242 = vmatprep.subr.bf16.mxu0 0
      %4243 = vmatpush1.bf16.msra.mxu0 0
      %4244 = vmatprep.mubr.bf16.mxu0 0
      %4245 = vmatmul.mubr.bf16.gmra.mrb[0].mxu0 %v4210
      %v4246 = vpop.f32.mrb[0].mxu0
      %v4247 = vadd.f32 0.0, %v4246
      %v4248 = vpop.f32.mrb[0].mxu0
      %v4249 = vadd.f32 0.0, %v4248
      %v4250 = vpop.f32.mrb[0].mxu0
      %v4251 = vpop.f32.mrb[0].mxu0
      %4252 = vdwg.mxu0
      %v4253 = vadd.f32 %v4169, %v4247
      %v4254 = vadd.f32 %v4170, %v4249
      %v4255 = vld [vmem:[%s9] sm:$0xff]
      %4257 = vset.pattern.permute.xlu0 0
      %4258 = vperm.xlu0 %4257, %v4255
      %v4259 = vpop.permute.xlu0 %4258
      %v4261 = vadd.f32 %v4253, %v4259
      %v4262 = vadd.f32 %v4254, %v4259
      %v4263 = vmax.f32 %v4261, 0.0
      %v4264 = vmax.f32 %v4262, 0.0
      %v4265 = vld [vmem:[%s10] sm:$0xff]
      %4267 = vset.pattern.permute.xlu0 0
      %4268 = vperm.xlu0 %4267, %v4265
      %v4269 = vpop.permute.xlu0 %4268
      %v4271 = vmul.f32 %v4263, %v4269
      %v4272 = vmul.f32 %v4264, %v4269
      %v4273 = vrot.slane %v4271, 4
      %v4274 = vadd.f32 %v4271, %v4273
      %v4275 = vrot.slane %v4274, 2
      %v4276 = vadd.f32 %v4274, %v4275
      %v4277 = vrot.slane %v4276, 1
      %v4278 = vadd.f32 %v4276, %v4277
      %v4279 = vrot.slane %v4272, 4
      %v4280 = vadd.f32 %v4272, %v4279
      %v4281 = vrot.slane %v4280, 2
      %v4282 = vadd.f32 %v4280, %v4281
      %v4283 = vrot.slane %v4282, 1
      %v4284 = vadd.f32 %v4282, %v4283
      %v4285 = vld [vmem:[#allocation2] sm:$0x1]
      %4287 = vset.pattern.permute.xlu0 0
      %4288 = vperm.xlu0 %4287, %v4285
      %v4289 = vpop.permute.xlu0 %4288
      %v4291 = vlaneseq
      %v4292 = vshrl.u32 %v4291, 7
      %v4293 = vsub.s32 0, %v4292
      %v4294 = vrot.slane %v4289, %v4293
      %v4295 = vadd.f32 %v4278, %v4294
      %v4296 = vadd.f32 %v4284, %v4294
      %v4299 = vcombine.low %v4295, %v4296
      %v4301 = vunpack.c.l.s4 1966171168
      %v4302 = vunpack.c.0.s8 %v4301
      %v4303 = vlaneseq
      %v4304 = vshrl.u32 %v4303, 7
      %v4305 = vsub.s32 %v4302, %v4304
      %v4306 = vrot.slane %v4299, %v4305
      %v4308 = vunpack.c.l.s4 1966171168
      %v4309 = vunpack.c.0.s8 %v4308
      %v4310 = vlaneseq
      %v4311 = vshrl.u32 %v4310, 7
      %v4312 = vsub.s32 %v4309, %v4311
      %v4313 = vrot.slane %v4306, %v4312
      %v4315 = vlaneseq
      %vm4316 = vcmp.ge.s32.totalorder %v4315, 0
      %vm4317 = vcmp.lt.s32.totalorder %v4315, 256
      %vm4318 = vmand %vm4316, %vm4317
      %4319 = vst.msk [vmem:[%s413] sm:$0x3] %vm4318, %v4313
      %p4320 = scmp.lt.s32.totalorder %s25, 1
      %s4321 = scalar_select %p4320, %s25, 1
      %s4322 = smul.addr %s4321, 2
      %s4323 = scalar_lea.vmem %s12, %s4322
      // Predicated region
      $region69: #{boundary_head_forward.1} parent=67 // pred_check
        %p4324 = pneg %p300
      $region70: #{boundary_head_forward.1} parent=67 // pred_check_branch
        %4326 = sbr.rel (%p4324) target = $region72
      $region71: #{boundary_head_forward.1} parent=67 // pred_region
        _
      $region72: #{boundary_head_forward.1} parent=67 // pred_fallthru
        _
    $region68: #{boundary_head_forward.1} parent=5 // pred_fallthru
      _
    %p4327 = scmp.le.s32.totalorder 2, %s20
    // Predicated region
    $region73: #{boundary_head_forward.1} parent=5 // pred_check
      %p4328 = pneg %p4327
    $region74: #{boundary_head_forward.1} parent=5 // pred_check_branch
      %4330 = sbr.rel (%p4328) target = $region76
    $region75: #{boundary_head_forward.1} parent=5 // pred_region
      %s4331 = ssub.s32 %s20, 2
      // Predicated region
      $region77: #{boundary_head_forward.1} parent=75 // pred_check
        %p4332 = pneg %p306
      $region78: #{boundary_head_forward.1} parent=75 // pred_check_branch
        %4334 = sbr.rel (%p4332) target = $region80
      $region79: #{boundary_head_forward.1} parent=75 // pred_region
        %p4335 = scmp.lt.s32.totalorder %s26, 1
        %s4336 = scalar_select %p4335, %s26, 1
        %s4337 = smul.addr %s4336, 2
        %s4338 = scalar_lea.vmem %s12, %s4337
      $region80: #{boundary_head_forward.1} parent=75 // pred_fallthru
        _
    $region76: #{boundary_head_forward.1} parent=5 // pred_fallthru
      _
  $region6: #{boundary_head_forward.1} parent=0 // loop_footer
    %s24 = sadd.s32 1, %s20
  $region7: #{boundary_head_forward.1} parent=0 // loop_footer_branch
    %19 = sbr.rel target = $region3
  $region8: #{boundary_head_forward.1} parent=0 // loop_exit
    _

</llo_original>
